<compile_context>
chip_gen: v6e
topology: v6e:2x2x1
jax: 0.10.0
libtpu: 0.0.40
codegen_flags: <defaults>
</compile_context>

<pallas_src>
import jax
import jax.numpy as jnp
from jax.experimental import pallas as pl
from jax.experimental.pallas import tpu as pltpu

IN_FEATURES = 28 * 28 * 3   # 2352 (multiple of 8; Mosaic masks the lane remainder in the dot)
HIDDEN = 512
OUT_FEATURES = 2
OUT_PAD = 128               # lane-dense output store
TILE_B_MAX = 512            # max batch tile per grid step


def _round_up(n, m):
    return ((n + m - 1) // m) * m


def _choose_tile_b(batch):
    """Batch tile: sized to the batch for small B (no wasted MXU rows); for large
    B keep at least 2 grid steps so 'parallel' can use both v7x TensorCores."""
    b8 = _round_up(max(batch, 1), 8)
    if b8 <= TILE_B_MAX:
        return b8
    half = _round_up((b8 + 1) // 2, 8)
    return min(TILE_B_MAX, half)


def _mlp_kernel(x_ref, w1_ref, b1_ref, w2_ref, b2_ref, w3_ref, b3_ref, o_ref):
    # One batch tile per grid step; all weights VMEM-resident (constant index_maps).
    # f32 -> bf16 cast of the activations is done here (free VPU work under the MXU).
    x = x_ref[...].astype(jnp.bfloat16)                                    # (TB, 2352) bf16
    h1 = jnp.dot(x, w1_ref[...], preferred_element_type=jnp.float32)      # (TB, 512) f32
    h1 = jnp.maximum(h1 + b1_ref[...], 0.0).astype(jnp.bfloat16)          # bias+ReLU, drop f32 early
    h2 = jnp.dot(h1, w2_ref[...], preferred_element_type=jnp.float32)     # (TB, 512) f32
    h2 = jnp.maximum(h2 + b2_ref[...], 0.0).astype(jnp.bfloat16)
    logits = jnp.dot(h2, w3_ref[...], preferred_element_type=jnp.float32) # (TB, 128) f32
    o_ref[...] = (logits + b3_ref[...]).astype(o_ref.dtype)


def mlp_forward(x_nchw, params):
    """x_nchw: (B, 3, 28, 28) float32. Returns logits (B, 2) float32."""
    w1, b1, w2, b2, w3, b3 = params            # natural shapes, f32, W stored (in, out)
    B = x_nchw.shape[0]

    # nn.Flatten on NCHW == row-major reshape (metadata-only glue, stays in plain JAX).
    x_flat = x_nchw.reshape(B, -1).astype(jnp.float32)                     # (B, 2352) f32

    # Pad the batch only to a multiple of 8 (sublane alignment); tiny or a no-op.
    B_pad = _round_up(B, 8)
    if B_pad != B:
        x_flat = jnp.pad(x_flat, ((0, B_pad - B), (0, 0)))

    tile_b = _choose_tile_b(B_pad)
    grid_b = pl.cdiv(B_pad, tile_b)

    # bf16 weights (halves weight HBM traffic); pad only the last layer's output
    # lanes 2 -> 128 (one-time, weight-side only).
    w1_bf = w1.astype(jnp.bfloat16)                                        # (2352, 512)
    w2_bf = w2.astype(jnp.bfloat16)                                        # (512, 512)
    w3_p = jnp.zeros((HIDDEN, OUT_PAD), jnp.bfloat16)
    w3_p = w3_p.at[:, :OUT_FEATURES].set(w3.astype(jnp.bfloat16))
    b3_p = jnp.zeros((1, OUT_PAD), jnp.float32)
    b3_p = b3_p.at[:, :OUT_FEATURES].set(b3)

    resident = lambda shape: pl.BlockSpec(shape, lambda i: (0, 0))         # fetched once

    out = pl.pallas_call(
        _mlp_kernel,
        out_shape=jax.ShapeDtypeStruct((B_pad, OUT_PAD), jnp.float32),
        grid=(grid_b,),
        in_specs=[
            pl.BlockSpec((tile_b, IN_FEATURES), lambda i: (i, 0)),   # x: streamed f32, tiled over batch
            resident((IN_FEATURES, HIDDEN)),                          # w1 bf16 (VMEM-resident)
            resident((1, HIDDEN)),                                    # b1 f32
            resident((HIDDEN, HIDDEN)),                               # w2 bf16
            resident((1, HIDDEN)),                                    # b2 f32
            resident((HIDDEN, OUT_PAD)),                              # w3 bf16 (padded lanes)
            resident((1, OUT_PAD)),                                   # b3 f32 (padded lanes)
        ],
        out_specs=pl.BlockSpec((tile_b, OUT_PAD), lambda i: (i, 0)),
        compiler_params=pltpu.CompilerParams(
            dimension_semantics=("parallel",),      # shard batch tiles across TCs on v7x
            vmem_limit_bytes=32 << 20,              # ~20 MiB footprint at tile_b=512
        ),
    )(x_flat, w1_bf, b1, w2_bf, b2, w3_p, b3_p)

    return out[:B, :OUT_FEATURES]


def init_params(key):
    """PyTorch nn.Linear default init: U(-1/sqrt(fan_in), 1/sqrt(fan_in)); W stored (in, out)."""
    def linear(key, fan_in, fan_out):
        kw, kb = jax.random.split(key)
        bound = 1.0 / jnp.sqrt(fan_in)
        w = jax.random.uniform(kw, (fan_in, fan_out), jnp.float32, -bound, bound)
        b = jax.random.uniform(kb, (1, fan_out), jnp.float32, -bound, bound)
        return w, b

    k1, k2, k3 = jax.random.split(key, 3)
    w1, b1 = linear(k1, IN_FEATURES, HIDDEN)
    w2, b2 = linear(k2, HIDDEN, HIDDEN)
    w3, b3 = linear(k3, HIDDEN, OUT_FEATURES)
    return (w1, b1, w2, b2, w3, b3)


def reference_forward(x_nchw, params):
    """Pure-JAX reference mirroring the kernel's bf16 matmul / f32 accumulate path.

    Note: agreement with a true f32 PyTorch forward is ~1e-2 due to bf16 streams.
    """
    w1, b1, w2, b2, w3, b3 = params
    bf = jnp.bfloat16
    x = x_nchw.reshape(x_nchw.shape[0], -1).astype(bf)
    h1 = jnp.maximum(
        jnp.dot(x, w1.astype(bf), preferred_element_type=jnp.float32) + b1, 0.0)
    h2 = jnp.maximum(
        jnp.dot(h1.astype(bf), w2.astype(bf), preferred_element_type=jnp.float32) + b2, 0.0)
    return jnp.dot(h2.astype(bf), w3.astype(bf), preferred_element_type=jnp.float32) + b3


if __name__ == "__main__":
    key = jax.random.PRNGKey(0)
    k_params, k_x = jax.random.split(key)

    params = init_params(k_params)
    # batch=2, channels=3, spatial=28 (fixed by Linear(28*28*3, ...))
    x = jax.random.normal(k_x, (2, 3, 28, 28), jnp.float32)

    fwd = jax.jit(mlp_forward)
    logits = fwd(x, params)
    logits = jax.block_until_ready(logits)

    ref = reference_forward(x, params)
    assert logits.shape == (2, OUT_FEATURES)
    assert jnp.allclose(logits, ref, atol=1e-2, rtol=1e-2), "mismatch vs reference"

    print("KERNEL_OK")
</pallas_src>

<mosaic_0001>
module attributes {stable_mosaic.version = 11 : i64} {
  func.func @_mlp_kernel(%arg0: i32, %arg1: memref<8x2352xf32, #tpu.memory_space<vmem>>, %arg2: memref<2352x512xbf16, #tpu.memory_space<vmem>>, %arg3: memref<1x512xf32, #tpu.memory_space<vmem>>, %arg4: memref<512x512xbf16, #tpu.memory_space<vmem>>, %arg5: memref<1x512xf32, #tpu.memory_space<vmem>>, %arg6: memref<512x128xbf16, #tpu.memory_space<vmem>>, %arg7: memref<1x128xf32, #tpu.memory_space<vmem>>, %arg8: memref<8x128xf32, #tpu.memory_space<vmem>>) attributes {dimension_semantics = [#tpu.dimension_semantics<parallel>], iteration_bounds = array<i64: 1>, scalar_prefetch = 0 : i64, scratch_operands = 0 : i64, tpu.core_type = #tpu.core_type<tc>, window_params = [{transform_indices = @transform_0, window_bounds = array<i64: 8, 2352>}, {pipeline_mode = #tpu.pipeline_mode<synchronous>, transform_indices = @transform_1, window_bounds = array<i64: 2352, 512>}, {pipeline_mode = #tpu.pipeline_mode<synchronous>, transform_indices = @transform_2, window_bounds = array<i64: 1, 512>}, {pipeline_mode = #tpu.pipeline_mode<synchronous>, transform_indices = @transform_3, window_bounds = array<i64: 512, 512>}, {pipeline_mode = #tpu.pipeline_mode<synchronous>, transform_indices = @transform_4, window_bounds = array<i64: 1, 512>}, {pipeline_mode = #tpu.pipeline_mode<synchronous>, transform_indices = @transform_5, window_bounds = array<i64: 512, 128>}, {pipeline_mode = #tpu.pipeline_mode<synchronous>, transform_indices = @transform_6, window_bounds = array<i64: 1, 128>}, {transform_indices = @transform_7, window_bounds = array<i64: 8, 128>}]} {
    %c0 = arith.constant 0 : index
    %c0_0 = arith.constant 0 : index
    %0 = vector.load %arg1[%c0, %c0_0] : memref<8x2352xf32, #tpu.memory_space<vmem>>, vector<8x2352xf32>
    %1 = arith.truncf %0 : vector<8x2352xf32> to vector<8x2352xbf16>
    %c0_1 = arith.constant 0 : index
    %c0_2 = arith.constant 0 : index
    %2 = vector.load %arg2[%c0_1, %c0_2] : memref<2352x512xbf16, #tpu.memory_space<vmem>>, vector<2352x512xbf16>
    %cst = arith.constant dense<0.000000e+00> : vector<8x512xf32>
    %3 = tpu.matmul %1, %2, %cst {dimension_numbers = #tpu.dot_dimension_numbers<[1], [0], [0], [1], [0, 0, 1, 1], [], []>} : vector<8x2352xbf16>, vector<2352x512xbf16>, vector<8x512xf32> -> vector<8x512xf32>
    %c0_3 = arith.constant 0 : index
    %c0_4 = arith.constant 0 : index
    %4 = vector.load %arg3[%c0_3, %c0_4] : memref<1x512xf32, #tpu.memory_space<vmem>>, vector<1x512xf32>
    %5 = vector.broadcast %4 : vector<1x512xf32> to vector<8x512xf32>
    %6 = arith.addf %3, %5 : vector<8x512xf32>
    %cst_5 = arith.constant 0.000000e+00 : f32
    %7 = vector.broadcast %cst_5 : f32 to vector<8x512xf32>
    %8 = arith.maximumf %6, %7 : vector<8x512xf32>
    %9 = arith.truncf %8 : vector<8x512xf32> to vector<8x512xbf16>
    %c0_6 = arith.constant 0 : index
    %c0_7 = arith.constant 0 : index
    %10 = vector.load %arg4[%c0_6, %c0_7] : memref<512x512xbf16, #tpu.memory_space<vmem>>, vector<512x512xbf16>
    %cst_8 = arith.constant dense<0.000000e+00> : vector<8x512xf32>
    %11 = tpu.matmul %9, %10, %cst_8 {dimension_numbers = #tpu.dot_dimension_numbers<[1], [0], [0], [1], [0, 0, 1, 1], [], []>} : vector<8x512xbf16>, vector<512x512xbf16>, vector<8x512xf32> -> vector<8x512xf32>
    %c0_9 = arith.constant 0 : index
    %c0_10 = arith.constant 0 : index
    %12 = vector.load %arg5[%c0_9, %c0_10] : memref<1x512xf32, #tpu.memory_space<vmem>>, vector<1x512xf32>
    %13 = vector.broadcast %12 : vector<1x512xf32> to vector<8x512xf32>
    %14 = arith.addf %11, %13 : vector<8x512xf32>
    %cst_11 = arith.constant 0.000000e+00 : f32
    %15 = vector.broadcast %cst_11 : f32 to vector<8x512xf32>
    %16 = arith.maximumf %14, %15 : vector<8x512xf32>
    %17 = arith.truncf %16 : vector<8x512xf32> to vector<8x512xbf16>
    %c0_12 = arith.constant 0 : index
    %c0_13 = arith.constant 0 : index
    %18 = vector.load %arg6[%c0_12, %c0_13] : memref<512x128xbf16, #tpu.memory_space<vmem>>, vector<512x128xbf16>
    %cst_14 = arith.constant dense<0.000000e+00> : vector<8x128xf32>
    %19 = tpu.matmul %17, %18, %cst_14 {dimension_numbers = #tpu.dot_dimension_numbers<[1], [0], [0], [1], [0, 0, 1, 1], [], []>} : vector<8x512xbf16>, vector<512x128xbf16>, vector<8x128xf32> -> vector<8x128xf32>
    %c0_15 = arith.constant 0 : index
    %c0_16 = arith.constant 0 : index
    %20 = vector.load %arg7[%c0_15, %c0_16] : memref<1x128xf32, #tpu.memory_space<vmem>>, vector<1x128xf32>
    %21 = vector.broadcast %20 : vector<1x128xf32> to vector<8x128xf32>
    %22 = arith.addf %19, %21 : vector<8x128xf32>
    %c0_17 = arith.constant 0 : index
    %c0_18 = arith.constant 0 : index
    %23 = vector.load %arg8[%c0_17, %c0_18] : memref<8x128xf32, #tpu.memory_space<vmem>>, vector<8x128xf32>
    tpu.vector_store %arg8[%c0_17, %c0_18], %22 {strides = array<i32>} : memref<8x128xf32, #tpu.memory_space<vmem>>, vector<8x128xf32>,
    return
  }
  func.func @transform_0(%arg0: i32) -> (i32, i32) {
    %c0_i32 = arith.constant 0 : i32
    %c0_i32_0 = arith.constant 0 : i32
    return %arg0, %c0_i32 : i32, i32
  }
  func.func @transform_1(%arg0: i32) -> (i32, i32) {
    %c0_i32 = arith.constant 0 : i32
    %c0_i32_0 = arith.constant 0 : i32
    %c0_i32_1 = arith.constant 0 : i32
    return %c0_i32, %c0_i32_0 : i32, i32
  }
  func.func @transform_2(%arg0: i32) -> (i32, i32) {
    %c0_i32 = arith.constant 0 : i32
    %c0_i32_0 = arith.constant 0 : i32
    %c0_i32_1 = arith.constant 0 : i32
    return %c0_i32, %c0_i32_0 : i32, i32
  }
  func.func @transform_3(%arg0: i32) -> (i32, i32) {
    %c0_i32 = arith.constant 0 : i32
    %c0_i32_0 = arith.constant 0 : i32
    %c0_i32_1 = arith.constant 0 : i32
    return %c0_i32, %c0_i32_0 : i32, i32
  }
  func.func @transform_4(%arg0: i32) -> (i32, i32) {
    %c0_i32 = arith.constant 0 : i32
    %c0_i32_0 = arith.constant 0 : i32
    %c0_i32_1 = arith.constant 0 : i32
    return %c0_i32, %c0_i32_0 : i32, i32
  }
  func.func @transform_5(%arg0: i32) -> (i32, i32) {
    %c0_i32 = arith.constant 0 : i32
    %c0_i32_0 = arith.constant 0 : i32
    %c0_i32_1 = arith.constant 0 : i32
    return %c0_i32, %c0_i32_0 : i32, i32
  }
  func.func @transform_6(%arg0: i32) -> (i32, i32) {
    %c0_i32 = arith.constant 0 : i32
    %c0_i32_0 = arith.constant 0 : i32
    %c0_i32_1 = arith.constant 0 : i32
    return %c0_i32, %c0_i32_0 : i32, i32
  }
  func.func @transform_7(%arg0: i32) -> (i32, i32) {
    %c0_i32 = arith.constant 0 : i32
    %c0_i32_0 = arith.constant 0 : i32
    return %arg0, %c0_i32 : i32, i32
  }
}

</mosaic_0001>

<llo_original>
// kernel: mlp_forward.1
$region0: #{mlp_forward.1}
  #allocation0 [shape = 'u32[]', space=smem, size = 0x4, offset = 0x4, fixed_abs, tag = 'smem constant byte address 0x4 - core index']
  #allocation1 [shape = 'u32[144,128]{1,0:T(1,128)}', space=vmem, size = 0x12000, scoped, tag = 'internal scratch']
  %s0 = inlined_call_operand.vmem [shape: f32[8,2352], index: 0, kind: input, shape index: {}]
  %s1 = inlined_call_operand.vmem [shape: bf16[2352,512], index: 1, kind: input, shape index: {}]
  %s2 = inlined_call_operand.vmem [shape: f32[1,512], index: 2, kind: input, shape index: {}]
  %s3 = inlined_call_operand.vmem [shape: bf16[512,512], index: 3, kind: input, shape index: {}]
  %s4 = inlined_call_operand.vmem [shape: f32[1,512], index: 4, kind: input, shape index: {}]
  %s5 = inlined_call_operand.vmem [shape: bf16[512,128], index: 5, kind: input, shape index: {}]
  %s6 = inlined_call_operand.vmem [shape: f32[1,128], index: 6, kind: input, shape index: {}]
  %s7 = inlined_call_operand.vmem [shape: f32[8,128], index: 7, kind: output, shape index: {}]
  %s8 = sld [smem:[#allocation0]]
  $region38: #{mlp_forward.1} parent=0
    _
  %s10 = ssub.s32 1, %s8
  %s11 = scalar_select 0, %s10, %s8
  // Predicated region
  $region2: #{mlp_forward.1} parent=0 // pred_check
    _
  $region3: #{mlp_forward.1} parent=0 // pred_check_branch
    %13 = sbr.rel (0) target = $region5
  $region4: #{mlp_forward.1} parent=0 // pred_region
    _
  $region5: #{mlp_forward.1} parent=0 // pred_fallthru
    _
  // Predicated region
  $region6: #{mlp_forward.1} parent=0 // pred_check
    _
  $region7: #{mlp_forward.1} parent=0 // pred_check_branch
    %15 = sbr.rel (0) target = $region9
  $region8: #{mlp_forward.1} parent=0 // pred_region
    _
  $region9: #{mlp_forward.1} parent=0 // pred_fallthru
    _
  // Predicated region
  $region10: #{mlp_forward.1} parent=0 // pred_check
    _
  $region11: #{mlp_forward.1} parent=0 // pred_check_branch
    %17 = sbr.rel (0) target = $region13
  $region12: #{mlp_forward.1} parent=0 // pred_region
    _
  $region13: #{mlp_forward.1} parent=0 // pred_fallthru
    _
  // Predicated region
  $region14: #{mlp_forward.1} parent=0 // pred_check
    _
  $region15: #{mlp_forward.1} parent=0 // pred_check_branch
    %19 = sbr.rel (0) target = $region17
  $region16: #{mlp_forward.1} parent=0 // pred_region
    _
  $region17: #{mlp_forward.1} parent=0 // pred_fallthru
    _
  // Predicated region
  $region18: #{mlp_forward.1} parent=0 // pred_check
    _
  $region19: #{mlp_forward.1} parent=0 // pred_check_branch
    %21 = sbr.rel (0) target = $region21
  $region20: #{mlp_forward.1} parent=0 // pred_region
    _
  $region21: #{mlp_forward.1} parent=0 // pred_fallthru
    _
  // Predicated region
  $region22: #{mlp_forward.1} parent=0 // pred_check
    _
  $region23: #{mlp_forward.1} parent=0 // pred_check_branch
    %23 = sbr.rel (0) target = $region25
  $region24: #{mlp_forward.1} parent=0 // pred_region
    _
  $region25: #{mlp_forward.1} parent=0 // pred_fallthru
    _
  // Predicated region
  $region26: #{mlp_forward.1} parent=0 // pred_check
    _
  $region27: #{mlp_forward.1} parent=0 // pred_check_branch
    %25 = sbr.rel (0) target = $region29
  $region28: #{mlp_forward.1} parent=0 // pred_region
    _
  $region29: #{mlp_forward.1} parent=0 // pred_fallthru
    _
  %v27 = vld [vmem:[%s0] sm:$0xff]
  %v28 = vld [vmem:[%s0 + $0x8] sm:$0xff]
  %v29 = vld [vmem:[%s0 + $0x10] sm:$0xff]
  %v30 = vld [vmem:[%s0 + $0x18] sm:$0xff]
  %v31 = vld [vmem:[%s0 + $0x20] sm:$0xff]
  %v32 = vld [vmem:[%s0 + $0x28] sm:$0xff]
  %v33 = vld [vmem:[%s0 + $0x30] sm:$0xff]
  %v34 = vld [vmem:[%s0 + $0x38] sm:$0xff]
  %v35 = vld [vmem:[%s0 + $0x40] sm:$0xff]
  %v36 = vld [vmem:[%s0 + $0x48] sm:$0xff]
  %v37 = vld [vmem:[%s0 + $0x50] sm:$0xff]
  %v38 = vld [vmem:[%s0 + $0x58] sm:$0xff]
  %v39 = vld [vmem:[%s0 + $0x60] sm:$0xff]
  %v40 = vld [vmem:[%s0 + $0x68] sm:$0xff]
  %v41 = vld [vmem:[%s0 + $0x70] sm:$0xff]
  %v42 = vld [vmem:[%s0 + $0x78] sm:$0xff]
  %v43 = vld [vmem:[%s0 + $0x80] sm:$0xff]
  %v44 = vld [vmem:[%s0 + $0x88] sm:$0xff]
  %v45 = vld [vmem:[%s0 + $0x90] sm:$0xff]
  %v46 = vpack.c.bf16 %v27, %v27
  %v47 = vpack.c.bf16 %v28, %v28
  %v48 = vpack.c.bf16 %v29, %v29
  %v49 = vpack.c.bf16 %v30, %v30
  %v50 = vpack.c.bf16 %v31, %v31
  %v51 = vpack.c.bf16 %v32, %v32
  %v52 = vpack.c.bf16 %v33, %v33
  %v53 = vpack.c.bf16 %v34, %v34
  %v54 = vpack.c.bf16 %v35, %v35
  %v55 = vpack.c.bf16 %v36, %v36
  %v56 = vpack.c.bf16 %v37, %v37
  %v57 = vpack.c.bf16 %v38, %v38
  %v58 = vpack.c.bf16 %v39, %v39
  %v59 = vpack.c.bf16 %v40, %v40
  %v60 = vpack.c.bf16 %v41, %v41
  %v61 = vpack.c.bf16 %v42, %v42
  %v62 = vpack.c.bf16 %v43, %v43
  %v63 = vpack.c.bf16 %v44, %v44
  %v64 = vpack.c.bf16 %v45, %v45
  %v65 = vld [vmem:[%s1] sm:$0xff]
  %v66 = vld [vmem:[%s1 + $0x8] sm:$0xff]
  %v67 = vld [vmem:[%s1 + $0x10] sm:$0xff]
  %v68 = vld [vmem:[%s1 + $0x18] sm:$0xff]
  %v69 = vld [vmem:[%s1 + $0x20] sm:$0xff]
  %v70 = vld [vmem:[%s1 + $0x28] sm:$0xff]
  %v71 = vld [vmem:[%s1 + $0x30] sm:$0xff]
  %v72 = vld [vmem:[%s1 + $0x38] sm:$0xff]
  %v73 = vld [vmem:[%s1 + $0x40] sm:$0xff]
  %v74 = vld [vmem:[%s1 + $0x48] sm:$0xff]
  %v75 = vld [vmem:[%s1 + $0x50] sm:$0xff]
  %v76 = vld [vmem:[%s1 + $0x58] sm:$0xff]
  %v77 = vld [vmem:[%s1 + $0x60] sm:$0xff]
  %v78 = vld [vmem:[%s1 + $0x68] sm:$0xff]
  %v79 = vld [vmem:[%s1 + $0x70] sm:$0xff]
  %v80 = vld [vmem:[%s1 + $0x78] sm:$0xff]
  %v81 = vld [vmem:[%s1 + $0x80] sm:$0xff]
  %v82 = vld [vmem:[%s1 + $0x88] sm:$0xff]
  %v83 = vld [vmem:[%s1 + $0x90] sm:$0xff]
  %v84 = vld [vmem:[%s1 + $0x98] sm:$0xff]
  %v85 = vld [vmem:[%s1 + $0xa0] sm:$0xff]
  %v86 = vld [vmem:[%s1 + $0xa8] sm:$0xff]
  %v87 = vld [vmem:[%s1 + $0xb0] sm:$0xff]
  %v88 = vld [vmem:[%s1 + $0xb8] sm:$0xff]
  %v89 = vld [vmem:[%s1 + $0xc0] sm:$0xff]
  %v90 = vld [vmem:[%s1 + $0xc8] sm:$0xff]
  %v91 = vld [vmem:[%s1 + $0xd0] sm:$0xff]
  %v92 = vld [vmem:[%s1 + $0xd8] sm:$0xff]
  %v93 = vld [vmem:[%s1 + $0xe0] sm:$0xff]
  %v94 = vld [vmem:[%s1 + $0xe8] sm:$0xff]
  %v95 = vld [vmem:[%s1 + $0xf0] sm:$0xff]
  %v96 = vld [vmem:[%s1 + $0xf8] sm:$0xff]
  %v97 = vld [vmem:[%s1 + $0x100] sm:$0xff]
  %v98 = vld [vmem:[%s1 + $0x108] sm:$0xff]
  %v99 = vld [vmem:[%s1 + $0x110] sm:$0xff]
  %v100 = vld [vmem:[%s1 + $0x118] sm:$0xff]
  %v101 = vld [vmem:[%s1 + $0x120] sm:$0xff]
  %v102 = vld [vmem:[%s1 + $0x128] sm:$0xff]
  %v103 = vld [vmem:[%s1 + $0x130] sm:$0xff]
  %v104 = vld [vmem:[%s1 + $0x138] sm:$0xff]
  %v105 = vld [vmem:[%s1 + $0x140] sm:$0xff]
  %v106 = vld [vmem:[%s1 + $0x148] sm:$0xff]
  %v107 = vld [vmem:[%s1 + $0x150] sm:$0xff]
  %v108 = vld [vmem:[%s1 + $0x158] sm:$0xff]
  %v109 = vld [vmem:[%s1 + $0x160] sm:$0xff]
  %v110 = vld [vmem:[%s1 + $0x168] sm:$0xff]
  %v111 = vld [vmem:[%s1 + $0x170] sm:$0xff]
  %v112 = vld [vmem:[%s1 + $0x178] sm:$0xff]
  %v113 = vld [vmem:[%s1 + $0x180] sm:$0xff]
  %v114 = vld [vmem:[%s1 + $0x188] sm:$0xff]
  %v115 = vld [vmem:[%s1 + $0x190] sm:$0xff]
  %v116 = vld [vmem:[%s1 + $0x198] sm:$0xff]
  %v117 = vld [vmem:[%s1 + $0x1a0] sm:$0xff]
  %v118 = vld [vmem:[%s1 + $0x1a8] sm:$0xff]
  %v119 = vld [vmem:[%s1 + $0x1b0] sm:$0xff]
  %v120 = vld [vmem:[%s1 + $0x1b8] sm:$0xff]
  %v121 = vld [vmem:[%s1 + $0x1c0] sm:$0xff]
  %v122 = vld [vmem:[%s1 + $0x1c8] sm:$0xff]
  %v123 = vld [vmem:[%s1 + $0x1d0] sm:$0xff]
  %v124 = vld [vmem:[%s1 + $0x1d8] sm:$0xff]
  %v125 = vld [vmem:[%s1 + $0x1e0] sm:$0xff]
  %v126 = vld [vmem:[%s1 + $0x1e8] sm:$0xff]
  %v127 = vld [vmem:[%s1 + $0x1f0] sm:$0xff]
  %v128 = vld [vmem:[%s1 + $0x1f8] sm:$0xff]
  %v129 = vld [vmem:[%s1 + $0x200] sm:$0xff]
  %v130 = vld [vmem:[%s1 + $0x208] sm:$0xff]
  %v131 = vld [vmem:[%s1 + $0x210] sm:$0xff]
  %v132 = vld [vmem:[%s1 + $0x218] sm:$0xff]
  %v133 = vld [vmem:[%s1 + $0x220] sm:$0xff]
  %v134 = vld [vmem:[%s1 + $0x228] sm:$0xff]
  %v135 = vld [vmem:[%s1 + $0x230] sm:$0xff]
  %v136 = vld [vmem:[%s1 + $0x238] sm:$0xff]
  %v137 = vld [vmem:[%s1 + $0x240] sm:$0xff]
  %v138 = vld [vmem:[%s1 + $0x248] sm:$0xff]
  %v139 = vld [vmem:[%s1 + $0x250] sm:$0xff]
  %v140 = vld [vmem:[%s1 + $0x258] sm:$0xff]
  %v141 = vld [vmem:[%s1 + $0x260] sm:$0xff]
  %v142 = vld [vmem:[%s1 + $0x268] sm:$0xff]
  %v143 = vld [vmem:[%s1 + $0x270] sm:$0xff]
  %v144 = vld [vmem:[%s1 + $0x278] sm:$0xff]
  %v145 = vld [vmem:[%s1 + $0x280] sm:$0xff]
  %v146 = vld [vmem:[%s1 + $0x288] sm:$0xff]
  %v147 = vld [vmem:[%s1 + $0x290] sm:$0xff]
  %v148 = vld [vmem:[%s1 + $0x298] sm:$0xff]
  %v149 = vld [vmem:[%s1 + $0x2a0] sm:$0xff]
  %v150 = vld [vmem:[%s1 + $0x2a8] sm:$0xff]
  %v151 = vld [vmem:[%s1 + $0x2b0] sm:$0xff]
  %v152 = vld [vmem:[%s1 + $0x2b8] sm:$0xff]
  %v153 = vld [vmem:[%s1 + $0x2c0] sm:$0xff]
  %v154 = vld [vmem:[%s1 + $0x2c8] sm:$0xff]
  %v155 = vld [vmem:[%s1 + $0x2d0] sm:$0xff]
  %v156 = vld [vmem:[%s1 + $0x2d8] sm:$0xff]
  %v157 = vld [vmem:[%s1 + $0x2e0] sm:$0xff]
  %v158 = vld [vmem:[%s1 + $0x2e8] sm:$0xff]
  %v159 = vld [vmem:[%s1 + $0x2f0] sm:$0xff]
  %v160 = vld [vmem:[%s1 + $0x2f8] sm:$0xff]
  %v161 = vld [vmem:[%s1 + $0x300] sm:$0xff]
  %v162 = vld [vmem:[%s1 + $0x308] sm:$0xff]
  %v163 = vld [vmem:[%s1 + $0x310] sm:$0xff]
  %v164 = vld [vmem:[%s1 + $0x318] sm:$0xff]
  %v165 = vld [vmem:[%s1 + $0x320] sm:$0xff]
  %v166 = vld [vmem:[%s1 + $0x328] sm:$0xff]
  %v167 = vld [vmem:[%s1 + $0x330] sm:$0xff]
  %v168 = vld [vmem:[%s1 + $0x338] sm:$0xff]
  %v169 = vld [vmem:[%s1 + $0x340] sm:$0xff]
  %v170 = vld [vmem:[%s1 + $0x348] sm:$0xff]
  %v171 = vld [vmem:[%s1 + $0x350] sm:$0xff]
  %v172 = vld [vmem:[%s1 + $0x358] sm:$0xff]
  %v173 = vld [vmem:[%s1 + $0x360] sm:$0xff]
  %v174 = vld [vmem:[%s1 + $0x368] sm:$0xff]
  %v175 = vld [vmem:[%s1 + $0x370] sm:$0xff]
  %v176 = vld [vmem:[%s1 + $0x378] sm:$0xff]
  %v177 = vld [vmem:[%s1 + $0x380] sm:$0xff]
  %v178 = vld [vmem:[%s1 + $0x388] sm:$0xff]
  %v179 = vld [vmem:[%s1 + $0x390] sm:$0xff]
  %v180 = vld [vmem:[%s1 + $0x398] sm:$0xff]
  %v181 = vld [vmem:[%s1 + $0x3a0] sm:$0xff]
  %v182 = vld [vmem:[%s1 + $0x3a8] sm:$0xff]
  %v183 = vld [vmem:[%s1 + $0x3b0] sm:$0xff]
  %v184 = vld [vmem:[%s1 + $0x3b8] sm:$0xff]
  %v185 = vld [vmem:[%s1 + $0x3c0] sm:$0xff]
  %v186 = vld [vmem:[%s1 + $0x3c8] sm:$0xff]
  %v187 = vld [vmem:[%s1 + $0x3d0] sm:$0xff]
  %v188 = vld [vmem:[%s1 + $0x3d8] sm:$0xff]
  %v189 = vld [vmem:[%s1 + $0x3e0] sm:$0xff]
  %v190 = vld [vmem:[%s1 + $0x3e8] sm:$0xff]
  %v191 = vld [vmem:[%s1 + $0x3f0] sm:$0xff]
  %v192 = vld [vmem:[%s1 + $0x3f8] sm:$0xff]
  %v193 = vld [vmem:[%s1 + $0x400] sm:$0xff]
  %v194 = vld [vmem:[%s1 + $0x408] sm:$0xff]
  %v195 = vld [vmem:[%s1 + $0x410] sm:$0xff]
  %v196 = vld [vmem:[%s1 + $0x418] sm:$0xff]
  %v197 = vld [vmem:[%s1 + $0x420] sm:$0xff]
  %v198 = vld [vmem:[%s1 + $0x428] sm:$0xff]
  %v199 = vld [vmem:[%s1 + $0x430] sm:$0xff]
  %v200 = vld [vmem:[%s1 + $0x438] sm:$0xff]
  %v201 = vld [vmem:[%s1 + $0x440] sm:$0xff]
  %v202 = vld [vmem:[%s1 + $0x448] sm:$0xff]
  %v203 = vld [vmem:[%s1 + $0x450] sm:$0xff]
  %v204 = vld [vmem:[%s1 + $0x458] sm:$0xff]
  %v205 = vld [vmem:[%s1 + $0x460] sm:$0xff]
  %v206 = vld [vmem:[%s1 + $0x468] sm:$0xff]
  %v207 = vld [vmem:[%s1 + $0x470] sm:$0xff]
  %v208 = vld [vmem:[%s1 + $0x478] sm:$0xff]
  %v209 = vld [vmem:[%s1 + $0x480] sm:$0xff]
  %v210 = vld [vmem:[%s1 + $0x488] sm:$0xff]
  %v211 = vld [vmem:[%s1 + $0x490] sm:$0xff]
  %v212 = vld [vmem:[%s1 + $0x498] sm:$0xff]
  %v213 = vld [vmem:[%s1 + $0x4a0] sm:$0xff]
  %v214 = vld [vmem:[%s1 + $0x4a8] sm:$0xff]
  %v215 = vld [vmem:[%s1 + $0x4b0] sm:$0xff]
  %v216 = vld [vmem:[%s1 + $0x4b8] sm:$0xff]
  %v217 = vld [vmem:[%s1 + $0x4c0] sm:$0xff]
  %v218 = vld [vmem:[%s1 + $0x4c8] sm:$0xff]
  %v219 = vld [vmem:[%s1 + $0x4d0] sm:$0xff]
  %v220 = vld [vmem:[%s1 + $0x4d8] sm:$0xff]
  %v221 = vld [vmem:[%s1 + $0x4e0] sm:$0xff]
  %v222 = vld [vmem:[%s1 + $0x4e8] sm:$0xff]
  %v223 = vld [vmem:[%s1 + $0x4f0] sm:$0xff]
  %v224 = vld [vmem:[%s1 + $0x4f8] sm:$0xff]
  %v225 = vld [vmem:[%s1 + $0x500] sm:$0xff]
  %v226 = vld [vmem:[%s1 + $0x508] sm:$0xff]
  %v227 = vld [vmem:[%s1 + $0x510] sm:$0xff]
  %v228 = vld [vmem:[%s1 + $0x518] sm:$0xff]
  %v229 = vld [vmem:[%s1 + $0x520] sm:$0xff]
  %v230 = vld [vmem:[%s1 + $0x528] sm:$0xff]
  %v231 = vld [vmem:[%s1 + $0x530] sm:$0xff]
  %v232 = vld [vmem:[%s1 + $0x538] sm:$0xff]
  %v233 = vld [vmem:[%s1 + $0x540] sm:$0xff]
  %v234 = vld [vmem:[%s1 + $0x548] sm:$0xff]
  %v235 = vld [vmem:[%s1 + $0x550] sm:$0xff]
  %v236 = vld [vmem:[%s1 + $0x558] sm:$0xff]
  %v237 = vld [vmem:[%s1 + $0x560] sm:$0xff]
  %v238 = vld [vmem:[%s1 + $0x568] sm:$0xff]
  %v239 = vld [vmem:[%s1 + $0x570] sm:$0xff]
  %v240 = vld [vmem:[%s1 + $0x578] sm:$0xff]
  %v241 = vld [vmem:[%s1 + $0x580] sm:$0xff]
  %v242 = vld [vmem:[%s1 + $0x588] sm:$0xff]
  %v243 = vld [vmem:[%s1 + $0x590] sm:$0xff]
  %v244 = vld [vmem:[%s1 + $0x598] sm:$0xff]
  %v245 = vld [vmem:[%s1 + $0x5a0] sm:$0xff]
  %v246 = vld [vmem:[%s1 + $0x5a8] sm:$0xff]
  %v247 = vld [vmem:[%s1 + $0x5b0] sm:$0xff]
  %v248 = vld [vmem:[%s1 + $0x5b8] sm:$0xff]
  %v249 = vld [vmem:[%s1 + $0x5c0] sm:$0xff]
  %v250 = vld [vmem:[%s1 + $0x5c8] sm:$0xff]
  %v251 = vld [vmem:[%s1 + $0x5d0] sm:$0xff]
  %v252 = vld [vmem:[%s1 + $0x5d8] sm:$0xff]
  %v253 = vld [vmem:[%s1 + $0x5e0] sm:$0xff]
  %v254 = vld [vmem:[%s1 + $0x5e8] sm:$0xff]
  %v255 = vld [vmem:[%s1 + $0x5f0] sm:$0xff]
  %v256 = vld [vmem:[%s1 + $0x5f8] sm:$0xff]
  %v257 = vld [vmem:[%s1 + $0x600] sm:$0xff]
  %v258 = vld [vmem:[%s1 + $0x608] sm:$0xff]
  %v259 = vld [vmem:[%s1 + $0x610] sm:$0xff]
  %v260 = vld [vmem:[%s1 + $0x618] sm:$0xff]
  %v261 = vld [vmem:[%s1 + $0x620] sm:$0xff]
  %v262 = vld [vmem:[%s1 + $0x628] sm:$0xff]
  %v263 = vld [vmem:[%s1 + $0x630] sm:$0xff]
  %v264 = vld [vmem:[%s1 + $0x638] sm:$0xff]
  %v265 = vld [vmem:[%s1 + $0x640] sm:$0xff]
  %v266 = vld [vmem:[%s1 + $0x648] sm:$0xff]
  %v267 = vld [vmem:[%s1 + $0x650] sm:$0xff]
  %v268 = vld [vmem:[%s1 + $0x658] sm:$0xff]
  %v269 = vld [vmem:[%s1 + $0x660] sm:$0xff]
  %v270 = vld [vmem:[%s1 + $0x668] sm:$0xff]
  %v271 = vld [vmem:[%s1 + $0x670] sm:$0xff]
  %v272 = vld [vmem:[%s1 + $0x678] sm:$0xff]
  %v273 = vld [vmem:[%s1 + $0x680] sm:$0xff]
  %v274 = vld [vmem:[%s1 + $0x688] sm:$0xff]
  %v275 = vld [vmem:[%s1 + $0x690] sm:$0xff]
  %v276 = vld [vmem:[%s1 + $0x698] sm:$0xff]
  %v277 = vld [vmem:[%s1 + $0x6a0] sm:$0xff]
  %v278 = vld [vmem:[%s1 + $0x6a8] sm:$0xff]
  %v279 = vld [vmem:[%s1 + $0x6b0] sm:$0xff]
  %v280 = vld [vmem:[%s1 + $0x6b8] sm:$0xff]
  %v281 = vld [vmem:[%s1 + $0x6c0] sm:$0xff]
  %v282 = vld [vmem:[%s1 + $0x6c8] sm:$0xff]
  %v283 = vld [vmem:[%s1 + $0x6d0] sm:$0xff]
  %v284 = vld [vmem:[%s1 + $0x6d8] sm:$0xff]
  %v285 = vld [vmem:[%s1 + $0x6e0] sm:$0xff]
  %v286 = vld [vmem:[%s1 + $0x6e8] sm:$0xff]
  %v287 = vld [vmem:[%s1 + $0x6f0] sm:$0xff]
  %v288 = vld [vmem:[%s1 + $0x6f8] sm:$0xff]
  %v289 = vld [vmem:[%s1 + $0x700] sm:$0xff]
  %v290 = vld [vmem:[%s1 + $0x708] sm:$0xff]
  %v291 = vld [vmem:[%s1 + $0x710] sm:$0xff]
  %v292 = vld [vmem:[%s1 + $0x718] sm:$0xff]
  %v293 = vld [vmem:[%s1 + $0x720] sm:$0xff]
  %v294 = vld [vmem:[%s1 + $0x728] sm:$0xff]
  %v295 = vld [vmem:[%s1 + $0x730] sm:$0xff]
  %v296 = vld [vmem:[%s1 + $0x738] sm:$0xff]
  %v297 = vld [vmem:[%s1 + $0x740] sm:$0xff]
  %v298 = vld [vmem:[%s1 + $0x748] sm:$0xff]
  %v299 = vld [vmem:[%s1 + $0x750] sm:$0xff]
  %v300 = vld [vmem:[%s1 + $0x758] sm:$0xff]
  %v301 = vld [vmem:[%s1 + $0x760] sm:$0xff]
  %v302 = vld [vmem:[%s1 + $0x768] sm:$0xff]
  %v303 = vld [vmem:[%s1 + $0x770] sm:$0xff]
  %v304 = vld [vmem:[%s1 + $0x778] sm:$0xff]
  %v305 = vld [vmem:[%s1 + $0x780] sm:$0xff]
  %v306 = vld [vmem:[%s1 + $0x788] sm:$0xff]
  %v307 = vld [vmem:[%s1 + $0x790] sm:$0xff]
  %v308 = vld [vmem:[%s1 + $0x798] sm:$0xff]
  %v309 = vld [vmem:[%s1 + $0x7a0] sm:$0xff]
  %v310 = vld [vmem:[%s1 + $0x7a8] sm:$0xff]
  %v311 = vld [vmem:[%s1 + $0x7b0] sm:$0xff]
  %v312 = vld [vmem:[%s1 + $0x7b8] sm:$0xff]
  %v313 = vld [vmem:[%s1 + $0x7c0] sm:$0xff]
  %v314 = vld [vmem:[%s1 + $0x7c8] sm:$0xff]
  %v315 = vld [vmem:[%s1 + $0x7d0] sm:$0xff]
  %v316 = vld [vmem:[%s1 + $0x7d8] sm:$0xff]
  %v317 = vld [vmem:[%s1 + $0x7e0] sm:$0xff]
  %v318 = vld [vmem:[%s1 + $0x7e8] sm:$0xff]
  %v319 = vld [vmem:[%s1 + $0x7f0] sm:$0xff]
  %v320 = vld [vmem:[%s1 + $0x7f8] sm:$0xff]
  %v321 = vld [vmem:[%s1 + $0x800] sm:$0xff]
  %v322 = vld [vmem:[%s1 + $0x808] sm:$0xff]
  %v323 = vld [vmem:[%s1 + $0x810] sm:$0xff]
  %v324 = vld [vmem:[%s1 + $0x818] sm:$0xff]
  %v325 = vld [vmem:[%s1 + $0x820] sm:$0xff]
  %v326 = vld [vmem:[%s1 + $0x828] sm:$0xff]
  %v327 = vld [vmem:[%s1 + $0x830] sm:$0xff]
  %v328 = vld [vmem:[%s1 + $0x838] sm:$0xff]
  %v329 = vld [vmem:[%s1 + $0x840] sm:$0xff]
  %v330 = vld [vmem:[%s1 + $0x848] sm:$0xff]
  %v331 = vld [vmem:[%s1 + $0x850] sm:$0xff]
  %v332 = vld [vmem:[%s1 + $0x858] sm:$0xff]
  %v333 = vld [vmem:[%s1 + $0x860] sm:$0xff]
  %v334 = vld [vmem:[%s1 + $0x868] sm:$0xff]
  %v335 = vld [vmem:[%s1 + $0x870] sm:$0xff]
  %v336 = vld [vmem:[%s1 + $0x878] sm:$0xff]
  %v337 = vld [vmem:[%s1 + $0x880] sm:$0xff]
  %v338 = vld [vmem:[%s1 + $0x888] sm:$0xff]
  %v339 = vld [vmem:[%s1 + $0x890] sm:$0xff]
  %v340 = vld [vmem:[%s1 + $0x898] sm:$0xff]
  %v341 = vld [vmem:[%s1 + $0x8a0] sm:$0xff]
  %v342 = vld [vmem:[%s1 + $0x8a8] sm:$0xff]
  %v343 = vld [vmem:[%s1 + $0x8b0] sm:$0xff]
  %v344 = vld [vmem:[%s1 + $0x8b8] sm:$0xff]
  %v345 = vld [vmem:[%s1 + $0x8c0] sm:$0xff]
  %v346 = vld [vmem:[%s1 + $0x8c8] sm:$0xff]
  %v347 = vld [vmem:[%s1 + $0x8d0] sm:$0xff]
  %v348 = vld [vmem:[%s1 + $0x8d8] sm:$0xff]
  %v349 = vld [vmem:[%s1 + $0x8e0] sm:$0xff]
  %v350 = vld [vmem:[%s1 + $0x8e8] sm:$0xff]
  %v351 = vld [vmem:[%s1 + $0x8f0] sm:$0xff]
  %v352 = vld [vmem:[%s1 + $0x8f8] sm:$0xff]
  %v353 = vld [vmem:[%s1 + $0x900] sm:$0xff]
  %v354 = vld [vmem:[%s1 + $0x908] sm:$0xff]
  %v355 = vld [vmem:[%s1 + $0x910] sm:$0xff]
  %v356 = vld [vmem:[%s1 + $0x918] sm:$0xff]
  %v357 = vld [vmem:[%s1 + $0x920] sm:$0xff]
  %v358 = vld [vmem:[%s1 + $0x928] sm:$0xff]
  %v359 = vld [vmem:[%s1 + $0x930] sm:$0xff]
  %v360 = vld [vmem:[%s1 + $0x938] sm:$0xff]
  %v361 = vld [vmem:[%s1 + $0x940] sm:$0xff]
  %v362 = vld [vmem:[%s1 + $0x948] sm:$0xff]
  %v363 = vld [vmem:[%s1 + $0x950] sm:$0xff]
  %v364 = vld [vmem:[%s1 + $0x958] sm:$0xff]
  %v365 = vld [vmem:[%s1 + $0x960] sm:$0xff]
  %v366 = vld [vmem:[%s1 + $0x968] sm:$0xff]
  %v367 = vld [vmem:[%s1 + $0x970] sm:$0xff]
  %v368 = vld [vmem:[%s1 + $0x978] sm:$0xff]
  %v369 = vld [vmem:[%s1 + $0x980] sm:$0xff]
  %v370 = vld [vmem:[%s1 + $0x988] sm:$0xff]
  %v371 = vld [vmem:[%s1 + $0x990] sm:$0xff]
  %v372 = vld [vmem:[%s1 + $0x998] sm:$0xff]
  %v373 = vld [vmem:[%s1 + $0x9a0] sm:$0xff]
  %v374 = vld [vmem:[%s1 + $0x9a8] sm:$0xff]
  %v375 = vld [vmem:[%s1 + $0x9b0] sm:$0xff]
  %v376 = vld [vmem:[%s1 + $0x9b8] sm:$0xff]
  %v377 = vld [vmem:[%s1 + $0x9c0] sm:$0xff]
  %v378 = vld [vmem:[%s1 + $0x9c8] sm:$0xff]
  %v379 = vld [vmem:[%s1 + $0x9d0] sm:$0xff]
  %v380 = vld [vmem:[%s1 + $0x9d8] sm:$0xff]
  %v381 = vld [vmem:[%s1 + $0x9e0] sm:$0xff]
  %v382 = vld [vmem:[%s1 + $0x9e8] sm:$0xff]
  %v383 = vld [vmem:[%s1 + $0x9f0] sm:$0xff]
  %v384 = vld [vmem:[%s1 + $0x9f8] sm:$0xff]
  %v385 = vld [vmem:[%s1 + $0xa00] sm:$0xff]
  %v386 = vld [vmem:[%s1 + $0xa08] sm:$0xff]
  %v387 = vld [vmem:[%s1 + $0xa10] sm:$0xff]
  %v388 = vld [vmem:[%s1 + $0xa18] sm:$0xff]
  %v389 = vld [vmem:[%s1 + $0xa20] sm:$0xff]
  %v390 = vld [vmem:[%s1 + $0xa28] sm:$0xff]
  %v391 = vld [vmem:[%s1 + $0xa30] sm:$0xff]
  %v392 = vld [vmem:[%s1 + $0xa38] sm:$0xff]
  %v393 = vld [vmem:[%s1 + $0xa40] sm:$0xff]
  %v394 = vld [vmem:[%s1 + $0xa48] sm:$0xff]
  %v395 = vld [vmem:[%s1 + $0xa50] sm:$0xff]
  %v396 = vld [vmem:[%s1 + $0xa58] sm:$0xff]
  %v397 = vld [vmem:[%s1 + $0xa60] sm:$0xff]
  %v398 = vld [vmem:[%s1 + $0xa68] sm:$0xff]
  %v399 = vld [vmem:[%s1 + $0xa70] sm:$0xff]
  %v400 = vld [vmem:[%s1 + $0xa78] sm:$0xff]
  %v401 = vld [vmem:[%s1 + $0xa80] sm:$0xff]
  %v402 = vld [vmem:[%s1 + $0xa88] sm:$0xff]
  %v403 = vld [vmem:[%s1 + $0xa90] sm:$0xff]
  %v404 = vld [vmem:[%s1 + $0xa98] sm:$0xff]
  %v405 = vld [vmem:[%s1 + $0xaa0] sm:$0xff]
  %v406 = vld [vmem:[%s1 + $0xaa8] sm:$0xff]
  %v407 = vld [vmem:[%s1 + $0xab0] sm:$0xff]
  %v408 = vld [vmem:[%s1 + $0xab8] sm:$0xff]
  %v409 = vld [vmem:[%s1 + $0xac0] sm:$0xff]
  %v410 = vld [vmem:[%s1 + $0xac8] sm:$0xff]
  %v411 = vld [vmem:[%s1 + $0xad0] sm:$0xff]
  %v412 = vld [vmem:[%s1 + $0xad8] sm:$0xff]
  %v413 = vld [vmem:[%s1 + $0xae0] sm:$0xff]
  %v414 = vld [vmem:[%s1 + $0xae8] sm:$0xff]
  %v415 = vld [vmem:[%s1 + $0xaf0] sm:$0xff]
  %v416 = vld [vmem:[%s1 + $0xaf8] sm:$0xff]
  %v417 = vld [vmem:[%s1 + $0xb00] sm:$0xff]
  %v418 = vld [vmem:[%s1 + $0xb08] sm:$0xff]
  %v419 = vld [vmem:[%s1 + $0xb10] sm:$0xff]
  %v420 = vld [vmem:[%s1 + $0xb18] sm:$0xff]
  %v421 = vld [vmem:[%s1 + $0xb20] sm:$0xff]
  %v422 = vld [vmem:[%s1 + $0xb28] sm:$0xff]
  %v423 = vld [vmem:[%s1 + $0xb30] sm:$0xff]
  %v424 = vld [vmem:[%s1 + $0xb38] sm:$0xff]
  %v425 = vld [vmem:[%s1 + $0xb40] sm:$0xff]
  %v426 = vld [vmem:[%s1 + $0xb48] sm:$0xff]
  %v427 = vld [vmem:[%s1 + $0xb50] sm:$0xff]
  %v428 = vld [vmem:[%s1 + $0xb58] sm:$0xff]
  %v429 = vld [vmem:[%s1 + $0xb60] sm:$0xff]
  %v430 = vld [vmem:[%s1 + $0xb68] sm:$0xff]
  %v431 = vld [vmem:[%s1 + $0xb70] sm:$0xff]
  %v432 = vld [vmem:[%s1 + $0xb78] sm:$0xff]
  %v433 = vld [vmem:[%s1 + $0xb80] sm:$0xff]
  %v434 = vld [vmem:[%s1 + $0xb88] sm:$0xff]
  %v435 = vld [vmem:[%s1 + $0xb90] sm:$0xff]
  %v436 = vld [vmem:[%s1 + $0xb98] sm:$0xff]
  %v437 = vld [vmem:[%s1 + $0xba0] sm:$0xff]
  %v438 = vld [vmem:[%s1 + $0xba8] sm:$0xff]
  %v439 = vld [vmem:[%s1 + $0xbb0] sm:$0xff]
  %v440 = vld [vmem:[%s1 + $0xbb8] sm:$0xff]
  %v441 = vld [vmem:[%s1 + $0xbc0] sm:$0xff]
  %v442 = vld [vmem:[%s1 + $0xbc8] sm:$0xff]
  %v443 = vld [vmem:[%s1 + $0xbd0] sm:$0xff]
  %v444 = vld [vmem:[%s1 + $0xbd8] sm:$0xff]
  %v445 = vld [vmem:[%s1 + $0xbe0] sm:$0xff]
  %v446 = vld [vmem:[%s1 + $0xbe8] sm:$0xff]
  %v447 = vld [vmem:[%s1 + $0xbf0] sm:$0xff]
  %v448 = vld [vmem:[%s1 + $0xbf8] sm:$0xff]
  %v449 = vld [vmem:[%s1 + $0xc00] sm:$0xff]
  %v450 = vld [vmem:[%s1 + $0xc08] sm:$0xff]
  %v451 = vld [vmem:[%s1 + $0xc10] sm:$0xff]
  %v452 = vld [vmem:[%s1 + $0xc18] sm:$0xff]
  %v453 = vld [vmem:[%s1 + $0xc20] sm:$0xff]
  %v454 = vld [vmem:[%s1 + $0xc28] sm:$0xff]
  %v455 = vld [vmem:[%s1 + $0xc30] sm:$0xff]
  %v456 = vld [vmem:[%s1 + $0xc38] sm:$0xff]
  %v457 = vld [vmem:[%s1 + $0xc40] sm:$0xff]
  %v458 = vld [vmem:[%s1 + $0xc48] sm:$0xff]
  %v459 = vld [vmem:[%s1 + $0xc50] sm:$0xff]
  %v460 = vld [vmem:[%s1 + $0xc58] sm:$0xff]
  %v461 = vld [vmem:[%s1 + $0xc60] sm:$0xff]
  %v462 = vld [vmem:[%s1 + $0xc68] sm:$0xff]
  %v463 = vld [vmem:[%s1 + $0xc70] sm:$0xff]
  %v464 = vld [vmem:[%s1 + $0xc78] sm:$0xff]
  %v465 = vld [vmem:[%s1 + $0xc80] sm:$0xff]
  %v466 = vld [vmem:[%s1 + $0xc88] sm:$0xff]
  %v467 = vld [vmem:[%s1 + $0xc90] sm:$0xff]
  %v468 = vld [vmem:[%s1 + $0xc98] sm:$0xff]
  %v469 = vld [vmem:[%s1 + $0xca0] sm:$0xff]
  %v470 = vld [vmem:[%s1 + $0xca8] sm:$0xff]
  %v471 = vld [vmem:[%s1 + $0xcb0] sm:$0xff]
  %v472 = vld [vmem:[%s1 + $0xcb8] sm:$0xff]
  %v473 = vld [vmem:[%s1 + $0xcc0] sm:$0xff]
  %v474 = vld [vmem:[%s1 + $0xcc8] sm:$0xff]
  %v475 = vld [vmem:[%s1 + $0xcd0] sm:$0xff]
  %v476 = vld [vmem:[%s1 + $0xcd8] sm:$0xff]
  %v477 = vld [vmem:[%s1 + $0xce0] sm:$0xff]
  %v478 = vld [vmem:[%s1 + $0xce8] sm:$0xff]
  %v479 = vld [vmem:[%s1 + $0xcf0] sm:$0xff]
  %v480 = vld [vmem:[%s1 + $0xcf8] sm:$0xff]
  %v481 = vld [vmem:[%s1 + $0xd00] sm:$0xff]
  %v482 = vld [vmem:[%s1 + $0xd08] sm:$0xff]
  %v483 = vld [vmem:[%s1 + $0xd10] sm:$0xff]
  %v484 = vld [vmem:[%s1 + $0xd18] sm:$0xff]
  %v485 = vld [vmem:[%s1 + $0xd20] sm:$0xff]
  %v486 = vld [vmem:[%s1 + $0xd28] sm:$0xff]
  %v487 = vld [vmem:[%s1 + $0xd30] sm:$0xff]
  %v488 = vld [vmem:[%s1 + $0xd38] sm:$0xff]
  %v489 = vld [vmem:[%s1 + $0xd40] sm:$0xff]
  %v490 = vld [vmem:[%s1 + $0xd48] sm:$0xff]
  %v491 = vld [vmem:[%s1 + $0xd50] sm:$0xff]
  %v492 = vld [vmem:[%s1 + $0xd58] sm:$0xff]
  %v493 = vld [vmem:[%s1 + $0xd60] sm:$0xff]
  %v494 = vld [vmem:[%s1 + $0xd68] sm:$0xff]
  %v495 = vld [vmem:[%s1 + $0xd70] sm:$0xff]
  %v496 = vld [vmem:[%s1 + $0xd78] sm:$0xff]
  %v497 = vld [vmem:[%s1 + $0xd80] sm:$0xff]
  %v498 = vld [vmem:[%s1 + $0xd88] sm:$0xff]
  %v499 = vld [vmem:[%s1 + $0xd90] sm:$0xff]
  %v500 = vld [vmem:[%s1 + $0xd98] sm:$0xff]
  %v501 = vld [vmem:[%s1 + $0xda0] sm:$0xff]
  %v502 = vld [vmem:[%s1 + $0xda8] sm:$0xff]
  %v503 = vld [vmem:[%s1 + $0xdb0] sm:$0xff]
  %v504 = vld [vmem:[%s1 + $0xdb8] sm:$0xff]
  %v505 = vld [vmem:[%s1 + $0xdc0] sm:$0xff]
  %v506 = vld [vmem:[%s1 + $0xdc8] sm:$0xff]
  %v507 = vld [vmem:[%s1 + $0xdd0] sm:$0xff]
  %v508 = vld [vmem:[%s1 + $0xdd8] sm:$0xff]
  %v509 = vld [vmem:[%s1 + $0xde0] sm:$0xff]
  %v510 = vld [vmem:[%s1 + $0xde8] sm:$0xff]
  %v511 = vld [vmem:[%s1 + $0xdf0] sm:$0xff]
  %v512 = vld [vmem:[%s1 + $0xdf8] sm:$0xff]
  %v513 = vld [vmem:[%s1 + $0xe00] sm:$0xff]
  %v514 = vld [vmem:[%s1 + $0xe08] sm:$0xff]
  %v515 = vld [vmem:[%s1 + $0xe10] sm:$0xff]
  %v516 = vld [vmem:[%s1 + $0xe18] sm:$0xff]
  %v517 = vld [vmem:[%s1 + $0xe20] sm:$0xff]
  %v518 = vld [vmem:[%s1 + $0xe28] sm:$0xff]
  %v519 = vld [vmem:[%s1 + $0xe30] sm:$0xff]
  %v520 = vld [vmem:[%s1 + $0xe38] sm:$0xff]
  %v521 = vld [vmem:[%s1 + $0xe40] sm:$0xff]
  %v522 = vld [vmem:[%s1 + $0xe48] sm:$0xff]
  %v523 = vld [vmem:[%s1 + $0xe50] sm:$0xff]
  %v524 = vld [vmem:[%s1 + $0xe58] sm:$0xff]
  %v525 = vld [vmem:[%s1 + $0xe60] sm:$0xff]
  %v526 = vld [vmem:[%s1 + $0xe68] sm:$0xff]
  %v527 = vld [vmem:[%s1 + $0xe70] sm:$0xff]
  %v528 = vld [vmem:[%s1 + $0xe78] sm:$0xff]
  %v529 = vld [vmem:[%s1 + $0xe80] sm:$0xff]
  %v530 = vld [vmem:[%s1 + $0xe88] sm:$0xff]
  %v531 = vld [vmem:[%s1 + $0xe90] sm:$0xff]
  %v532 = vld [vmem:[%s1 + $0xe98] sm:$0xff]
  %v533 = vld [vmem:[%s1 + $0xea0] sm:$0xff]
  %v534 = vld [vmem:[%s1 + $0xea8] sm:$0xff]
  %v535 = vld [vmem:[%s1 + $0xeb0] sm:$0xff]
  %v536 = vld [vmem:[%s1 + $0xeb8] sm:$0xff]
  %v537 = vld [vmem:[%s1 + $0xec0] sm:$0xff]
  %v538 = vld [vmem:[%s1 + $0xec8] sm:$0xff]
  %v539 = vld [vmem:[%s1 + $0xed0] sm:$0xff]
  %v540 = vld [vmem:[%s1 + $0xed8] sm:$0xff]
  %v541 = vld [vmem:[%s1 + $0xee0] sm:$0xff]
  %v542 = vld [vmem:[%s1 + $0xee8] sm:$0xff]
  %v543 = vld [vmem:[%s1 + $0xef0] sm:$0xff]
  %v544 = vld [vmem:[%s1 + $0xef8] sm:$0xff]
  %v545 = vld [vmem:[%s1 + $0xf00] sm:$0xff]
  %v546 = vld [vmem:[%s1 + $0xf08] sm:$0xff]
  %v547 = vld [vmem:[%s1 + $0xf10] sm:$0xff]
  %v548 = vld [vmem:[%s1 + $0xf18] sm:$0xff]
  %v549 = vld [vmem:[%s1 + $0xf20] sm:$0xff]
  %v550 = vld [vmem:[%s1 + $0xf28] sm:$0xff]
  %v551 = vld [vmem:[%s1 + $0xf30] sm:$0xff]
  %v552 = vld [vmem:[%s1 + $0xf38] sm:$0xff]
  %v553 = vld [vmem:[%s1 + $0xf40] sm:$0xff]
  %v554 = vld [vmem:[%s1 + $0xf48] sm:$0xff]
  %v555 = vld [vmem:[%s1 + $0xf50] sm:$0xff]
  %v556 = vld [vmem:[%s1 + $0xf58] sm:$0xff]
  %v557 = vld [vmem:[%s1 + $0xf60] sm:$0xff]
  %v558 = vld [vmem:[%s1 + $0xf68] sm:$0xff]
  %v559 = vld [vmem:[%s1 + $0xf70] sm:$0xff]
  %v560 = vld [vmem:[%s1 + $0xf78] sm:$0xff]
  %v561 = vld [vmem:[%s1 + $0xf80] sm:$0xff]
  %v562 = vld [vmem:[%s1 + $0xf88] sm:$0xff]
  %v563 = vld [vmem:[%s1 + $0xf90] sm:$0xff]
  %v564 = vld [vmem:[%s1 + $0xf98] sm:$0xff]
  %v565 = vld [vmem:[%s1 + $0xfa0] sm:$0xff]
  %v566 = vld [vmem:[%s1 + $0xfa8] sm:$0xff]
  %v567 = vld [vmem:[%s1 + $0xfb0] sm:$0xff]
  %v568 = vld [vmem:[%s1 + $0xfb8] sm:$0xff]
  %v569 = vld [vmem:[%s1 + $0xfc0] sm:$0xff]
  %v570 = vld [vmem:[%s1 + $0xfc8] sm:$0xff]
  %v571 = vld [vmem:[%s1 + $0xfd0] sm:$0xff]
  %v572 = vld [vmem:[%s1 + $0xfd8] sm:$0xff]
  %v573 = vld [vmem:[%s1 + $0xfe0] sm:$0xff]
  %v574 = vld [vmem:[%s1 + $0xfe8] sm:$0xff]
  %v575 = vld [vmem:[%s1 + $0xff0] sm:$0xff]
  %v576 = vld [vmem:[%s1 + $0xff8] sm:$0xff]
  %v577 = vld [vmem:[%s1 + $0x1000] sm:$0xff]
  %v578 = vld [vmem:[%s1 + $0x1008] sm:$0xff]
  %v579 = vld [vmem:[%s1 + $0x1010] sm:$0xff]
  %v580 = vld [vmem:[%s1 + $0x1018] sm:$0xff]
  %v581 = vld [vmem:[%s1 + $0x1020] sm:$0xff]
  %v582 = vld [vmem:[%s1 + $0x1028] sm:$0xff]
  %v583 = vld [vmem:[%s1 + $0x1030] sm:$0xff]
  %v584 = vld [vmem:[%s1 + $0x1038] sm:$0xff]
  %v585 = vld [vmem:[%s1 + $0x1040] sm:$0xff]
  %v586 = vld [vmem:[%s1 + $0x1048] sm:$0xff]
  %v587 = vld [vmem:[%s1 + $0x1050] sm:$0xff]
  %v588 = vld [vmem:[%s1 + $0x1058] sm:$0xff]
  %v589 = vld [vmem:[%s1 + $0x1060] sm:$0xff]
  %v590 = vld [vmem:[%s1 + $0x1068] sm:$0xff]
  %v591 = vld [vmem:[%s1 + $0x1070] sm:$0xff]
  %v592 = vld [vmem:[%s1 + $0x1078] sm:$0xff]
  %v593 = vld [vmem:[%s1 + $0x1080] sm:$0xff]
  %v594 = vld [vmem:[%s1 + $0x1088] sm:$0xff]
  %v595 = vld [vmem:[%s1 + $0x1090] sm:$0xff]
  %v596 = vld [vmem:[%s1 + $0x1098] sm:$0xff]
  %v597 = vld [vmem:[%s1 + $0x10a0] sm:$0xff]
  %v598 = vld [vmem:[%s1 + $0x10a8] sm:$0xff]
  %v599 = vld [vmem:[%s1 + $0x10b0] sm:$0xff]
  %v600 = vld [vmem:[%s1 + $0x10b8] sm:$0xff]
  %v601 = vld [vmem:[%s1 + $0x10c0] sm:$0xff]
  %v602 = vld [vmem:[%s1 + $0x10c8] sm:$0xff]
  %v603 = vld [vmem:[%s1 + $0x10d0] sm:$0xff]
  %v604 = vld [vmem:[%s1 + $0x10d8] sm:$0xff]
  %v605 = vld [vmem:[%s1 + $0x10e0] sm:$0xff]
  %v606 = vld [vmem:[%s1 + $0x10e8] sm:$0xff]
  %v607 = vld [vmem:[%s1 + $0x10f0] sm:$0xff]
  %v608 = vld [vmem:[%s1 + $0x10f8] sm:$0xff]
  %v609 = vld [vmem:[%s1 + $0x1100] sm:$0xff]
  %v610 = vld [vmem:[%s1 + $0x1108] sm:$0xff]
  %v611 = vld [vmem:[%s1 + $0x1110] sm:$0xff]
  %v612 = vld [vmem:[%s1 + $0x1118] sm:$0xff]
  %v613 = vld [vmem:[%s1 + $0x1120] sm:$0xff]
  %v614 = vld [vmem:[%s1 + $0x1128] sm:$0xff]
  %v615 = vld [vmem:[%s1 + $0x1130] sm:$0xff]
  %v616 = vld [vmem:[%s1 + $0x1138] sm:$0xff]
  %v617 = vld [vmem:[%s1 + $0x1140] sm:$0xff]
  %v618 = vld [vmem:[%s1 + $0x1148] sm:$0xff]
  %v619 = vld [vmem:[%s1 + $0x1150] sm:$0xff]
  %v620 = vld [vmem:[%s1 + $0x1158] sm:$0xff]
  %v621 = vld [vmem:[%s1 + $0x1160] sm:$0xff]
  %v622 = vld [vmem:[%s1 + $0x1168] sm:$0xff]
  %v623 = vld [vmem:[%s1 + $0x1170] sm:$0xff]
  %v624 = vld [vmem:[%s1 + $0x1178] sm:$0xff]
  %v625 = vld [vmem:[%s1 + $0x1180] sm:$0xff]
  %v626 = vld [vmem:[%s1 + $0x1188] sm:$0xff]
  %v627 = vld [vmem:[%s1 + $0x1190] sm:$0xff]
  %v628 = vld [vmem:[%s1 + $0x1198] sm:$0xff]
  %v629 = vld [vmem:[%s1 + $0x11a0] sm:$0xff]
  %v630 = vld [vmem:[%s1 + $0x11a8] sm:$0xff]
  %v631 = vld [vmem:[%s1 + $0x11b0] sm:$0xff]
  %v632 = vld [vmem:[%s1 + $0x11b8] sm:$0xff]
  %v633 = vld [vmem:[%s1 + $0x11c0] sm:$0xff]
  %v634 = vld [vmem:[%s1 + $0x11c8] sm:$0xff]
  %v635 = vld [vmem:[%s1 + $0x11d0] sm:$0xff]
  %v636 = vld [vmem:[%s1 + $0x11d8] sm:$0xff]
  %v637 = vld [vmem:[%s1 + $0x11e0] sm:$0xff]
  %v638 = vld [vmem:[%s1 + $0x11e8] sm:$0xff]
  %v639 = vld [vmem:[%s1 + $0x11f0] sm:$0xff]
  %v640 = vld [vmem:[%s1 + $0x11f8] sm:$0xff]
  %v641 = vld [vmem:[%s1 + $0x1200] sm:$0xff]
  %v642 = vld [vmem:[%s1 + $0x1208] sm:$0xff]
  %v643 = vld [vmem:[%s1 + $0x1210] sm:$0xff]
  %v644 = vld [vmem:[%s1 + $0x1218] sm:$0xff]
  %v645 = vld [vmem:[%s1 + $0x1220] sm:$0xff]
  %v646 = vld [vmem:[%s1 + $0x1228] sm:$0xff]
  %v647 = vld [vmem:[%s1 + $0x1230] sm:$0xff]
  %v648 = vld [vmem:[%s1 + $0x1238] sm:$0xff]
  %v649 = vld [vmem:[%s1 + $0x1240] sm:$0xff]
  %v650 = vld [vmem:[%s1 + $0x1248] sm:$0xff]
  %v651 = vld [vmem:[%s1 + $0x1250] sm:$0xff]
  %v652 = vld [vmem:[%s1 + $0x1258] sm:$0xff]
  %v653 = vld [vmem:[%s2] sm:$0xf]
  %v655 = vlaneseq
  %v656 = vshrl.u32 %v655, 7
  %v657 = vsub.s32 0, %v656
  %v658 = vrot.slane %v653, %v657
  %v659 = vlaneseq
  %v660 = vshrl.u32 %v659, 7
  %v661 = vsub.s32 1, %v660
  %v662 = vrot.slane %v653, %v661
  %v663 = vlaneseq
  %v664 = vshrl.u32 %v663, 7
  %v665 = vsub.s32 2, %v664
  %v666 = vrot.slane %v653, %v665
  %v667 = vlaneseq
  %v668 = vshrl.u32 %v667, 7
  %v669 = vsub.s32 3, %v668
  %v670 = vrot.slane %v653, %v669
  %v1263 = vunpack.c.l.b16 %v65
  %v1264 = vunpack.c.h.b16 %v65
  %v1265 = vunpack.c.l.b16 %v66
  %v1266 = vunpack.c.h.b16 %v66
  %v1267 = vunpack.c.l.b16 %v67
  %v1268 = vunpack.c.h.b16 %v67
  %v1269 = vunpack.c.l.b16 %v68
  %v1270 = vunpack.c.h.b16 %v68
  %v1271 = vunpack.c.l.b16 %v69
  %v1272 = vunpack.c.h.b16 %v69
  %v1273 = vunpack.c.l.b16 %v70
  %v1274 = vunpack.c.h.b16 %v70
  %v1275 = vunpack.c.l.b16 %v71
  %v1276 = vunpack.c.h.b16 %v71
  %v1277 = vunpack.c.l.b16 %v72
  %v1278 = vunpack.c.h.b16 %v72
  %v1279 = vunpack.c.l.b16 %v73
  %v1280 = vunpack.c.h.b16 %v73
  %v1281 = vunpack.c.l.b16 %v74
  %v1282 = vunpack.c.h.b16 %v74
  %v1283 = vunpack.c.l.b16 %v75
  %v1284 = vunpack.c.h.b16 %v75
  %v1285 = vunpack.c.l.b16 %v76
  %v1286 = vunpack.c.h.b16 %v76
  %v1287 = vunpack.c.l.b16 %v77
  %v1288 = vunpack.c.h.b16 %v77
  %v1289 = vunpack.c.l.b16 %v78
  %v1290 = vunpack.c.h.b16 %v78
  %v1291 = vunpack.c.l.b16 %v79
  %v1292 = vunpack.c.h.b16 %v79
  %v1293 = vunpack.c.l.b16 %v80
  %v1294 = vunpack.c.h.b16 %v80
  %v1295 = vunpack.c.l.b16 %v81
  %v1296 = vunpack.c.h.b16 %v81
  %v1297 = vunpack.c.l.b16 %v82
  %v1298 = vunpack.c.h.b16 %v82
  %v1299 = vunpack.c.l.b16 %v83
  %v1300 = vunpack.c.h.b16 %v83
  %v1301 = vunpack.c.l.b16 %v84
  %v1302 = vunpack.c.h.b16 %v84
  %v1303 = vunpack.c.l.b16 %v85
  %v1304 = vunpack.c.h.b16 %v85
  %v1305 = vunpack.c.l.b16 %v86
  %v1306 = vunpack.c.h.b16 %v86
  %v1307 = vunpack.c.l.b16 %v87
  %v1308 = vunpack.c.h.b16 %v87
  %v1309 = vunpack.c.l.b16 %v88
  %v1310 = vunpack.c.h.b16 %v88
  %v1311 = vunpack.c.l.b16 %v89
  %v1312 = vunpack.c.h.b16 %v89
  %v1313 = vunpack.c.l.b16 %v90
  %v1314 = vunpack.c.h.b16 %v90
  %v1315 = vunpack.c.l.b16 %v91
  %v1316 = vunpack.c.h.b16 %v91
  %v1317 = vunpack.c.l.b16 %v92
  %v1318 = vunpack.c.h.b16 %v92
  %v1319 = vunpack.c.l.b16 %v93
  %v1320 = vunpack.c.h.b16 %v93
  %v1321 = vunpack.c.l.b16 %v94
  %v1322 = vunpack.c.h.b16 %v94
  %v1323 = vunpack.c.l.b16 %v95
  %v1324 = vunpack.c.h.b16 %v95
  %v1325 = vunpack.c.l.b16 %v96
  %v1326 = vunpack.c.h.b16 %v96
  %v1327 = vunpack.c.l.b16 %v97
  %v1328 = vunpack.c.h.b16 %v97
  %v1329 = vunpack.c.l.b16 %v98
  %v1330 = vunpack.c.h.b16 %v98
  %v1331 = vunpack.c.l.b16 %v99
  %v1332 = vunpack.c.h.b16 %v99
  %v1333 = vunpack.c.l.b16 %v100
  %v1334 = vunpack.c.h.b16 %v100
  %v1335 = vunpack.c.l.b16 %v101
  %v1336 = vunpack.c.h.b16 %v101
  %v1337 = vunpack.c.l.b16 %v102
  %v1338 = vunpack.c.h.b16 %v102
  %v1339 = vunpack.c.l.b16 %v103
  %v1340 = vunpack.c.h.b16 %v103
  %v1341 = vunpack.c.l.b16 %v104
  %v1342 = vunpack.c.h.b16 %v104
  %v1343 = vunpack.c.l.b16 %v105
  %v1344 = vunpack.c.h.b16 %v105
  %v1345 = vunpack.c.l.b16 %v106
  %v1346 = vunpack.c.h.b16 %v106
  %v1347 = vunpack.c.l.b16 %v107
  %v1348 = vunpack.c.h.b16 %v107
  %v1349 = vunpack.c.l.b16 %v108
  %v1350 = vunpack.c.h.b16 %v108
  %v1351 = vunpack.c.l.b16 %v109
  %v1352 = vunpack.c.h.b16 %v109
  %v1353 = vunpack.c.l.b16 %v110
  %v1354 = vunpack.c.h.b16 %v110
  %v1355 = vunpack.c.l.b16 %v111
  %v1356 = vunpack.c.h.b16 %v111
  %v1357 = vunpack.c.l.b16 %v112
  %v1358 = vunpack.c.h.b16 %v112
  %v1359 = vunpack.c.l.b16 %v113
  %v1360 = vunpack.c.h.b16 %v113
  %v1361 = vunpack.c.l.b16 %v114
  %v1362 = vunpack.c.h.b16 %v114
  %v1363 = vunpack.c.l.b16 %v115
  %v1364 = vunpack.c.h.b16 %v115
  %v1365 = vunpack.c.l.b16 %v116
  %v1366 = vunpack.c.h.b16 %v116
  %v1367 = vunpack.c.l.b16 %v117
  %v1368 = vunpack.c.h.b16 %v117
  %v1369 = vunpack.c.l.b16 %v118
  %v1370 = vunpack.c.h.b16 %v118
  %v1371 = vunpack.c.l.b16 %v119
  %v1372 = vunpack.c.h.b16 %v119
  %v1373 = vunpack.c.l.b16 %v120
  %v1374 = vunpack.c.h.b16 %v120
  %v1375 = vunpack.c.l.b16 %v121
  %v1376 = vunpack.c.h.b16 %v121
  %v1377 = vunpack.c.l.b16 %v122
  %v1378 = vunpack.c.h.b16 %v122
  %v1379 = vunpack.c.l.b16 %v123
  %v1380 = vunpack.c.h.b16 %v123
  %v1381 = vunpack.c.l.b16 %v124
  %v1382 = vunpack.c.h.b16 %v124
  %v1383 = vunpack.c.l.b16 %v125
  %v1384 = vunpack.c.h.b16 %v125
  %v1385 = vunpack.c.l.b16 %v126
  %v1386 = vunpack.c.h.b16 %v126
  %v1387 = vunpack.c.l.b16 %v127
  %v1388 = vunpack.c.h.b16 %v127
  %v1389 = vunpack.c.l.b16 %v128
  %v1390 = vunpack.c.h.b16 %v128
  %v1391 = vunpack.c.l.b16 %v129
  %v1392 = vunpack.c.h.b16 %v129
  %v1393 = vunpack.c.l.b16 %v130
  %v1394 = vunpack.c.h.b16 %v130
  %v1395 = vunpack.c.l.b16 %v131
  %v1396 = vunpack.c.h.b16 %v131
  %v1397 = vunpack.c.l.b16 %v132
  %v1398 = vunpack.c.h.b16 %v132
  %v1399 = vunpack.c.l.b16 %v133
  %v1400 = vunpack.c.h.b16 %v133
  %v1401 = vunpack.c.l.b16 %v134
  %v1402 = vunpack.c.h.b16 %v134
  %v1403 = vunpack.c.l.b16 %v135
  %v1404 = vunpack.c.h.b16 %v135
  %v1405 = vunpack.c.l.b16 %v136
  %v1406 = vunpack.c.h.b16 %v136
  %v1407 = vunpack.c.l.b16 %v137
  %v1408 = vunpack.c.h.b16 %v137
  %v1409 = vunpack.c.l.b16 %v138
  %v1410 = vunpack.c.h.b16 %v138
  %v1411 = vunpack.c.l.b16 %v139
  %v1412 = vunpack.c.h.b16 %v139
  %v1413 = vunpack.c.l.b16 %v140
  %v1414 = vunpack.c.h.b16 %v140
  %v1415 = vunpack.c.l.b16 %v141
  %v1416 = vunpack.c.h.b16 %v141
  %v1417 = vunpack.c.l.b16 %v142
  %v1418 = vunpack.c.h.b16 %v142
  %v1419 = vunpack.c.l.b16 %v143
  %v1420 = vunpack.c.h.b16 %v143
  %v1421 = vunpack.c.l.b16 %v144
  %v1422 = vunpack.c.h.b16 %v144
  %v1423 = vunpack.c.l.b16 %v145
  %v1424 = vunpack.c.h.b16 %v145
  %v1425 = vunpack.c.l.b16 %v146
  %v1426 = vunpack.c.h.b16 %v146
  %v1427 = vunpack.c.l.b16 %v147
  %v1428 = vunpack.c.h.b16 %v147
  %v1429 = vunpack.c.l.b16 %v148
  %v1430 = vunpack.c.h.b16 %v148
  %v1431 = vunpack.c.l.b16 %v149
  %v1432 = vunpack.c.h.b16 %v149
  %v1433 = vunpack.c.l.b16 %v150
  %v1434 = vunpack.c.h.b16 %v150
  %v1435 = vunpack.c.l.b16 %v151
  %v1436 = vunpack.c.h.b16 %v151
  %v1437 = vunpack.c.l.b16 %v152
  %v1438 = vunpack.c.h.b16 %v152
  %v1439 = vunpack.c.l.b16 %v153
  %v1440 = vunpack.c.h.b16 %v153
  %v1441 = vunpack.c.l.b16 %v154
  %v1442 = vunpack.c.h.b16 %v154
  %v1443 = vunpack.c.l.b16 %v155
  %v1444 = vunpack.c.h.b16 %v155
  %v1445 = vunpack.c.l.b16 %v156
  %v1446 = vunpack.c.h.b16 %v156
  %v1447 = vunpack.c.l.b16 %v157
  %v1448 = vunpack.c.h.b16 %v157
  %v1449 = vunpack.c.l.b16 %v158
  %v1450 = vunpack.c.h.b16 %v158
  %v1451 = vunpack.c.l.b16 %v159
  %v1452 = vunpack.c.h.b16 %v159
  %v1453 = vunpack.c.l.b16 %v160
  %v1454 = vunpack.c.h.b16 %v160
  %v1455 = vunpack.c.l.b16 %v161
  %v1456 = vunpack.c.h.b16 %v161
  %v1457 = vunpack.c.l.b16 %v162
  %v1458 = vunpack.c.h.b16 %v162
  %v1459 = vunpack.c.l.b16 %v163
  %v1460 = vunpack.c.h.b16 %v163
  %v1461 = vunpack.c.l.b16 %v164
  %v1462 = vunpack.c.h.b16 %v164
  %v1463 = vunpack.c.l.b16 %v165
  %v1464 = vunpack.c.h.b16 %v165
  %v1465 = vunpack.c.l.b16 %v166
  %v1466 = vunpack.c.h.b16 %v166
  %v1467 = vunpack.c.l.b16 %v167
  %v1468 = vunpack.c.h.b16 %v167
  %v1469 = vunpack.c.l.b16 %v168
  %v1470 = vunpack.c.h.b16 %v168
  %v1471 = vunpack.c.l.b16 %v169
  %v1472 = vunpack.c.h.b16 %v169
  %v1473 = vunpack.c.l.b16 %v170
  %v1474 = vunpack.c.h.b16 %v170
  %v1475 = vunpack.c.l.b16 %v171
  %v1476 = vunpack.c.h.b16 %v171
  %v1477 = vunpack.c.l.b16 %v172
  %v1478 = vunpack.c.h.b16 %v172
  %v1479 = vunpack.c.l.b16 %v173
  %v1480 = vunpack.c.h.b16 %v173
  %v1481 = vunpack.c.l.b16 %v174
  %v1482 = vunpack.c.h.b16 %v174
  %v1483 = vunpack.c.l.b16 %v175
  %v1484 = vunpack.c.h.b16 %v175
  %v1485 = vunpack.c.l.b16 %v176
  %v1486 = vunpack.c.h.b16 %v176
  %v1487 = vunpack.c.l.b16 %v177
  %v1488 = vunpack.c.h.b16 %v177
  %v1489 = vunpack.c.l.b16 %v178
  %v1490 = vunpack.c.h.b16 %v178
  %v1491 = vunpack.c.l.b16 %v179
  %v1492 = vunpack.c.h.b16 %v179
  %v1493 = vunpack.c.l.b16 %v180
  %v1494 = vunpack.c.h.b16 %v180
  %v1495 = vunpack.c.l.b16 %v181
  %v1496 = vunpack.c.h.b16 %v181
  %v1497 = vunpack.c.l.b16 %v182
  %v1498 = vunpack.c.h.b16 %v182
  %v1499 = vunpack.c.l.b16 %v183
  %v1500 = vunpack.c.h.b16 %v183
  %v1501 = vunpack.c.l.b16 %v184
  %v1502 = vunpack.c.h.b16 %v184
  %v1503 = vunpack.c.l.b16 %v185
  %v1504 = vunpack.c.h.b16 %v185
  %v1505 = vunpack.c.l.b16 %v186
  %v1506 = vunpack.c.h.b16 %v186
  %v1507 = vunpack.c.l.b16 %v187
  %v1508 = vunpack.c.h.b16 %v187
  %v1509 = vunpack.c.l.b16 %v188
  %v1510 = vunpack.c.h.b16 %v188
  %v1511 = vunpack.c.l.b16 %v189
  %v1512 = vunpack.c.h.b16 %v189
  %v1513 = vunpack.c.l.b16 %v190
  %v1514 = vunpack.c.h.b16 %v190
  %v1515 = vunpack.c.l.b16 %v191
  %v1516 = vunpack.c.h.b16 %v191
  %v1517 = vunpack.c.l.b16 %v192
  %v1518 = vunpack.c.h.b16 %v192
  %v1519 = vunpack.c.l.b16 %v193
  %v1520 = vunpack.c.h.b16 %v193
  %v1521 = vunpack.c.l.b16 %v194
  %v1522 = vunpack.c.h.b16 %v194
  %v1523 = vunpack.c.l.b16 %v195
  %v1524 = vunpack.c.h.b16 %v195
  %v1525 = vunpack.c.l.b16 %v196
  %v1526 = vunpack.c.h.b16 %v196
  %v1527 = vunpack.c.l.b16 %v197
  %v1528 = vunpack.c.h.b16 %v197
  %v1529 = vunpack.c.l.b16 %v198
  %v1530 = vunpack.c.h.b16 %v198
  %v1531 = vunpack.c.l.b16 %v199
  %v1532 = vunpack.c.h.b16 %v199
  %v1533 = vunpack.c.l.b16 %v200
  %v1534 = vunpack.c.h.b16 %v200
  %v1535 = vunpack.c.l.b16 %v201
  %v1536 = vunpack.c.h.b16 %v201
  %v1537 = vunpack.c.l.b16 %v202
  %v1538 = vunpack.c.h.b16 %v202
  %v1539 = vunpack.c.l.b16 %v203
  %v1540 = vunpack.c.h.b16 %v203
  %v1541 = vunpack.c.l.b16 %v204
  %v1542 = vunpack.c.h.b16 %v204
  %v1543 = vunpack.c.l.b16 %v205
  %v1544 = vunpack.c.h.b16 %v205
  %v1545 = vunpack.c.l.b16 %v206
  %v1546 = vunpack.c.h.b16 %v206
  %v1547 = vunpack.c.l.b16 %v207
  %v1548 = vunpack.c.h.b16 %v207
  %v1549 = vunpack.c.l.b16 %v208
  %v1550 = vunpack.c.h.b16 %v208
  %v1551 = vunpack.c.l.b16 %v209
  %v1552 = vunpack.c.h.b16 %v209
  %v1553 = vunpack.c.l.b16 %v210
  %v1554 = vunpack.c.h.b16 %v210
  %v1555 = vunpack.c.l.b16 %v211
  %v1556 = vunpack.c.h.b16 %v211
  %v1557 = vunpack.c.l.b16 %v212
  %v1558 = vunpack.c.h.b16 %v212
  %v1559 = vunpack.c.l.b16 %v213
  %v1560 = vunpack.c.h.b16 %v213
  %v1561 = vunpack.c.l.b16 %v214
  %v1562 = vunpack.c.h.b16 %v214
  %v1563 = vunpack.c.l.b16 %v215
  %v1564 = vunpack.c.h.b16 %v215
  %v1565 = vunpack.c.l.b16 %v216
  %v1566 = vunpack.c.h.b16 %v216
  %v1567 = vunpack.c.l.b16 %v217
  %v1568 = vunpack.c.h.b16 %v217
  %v1569 = vunpack.c.l.b16 %v218
  %v1570 = vunpack.c.h.b16 %v218
  %v1571 = vunpack.c.l.b16 %v219
  %v1572 = vunpack.c.h.b16 %v219
  %v1573 = vunpack.c.l.b16 %v220
  %v1574 = vunpack.c.h.b16 %v220
  %v1575 = vunpack.c.l.b16 %v221
  %v1576 = vunpack.c.h.b16 %v221
  %v1577 = vunpack.c.l.b16 %v222
  %v1578 = vunpack.c.h.b16 %v222
  %v1579 = vunpack.c.l.b16 %v223
  %v1580 = vunpack.c.h.b16 %v223
  %v1581 = vunpack.c.l.b16 %v224
  %v1582 = vunpack.c.h.b16 %v224
  %v1583 = vunpack.c.l.b16 %v225
  %v1584 = vunpack.c.h.b16 %v225
  %v1585 = vunpack.c.l.b16 %v226
  %v1586 = vunpack.c.h.b16 %v226
  %v1587 = vunpack.c.l.b16 %v227
  %v1588 = vunpack.c.h.b16 %v227
  %v1589 = vunpack.c.l.b16 %v228
  %v1590 = vunpack.c.h.b16 %v228
  %v1591 = vunpack.c.l.b16 %v229
  %v1592 = vunpack.c.h.b16 %v229
  %v1593 = vunpack.c.l.b16 %v230
  %v1594 = vunpack.c.h.b16 %v230
  %v1595 = vunpack.c.l.b16 %v231
  %v1596 = vunpack.c.h.b16 %v231
  %v1597 = vunpack.c.l.b16 %v232
  %v1598 = vunpack.c.h.b16 %v232
  %v1599 = vunpack.c.l.b16 %v233
  %v1600 = vunpack.c.h.b16 %v233
  %v1601 = vunpack.c.l.b16 %v234
  %v1602 = vunpack.c.h.b16 %v234
  %v1603 = vunpack.c.l.b16 %v235
  %v1604 = vunpack.c.h.b16 %v235
  %v1605 = vunpack.c.l.b16 %v236
  %v1606 = vunpack.c.h.b16 %v236
  %v1607 = vunpack.c.l.b16 %v237
  %v1608 = vunpack.c.h.b16 %v237
  %v1609 = vunpack.c.l.b16 %v238
  %v1610 = vunpack.c.h.b16 %v238
  %v1611 = vunpack.c.l.b16 %v239
  %v1612 = vunpack.c.h.b16 %v239
  %v1613 = vunpack.c.l.b16 %v240
  %v1614 = vunpack.c.h.b16 %v240
  %v1615 = vunpack.c.l.b16 %v241
  %v1616 = vunpack.c.h.b16 %v241
  %v1617 = vunpack.c.l.b16 %v242
  %v1618 = vunpack.c.h.b16 %v242
  %v1619 = vunpack.c.l.b16 %v243
  %v1620 = vunpack.c.h.b16 %v243
  %v1621 = vunpack.c.l.b16 %v244
  %v1622 = vunpack.c.h.b16 %v244
  %v1623 = vunpack.c.l.b16 %v245
  %v1624 = vunpack.c.h.b16 %v245
  %v1625 = vunpack.c.l.b16 %v246
  %v1626 = vunpack.c.h.b16 %v246
  %v1627 = vunpack.c.l.b16 %v247
  %v1628 = vunpack.c.h.b16 %v247
  %v1629 = vunpack.c.l.b16 %v248
  %v1630 = vunpack.c.h.b16 %v248
  %v1631 = vunpack.c.l.b16 %v249
  %v1632 = vunpack.c.h.b16 %v249
  %v1633 = vunpack.c.l.b16 %v250
  %v1634 = vunpack.c.h.b16 %v250
  %v1635 = vunpack.c.l.b16 %v251
  %v1636 = vunpack.c.h.b16 %v251
  %v1637 = vunpack.c.l.b16 %v252
  %v1638 = vunpack.c.h.b16 %v252
  %v1639 = vunpack.c.l.b16 %v253
  %v1640 = vunpack.c.h.b16 %v253
  %v1641 = vunpack.c.l.b16 %v254
  %v1642 = vunpack.c.h.b16 %v254
  %v1643 = vunpack.c.l.b16 %v255
  %v1644 = vunpack.c.h.b16 %v255
  %v1645 = vunpack.c.l.b16 %v256
  %v1646 = vunpack.c.h.b16 %v256
  %v1647 = vunpack.c.l.b16 %v257
  %v1648 = vunpack.c.h.b16 %v257
  %v1649 = vunpack.c.l.b16 %v258
  %v1650 = vunpack.c.h.b16 %v258
  %v1651 = vunpack.c.l.b16 %v259
  %v1652 = vunpack.c.h.b16 %v259
  %v1653 = vunpack.c.l.b16 %v260
  %v1654 = vunpack.c.h.b16 %v260
  %v1655 = vunpack.c.l.b16 %v261
  %v1656 = vunpack.c.h.b16 %v261
  %v1657 = vunpack.c.l.b16 %v262
  %v1658 = vunpack.c.h.b16 %v262
  %v1659 = vunpack.c.l.b16 %v263
  %v1660 = vunpack.c.h.b16 %v263
  %v1661 = vunpack.c.l.b16 %v264
  %v1662 = vunpack.c.h.b16 %v264
  %v1663 = vunpack.c.l.b16 %v265
  %v1664 = vunpack.c.h.b16 %v265
  %v1665 = vunpack.c.l.b16 %v266
  %v1666 = vunpack.c.h.b16 %v266
  %v1667 = vunpack.c.l.b16 %v267
  %v1668 = vunpack.c.h.b16 %v267
  %v1669 = vunpack.c.l.b16 %v268
  %v1670 = vunpack.c.h.b16 %v268
  %v1671 = vunpack.c.l.b16 %v269
  %v1672 = vunpack.c.h.b16 %v269
  %v1673 = vunpack.c.l.b16 %v270
  %v1674 = vunpack.c.h.b16 %v270
  %v1675 = vunpack.c.l.b16 %v271
  %v1676 = vunpack.c.h.b16 %v271
  %v1677 = vunpack.c.l.b16 %v272
  %v1678 = vunpack.c.h.b16 %v272
  %v1679 = vunpack.c.l.b16 %v273
  %v1680 = vunpack.c.h.b16 %v273
  %v1681 = vunpack.c.l.b16 %v274
  %v1682 = vunpack.c.h.b16 %v274
  %v1683 = vunpack.c.l.b16 %v275
  %v1684 = vunpack.c.h.b16 %v275
  %v1685 = vunpack.c.l.b16 %v276
  %v1686 = vunpack.c.h.b16 %v276
  %v1687 = vunpack.c.l.b16 %v277
  %v1688 = vunpack.c.h.b16 %v277
  %v1689 = vunpack.c.l.b16 %v278
  %v1690 = vunpack.c.h.b16 %v278
  %v1691 = vunpack.c.l.b16 %v279
  %v1692 = vunpack.c.h.b16 %v279
  %v1693 = vunpack.c.l.b16 %v280
  %v1694 = vunpack.c.h.b16 %v280
  %v1695 = vunpack.c.l.b16 %v281
  %v1696 = vunpack.c.h.b16 %v281
  %v1697 = vunpack.c.l.b16 %v282
  %v1698 = vunpack.c.h.b16 %v282
  %v1699 = vunpack.c.l.b16 %v283
  %v1700 = vunpack.c.h.b16 %v283
  %v1701 = vunpack.c.l.b16 %v284
  %v1702 = vunpack.c.h.b16 %v284
  %v1703 = vunpack.c.l.b16 %v285
  %v1704 = vunpack.c.h.b16 %v285
  %v1705 = vunpack.c.l.b16 %v286
  %v1706 = vunpack.c.h.b16 %v286
  %v1707 = vunpack.c.l.b16 %v287
  %v1708 = vunpack.c.h.b16 %v287
  %v1709 = vunpack.c.l.b16 %v288
  %v1710 = vunpack.c.h.b16 %v288
  %v1711 = vunpack.c.l.b16 %v289
  %v1712 = vunpack.c.h.b16 %v289
  %v1713 = vunpack.c.l.b16 %v290
  %v1714 = vunpack.c.h.b16 %v290
  %v1715 = vunpack.c.l.b16 %v291
  %v1716 = vunpack.c.h.b16 %v291
  %v1717 = vunpack.c.l.b16 %v292
  %v1718 = vunpack.c.h.b16 %v292
  %v1719 = vunpack.c.l.b16 %v293
  %v1720 = vunpack.c.h.b16 %v293
  %v1721 = vunpack.c.l.b16 %v294
  %v1722 = vunpack.c.h.b16 %v294
  %v1723 = vunpack.c.l.b16 %v295
  %v1724 = vunpack.c.h.b16 %v295
  %v1725 = vunpack.c.l.b16 %v296
  %v1726 = vunpack.c.h.b16 %v296
  %v1727 = vunpack.c.l.b16 %v297
  %v1728 = vunpack.c.h.b16 %v297
  %v1729 = vunpack.c.l.b16 %v298
  %v1730 = vunpack.c.h.b16 %v298
  %v1731 = vunpack.c.l.b16 %v299
  %v1732 = vunpack.c.h.b16 %v299
  %v1733 = vunpack.c.l.b16 %v300
  %v1734 = vunpack.c.h.b16 %v300
  %v1735 = vunpack.c.l.b16 %v301
  %v1736 = vunpack.c.h.b16 %v301
  %v1737 = vunpack.c.l.b16 %v302
  %v1738 = vunpack.c.h.b16 %v302
  %v1739 = vunpack.c.l.b16 %v303
  %v1740 = vunpack.c.h.b16 %v303
  %v1741 = vunpack.c.l.b16 %v304
  %v1742 = vunpack.c.h.b16 %v304
  %v1743 = vunpack.c.l.b16 %v305
  %v1744 = vunpack.c.h.b16 %v305
  %v1745 = vunpack.c.l.b16 %v306
  %v1746 = vunpack.c.h.b16 %v306
  %v1747 = vunpack.c.l.b16 %v307
  %v1748 = vunpack.c.h.b16 %v307
  %v1749 = vunpack.c.l.b16 %v308
  %v1750 = vunpack.c.h.b16 %v308
  %v1751 = vunpack.c.l.b16 %v309
  %v1752 = vunpack.c.h.b16 %v309
  %v1753 = vunpack.c.l.b16 %v310
  %v1754 = vunpack.c.h.b16 %v310
  %v1755 = vunpack.c.l.b16 %v311
  %v1756 = vunpack.c.h.b16 %v311
  %v1757 = vunpack.c.l.b16 %v312
  %v1758 = vunpack.c.h.b16 %v312
  %v1759 = vunpack.c.l.b16 %v313
  %v1760 = vunpack.c.h.b16 %v313
  %v1761 = vunpack.c.l.b16 %v314
  %v1762 = vunpack.c.h.b16 %v314
  %v1763 = vunpack.c.l.b16 %v315
  %v1764 = vunpack.c.h.b16 %v315
  %v1765 = vunpack.c.l.b16 %v316
  %v1766 = vunpack.c.h.b16 %v316
  %v1767 = vunpack.c.l.b16 %v317
  %v1768 = vunpack.c.h.b16 %v317
  %v1769 = vunpack.c.l.b16 %v318
  %v1770 = vunpack.c.h.b16 %v318
  %v1771 = vunpack.c.l.b16 %v319
  %v1772 = vunpack.c.h.b16 %v319
  %v1773 = vunpack.c.l.b16 %v320
  %v1774 = vunpack.c.h.b16 %v320
  %v1775 = vunpack.c.l.b16 %v321
  %v1776 = vunpack.c.h.b16 %v321
  %v1777 = vunpack.c.l.b16 %v322
  %v1778 = vunpack.c.h.b16 %v322
  %v1779 = vunpack.c.l.b16 %v323
  %v1780 = vunpack.c.h.b16 %v323
  %v1781 = vunpack.c.l.b16 %v324
  %v1782 = vunpack.c.h.b16 %v324
  %v1783 = vunpack.c.l.b16 %v325
  %v1784 = vunpack.c.h.b16 %v325
  %v1785 = vunpack.c.l.b16 %v326
  %v1786 = vunpack.c.h.b16 %v326
  %v1787 = vunpack.c.l.b16 %v327
  %v1788 = vunpack.c.h.b16 %v327
  %v1789 = vunpack.c.l.b16 %v328
  %v1790 = vunpack.c.h.b16 %v328
  %v1791 = vunpack.c.l.b16 %v329
  %v1792 = vunpack.c.h.b16 %v329
  %v1793 = vunpack.c.l.b16 %v330
  %v1794 = vunpack.c.h.b16 %v330
  %v1795 = vunpack.c.l.b16 %v331
  %v1796 = vunpack.c.h.b16 %v331
  %v1797 = vunpack.c.l.b16 %v332
  %v1798 = vunpack.c.h.b16 %v332
  %v1799 = vunpack.c.l.b16 %v333
  %v1800 = vunpack.c.h.b16 %v333
  %v1801 = vunpack.c.l.b16 %v334
  %v1802 = vunpack.c.h.b16 %v334
  %v1803 = vunpack.c.l.b16 %v335
  %v1804 = vunpack.c.h.b16 %v335
  %v1805 = vunpack.c.l.b16 %v336
  %v1806 = vunpack.c.h.b16 %v336
  %v1807 = vunpack.c.l.b16 %v337
  %v1808 = vunpack.c.h.b16 %v337
  %v1809 = vunpack.c.l.b16 %v338
  %v1810 = vunpack.c.h.b16 %v338
  %v1811 = vunpack.c.l.b16 %v339
  %v1812 = vunpack.c.h.b16 %v339
  %v1813 = vunpack.c.l.b16 %v340
  %v1814 = vunpack.c.h.b16 %v340
  %v1815 = vunpack.c.l.b16 %v341
  %v1816 = vunpack.c.h.b16 %v341
  %v1817 = vunpack.c.l.b16 %v342
  %v1818 = vunpack.c.h.b16 %v342
  %v1819 = vunpack.c.l.b16 %v343
  %v1820 = vunpack.c.h.b16 %v343
  %v1821 = vunpack.c.l.b16 %v344
  %v1822 = vunpack.c.h.b16 %v344
  %v1823 = vunpack.c.l.b16 %v345
  %v1824 = vunpack.c.h.b16 %v345
  %v1825 = vunpack.c.l.b16 %v346
  %v1826 = vunpack.c.h.b16 %v346
  %v1827 = vunpack.c.l.b16 %v347
  %v1828 = vunpack.c.h.b16 %v347
  %v1829 = vunpack.c.l.b16 %v348
  %v1830 = vunpack.c.h.b16 %v348
  %v1831 = vunpack.c.l.b16 %v349
  %v1832 = vunpack.c.h.b16 %v349
  %v1833 = vunpack.c.l.b16 %v350
  %v1834 = vunpack.c.h.b16 %v350
  %v1835 = vunpack.c.l.b16 %v351
  %v1836 = vunpack.c.h.b16 %v351
  %v1837 = vunpack.c.l.b16 %v352
  %v1838 = vunpack.c.h.b16 %v352
  %v1839 = vunpack.c.l.b16 %v353
  %v1840 = vunpack.c.h.b16 %v353
  %v1841 = vunpack.c.l.b16 %v354
  %v1842 = vunpack.c.h.b16 %v354
  %v1843 = vunpack.c.l.b16 %v355
  %v1844 = vunpack.c.h.b16 %v355
  %v1845 = vunpack.c.l.b16 %v356
  %v1846 = vunpack.c.h.b16 %v356
  %v1847 = vunpack.c.l.b16 %v357
  %v1848 = vunpack.c.h.b16 %v357
  %v1849 = vunpack.c.l.b16 %v358
  %v1850 = vunpack.c.h.b16 %v358
  %v1851 = vunpack.c.l.b16 %v359
  %v1852 = vunpack.c.h.b16 %v359
  %v1853 = vunpack.c.l.b16 %v360
  %v1854 = vunpack.c.h.b16 %v360
  %v1855 = vunpack.c.l.b16 %v361
  %v1856 = vunpack.c.h.b16 %v361
  %v1857 = vunpack.c.l.b16 %v362
  %v1858 = vunpack.c.h.b16 %v362
  %v1859 = vunpack.c.l.b16 %v363
  %v1860 = vunpack.c.h.b16 %v363
  %v1861 = vunpack.c.l.b16 %v364
  %v1862 = vunpack.c.h.b16 %v364
  %v1863 = vunpack.c.l.b16 %v365
  %v1864 = vunpack.c.h.b16 %v365
  %v1865 = vunpack.c.l.b16 %v366
  %v1866 = vunpack.c.h.b16 %v366
  %v1867 = vunpack.c.l.b16 %v367
  %v1868 = vunpack.c.h.b16 %v367
  %v1869 = vunpack.c.l.b16 %v368
  %v1870 = vunpack.c.h.b16 %v368
  %v1871 = vunpack.c.l.b16 %v369
  %v1872 = vunpack.c.h.b16 %v369
  %v1873 = vunpack.c.l.b16 %v370
  %v1874 = vunpack.c.h.b16 %v370
  %v1875 = vunpack.c.l.b16 %v371
  %v1876 = vunpack.c.h.b16 %v371
  %v1877 = vunpack.c.l.b16 %v372
  %v1878 = vunpack.c.h.b16 %v372
  %v1879 = vunpack.c.l.b16 %v373
  %v1880 = vunpack.c.h.b16 %v373
  %v1881 = vunpack.c.l.b16 %v374
  %v1882 = vunpack.c.h.b16 %v374
  %v1883 = vunpack.c.l.b16 %v375
  %v1884 = vunpack.c.h.b16 %v375
  %v1885 = vunpack.c.l.b16 %v376
  %v1886 = vunpack.c.h.b16 %v376
  %v1887 = vunpack.c.l.b16 %v377
  %v1888 = vunpack.c.h.b16 %v377
  %v1889 = vunpack.c.l.b16 %v378
  %v1890 = vunpack.c.h.b16 %v378
  %v1891 = vunpack.c.l.b16 %v379
  %v1892 = vunpack.c.h.b16 %v379
  %v1893 = vunpack.c.l.b16 %v380
  %v1894 = vunpack.c.h.b16 %v380
  %v1895 = vunpack.c.l.b16 %v381
  %v1896 = vunpack.c.h.b16 %v381
  %v1897 = vunpack.c.l.b16 %v382
  %v1898 = vunpack.c.h.b16 %v382
  %v1899 = vunpack.c.l.b16 %v383
  %v1900 = vunpack.c.h.b16 %v383
  %v1901 = vunpack.c.l.b16 %v384
  %v1902 = vunpack.c.h.b16 %v384
  %v1903 = vunpack.c.l.b16 %v385
  %v1904 = vunpack.c.h.b16 %v385
  %v1905 = vunpack.c.l.b16 %v386
  %v1906 = vunpack.c.h.b16 %v386
  %v1907 = vunpack.c.l.b16 %v387
  %v1908 = vunpack.c.h.b16 %v387
  %v1909 = vunpack.c.l.b16 %v388
  %v1910 = vunpack.c.h.b16 %v388
  %v1911 = vunpack.c.l.b16 %v389
  %v1912 = vunpack.c.h.b16 %v389
  %v1913 = vunpack.c.l.b16 %v390
  %v1914 = vunpack.c.h.b16 %v390
  %v1915 = vunpack.c.l.b16 %v391
  %v1916 = vunpack.c.h.b16 %v391
  %v1917 = vunpack.c.l.b16 %v392
  %v1918 = vunpack.c.h.b16 %v392
  %v1919 = vunpack.c.l.b16 %v393
  %v1920 = vunpack.c.h.b16 %v393
  %v1921 = vunpack.c.l.b16 %v394
  %v1922 = vunpack.c.h.b16 %v394
  %v1923 = vunpack.c.l.b16 %v395
  %v1924 = vunpack.c.h.b16 %v395
  %v1925 = vunpack.c.l.b16 %v396
  %v1926 = vunpack.c.h.b16 %v396
  %v1927 = vunpack.c.l.b16 %v397
  %v1928 = vunpack.c.h.b16 %v397
  %v1929 = vunpack.c.l.b16 %v398
  %v1930 = vunpack.c.h.b16 %v398
  %v1931 = vunpack.c.l.b16 %v399
  %v1932 = vunpack.c.h.b16 %v399
  %v1933 = vunpack.c.l.b16 %v400
  %v1934 = vunpack.c.h.b16 %v400
  %v1935 = vunpack.c.l.b16 %v401
  %v1936 = vunpack.c.h.b16 %v401
  %v1937 = vunpack.c.l.b16 %v402
  %v1938 = vunpack.c.h.b16 %v402
  %v1939 = vunpack.c.l.b16 %v403
  %v1940 = vunpack.c.h.b16 %v403
  %v1941 = vunpack.c.l.b16 %v404
  %v1942 = vunpack.c.h.b16 %v404
  %v1943 = vunpack.c.l.b16 %v405
  %v1944 = vunpack.c.h.b16 %v405
  %v1945 = vunpack.c.l.b16 %v406
  %v1946 = vunpack.c.h.b16 %v406
  %v1947 = vunpack.c.l.b16 %v407
  %v1948 = vunpack.c.h.b16 %v407
  %v1949 = vunpack.c.l.b16 %v408
  %v1950 = vunpack.c.h.b16 %v408
  %v1951 = vunpack.c.l.b16 %v409
  %v1952 = vunpack.c.h.b16 %v409
  %v1953 = vunpack.c.l.b16 %v410
  %v1954 = vunpack.c.h.b16 %v410
  %v1955 = vunpack.c.l.b16 %v411
  %v1956 = vunpack.c.h.b16 %v411
  %v1957 = vunpack.c.l.b16 %v412
  %v1958 = vunpack.c.h.b16 %v412
  %v1959 = vunpack.c.l.b16 %v413
  %v1960 = vunpack.c.h.b16 %v413
  %v1961 = vunpack.c.l.b16 %v414
  %v1962 = vunpack.c.h.b16 %v414
  %v1963 = vunpack.c.l.b16 %v415
  %v1964 = vunpack.c.h.b16 %v415
  %v1965 = vunpack.c.l.b16 %v416
  %v1966 = vunpack.c.h.b16 %v416
  %v1967 = vunpack.c.l.b16 %v417
  %v1968 = vunpack.c.h.b16 %v417
  %v1969 = vunpack.c.l.b16 %v418
  %v1970 = vunpack.c.h.b16 %v418
  %v1971 = vunpack.c.l.b16 %v419
  %v1972 = vunpack.c.h.b16 %v419
  %v1973 = vunpack.c.l.b16 %v420
  %v1974 = vunpack.c.h.b16 %v420
  %v1975 = vunpack.c.l.b16 %v421
  %v1976 = vunpack.c.h.b16 %v421
  %v1977 = vunpack.c.l.b16 %v422
  %v1978 = vunpack.c.h.b16 %v422
  %v1979 = vunpack.c.l.b16 %v423
  %v1980 = vunpack.c.h.b16 %v423
  %v1981 = vunpack.c.l.b16 %v424
  %v1982 = vunpack.c.h.b16 %v424
  %v1983 = vunpack.c.l.b16 %v425
  %v1984 = vunpack.c.h.b16 %v425
  %v1985 = vunpack.c.l.b16 %v426
  %v1986 = vunpack.c.h.b16 %v426
  %v1987 = vunpack.c.l.b16 %v427
  %v1988 = vunpack.c.h.b16 %v427
  %v1989 = vunpack.c.l.b16 %v428
  %v1990 = vunpack.c.h.b16 %v428
  %v1991 = vunpack.c.l.b16 %v429
  %v1992 = vunpack.c.h.b16 %v429
  %v1993 = vunpack.c.l.b16 %v430
  %v1994 = vunpack.c.h.b16 %v430
  %v1995 = vunpack.c.l.b16 %v431
  %v1996 = vunpack.c.h.b16 %v431
  %v1997 = vunpack.c.l.b16 %v432
  %v1998 = vunpack.c.h.b16 %v432
  %v1999 = vunpack.c.l.b16 %v433
  %v2000 = vunpack.c.h.b16 %v433
  %v2001 = vunpack.c.l.b16 %v434
  %v2002 = vunpack.c.h.b16 %v434
  %v2003 = vunpack.c.l.b16 %v435
  %v2004 = vunpack.c.h.b16 %v435
  %v2005 = vunpack.c.l.b16 %v436
  %v2006 = vunpack.c.h.b16 %v436
  %v2007 = vunpack.c.l.b16 %v437
  %v2008 = vunpack.c.h.b16 %v437
  %v2009 = vunpack.c.l.b16 %v438
  %v2010 = vunpack.c.h.b16 %v438
  %v2011 = vunpack.c.l.b16 %v439
  %v2012 = vunpack.c.h.b16 %v439
  %v2013 = vunpack.c.l.b16 %v440
  %v2014 = vunpack.c.h.b16 %v440
  %v2015 = vunpack.c.l.b16 %v441
  %v2016 = vunpack.c.h.b16 %v441
  %v2017 = vunpack.c.l.b16 %v442
  %v2018 = vunpack.c.h.b16 %v442
  %v2019 = vunpack.c.l.b16 %v443
  %v2020 = vunpack.c.h.b16 %v443
  %v2021 = vunpack.c.l.b16 %v444
  %v2022 = vunpack.c.h.b16 %v444
  %v2023 = vunpack.c.l.b16 %v445
  %v2024 = vunpack.c.h.b16 %v445
  %v2025 = vunpack.c.l.b16 %v446
  %v2026 = vunpack.c.h.b16 %v446
  %v2027 = vunpack.c.l.b16 %v447
  %v2028 = vunpack.c.h.b16 %v447
  %v2029 = vunpack.c.l.b16 %v448
  %v2030 = vunpack.c.h.b16 %v448
  %v2031 = vunpack.c.l.b16 %v449
  %v2032 = vunpack.c.h.b16 %v449
  %v2033 = vunpack.c.l.b16 %v450
  %v2034 = vunpack.c.h.b16 %v450
  %v2035 = vunpack.c.l.b16 %v451
  %v2036 = vunpack.c.h.b16 %v451
  %v2037 = vunpack.c.l.b16 %v452
  %v2038 = vunpack.c.h.b16 %v452
  %v2039 = vunpack.c.l.b16 %v453
  %v2040 = vunpack.c.h.b16 %v453
  %v2041 = vunpack.c.l.b16 %v454
  %v2042 = vunpack.c.h.b16 %v454
  %v2043 = vunpack.c.l.b16 %v455
  %v2044 = vunpack.c.h.b16 %v455
  %v2045 = vunpack.c.l.b16 %v456
  %v2046 = vunpack.c.h.b16 %v456
  %v2047 = vunpack.c.l.b16 %v457
  %v2048 = vunpack.c.h.b16 %v457
  %v2049 = vunpack.c.l.b16 %v458
  %v2050 = vunpack.c.h.b16 %v458
  %v2051 = vunpack.c.l.b16 %v459
  %v2052 = vunpack.c.h.b16 %v459
  %v2053 = vunpack.c.l.b16 %v460
  %v2054 = vunpack.c.h.b16 %v460
  %v2055 = vunpack.c.l.b16 %v461
  %v2056 = vunpack.c.h.b16 %v461
  %v2057 = vunpack.c.l.b16 %v462
  %v2058 = vunpack.c.h.b16 %v462
  %v2059 = vunpack.c.l.b16 %v463
  %v2060 = vunpack.c.h.b16 %v463
  %v2061 = vunpack.c.l.b16 %v464
  %v2062 = vunpack.c.h.b16 %v464
  %v2063 = vunpack.c.l.b16 %v465
  %v2064 = vunpack.c.h.b16 %v465
  %v2065 = vunpack.c.l.b16 %v466
  %v2066 = vunpack.c.h.b16 %v466
  %v2067 = vunpack.c.l.b16 %v467
  %v2068 = vunpack.c.h.b16 %v467
  %v2069 = vunpack.c.l.b16 %v468
  %v2070 = vunpack.c.h.b16 %v468
  %v2071 = vunpack.c.l.b16 %v469
  %v2072 = vunpack.c.h.b16 %v469
  %v2073 = vunpack.c.l.b16 %v470
  %v2074 = vunpack.c.h.b16 %v470
  %v2075 = vunpack.c.l.b16 %v471
  %v2076 = vunpack.c.h.b16 %v471
  %v2077 = vunpack.c.l.b16 %v472
  %v2078 = vunpack.c.h.b16 %v472
  %v2079 = vunpack.c.l.b16 %v473
  %v2080 = vunpack.c.h.b16 %v473
  %v2081 = vunpack.c.l.b16 %v474
  %v2082 = vunpack.c.h.b16 %v474
  %v2083 = vunpack.c.l.b16 %v475
  %v2084 = vunpack.c.h.b16 %v475
  %v2085 = vunpack.c.l.b16 %v476
  %v2086 = vunpack.c.h.b16 %v476
  %v2087 = vunpack.c.l.b16 %v477
  %v2088 = vunpack.c.h.b16 %v477
  %v2089 = vunpack.c.l.b16 %v478
  %v2090 = vunpack.c.h.b16 %v478
  %v2091 = vunpack.c.l.b16 %v479
  %v2092 = vunpack.c.h.b16 %v479
  %v2093 = vunpack.c.l.b16 %v480
  %v2094 = vunpack.c.h.b16 %v480
  %v2095 = vunpack.c.l.b16 %v481
  %v2096 = vunpack.c.h.b16 %v481
  %v2097 = vunpack.c.l.b16 %v482
  %v2098 = vunpack.c.h.b16 %v482
  %v2099 = vunpack.c.l.b16 %v483
  %v2100 = vunpack.c.h.b16 %v483
  %v2101 = vunpack.c.l.b16 %v484
  %v2102 = vunpack.c.h.b16 %v484
  %v2103 = vunpack.c.l.b16 %v485
  %v2104 = vunpack.c.h.b16 %v485
  %v2105 = vunpack.c.l.b16 %v486
  %v2106 = vunpack.c.h.b16 %v486
  %v2107 = vunpack.c.l.b16 %v487
  %v2108 = vunpack.c.h.b16 %v487
  %v2109 = vunpack.c.l.b16 %v488
  %v2110 = vunpack.c.h.b16 %v488
  %v2111 = vunpack.c.l.b16 %v489
  %v2112 = vunpack.c.h.b16 %v489
  %v2113 = vunpack.c.l.b16 %v490
  %v2114 = vunpack.c.h.b16 %v490
  %v2115 = vunpack.c.l.b16 %v491
  %v2116 = vunpack.c.h.b16 %v491
  %v2117 = vunpack.c.l.b16 %v492
  %v2118 = vunpack.c.h.b16 %v492
  %v2119 = vunpack.c.l.b16 %v493
  %v2120 = vunpack.c.h.b16 %v493
  %v2121 = vunpack.c.l.b16 %v494
  %v2122 = vunpack.c.h.b16 %v494
  %v2123 = vunpack.c.l.b16 %v495
  %v2124 = vunpack.c.h.b16 %v495
  %v2125 = vunpack.c.l.b16 %v496
  %v2126 = vunpack.c.h.b16 %v496
  %v2127 = vunpack.c.l.b16 %v497
  %v2128 = vunpack.c.h.b16 %v497
  %v2129 = vunpack.c.l.b16 %v498
  %v2130 = vunpack.c.h.b16 %v498
  %v2131 = vunpack.c.l.b16 %v499
  %v2132 = vunpack.c.h.b16 %v499
  %v2133 = vunpack.c.l.b16 %v500
  %v2134 = vunpack.c.h.b16 %v500
  %v2135 = vunpack.c.l.b16 %v501
  %v2136 = vunpack.c.h.b16 %v501
  %v2137 = vunpack.c.l.b16 %v502
  %v2138 = vunpack.c.h.b16 %v502
  %v2139 = vunpack.c.l.b16 %v503
  %v2140 = vunpack.c.h.b16 %v503
  %v2141 = vunpack.c.l.b16 %v504
  %v2142 = vunpack.c.h.b16 %v504
  %v2143 = vunpack.c.l.b16 %v505
  %v2144 = vunpack.c.h.b16 %v505
  %v2145 = vunpack.c.l.b16 %v506
  %v2146 = vunpack.c.h.b16 %v506
  %v2147 = vunpack.c.l.b16 %v507
  %v2148 = vunpack.c.h.b16 %v507
  %v2149 = vunpack.c.l.b16 %v508
  %v2150 = vunpack.c.h.b16 %v508
  %v2151 = vunpack.c.l.b16 %v509
  %v2152 = vunpack.c.h.b16 %v509
  %v2153 = vunpack.c.l.b16 %v510
  %v2154 = vunpack.c.h.b16 %v510
  %v2155 = vunpack.c.l.b16 %v511
  %v2156 = vunpack.c.h.b16 %v511
  %v2157 = vunpack.c.l.b16 %v512
  %v2158 = vunpack.c.h.b16 %v512
  %v2159 = vunpack.c.l.b16 %v513
  %v2160 = vunpack.c.h.b16 %v513
  %v2161 = vunpack.c.l.b16 %v514
  %v2162 = vunpack.c.h.b16 %v514
  %v2163 = vunpack.c.l.b16 %v515
  %v2164 = vunpack.c.h.b16 %v515
  %v2165 = vunpack.c.l.b16 %v516
  %v2166 = vunpack.c.h.b16 %v516
  %v2167 = vunpack.c.l.b16 %v517
  %v2168 = vunpack.c.h.b16 %v517
  %v2169 = vunpack.c.l.b16 %v518
  %v2170 = vunpack.c.h.b16 %v518
  %v2171 = vunpack.c.l.b16 %v519
  %v2172 = vunpack.c.h.b16 %v519
  %v2173 = vunpack.c.l.b16 %v520
  %v2174 = vunpack.c.h.b16 %v520
  %v2175 = vunpack.c.l.b16 %v521
  %v2176 = vunpack.c.h.b16 %v521
  %v2177 = vunpack.c.l.b16 %v522
  %v2178 = vunpack.c.h.b16 %v522
  %v2179 = vunpack.c.l.b16 %v523
  %v2180 = vunpack.c.h.b16 %v523
  %v2181 = vunpack.c.l.b16 %v524
  %v2182 = vunpack.c.h.b16 %v524
  %v2183 = vunpack.c.l.b16 %v525
  %v2184 = vunpack.c.h.b16 %v525
  %v2185 = vunpack.c.l.b16 %v526
  %v2186 = vunpack.c.h.b16 %v526
  %v2187 = vunpack.c.l.b16 %v527
  %v2188 = vunpack.c.h.b16 %v527
  %v2189 = vunpack.c.l.b16 %v528
  %v2190 = vunpack.c.h.b16 %v528
  %v2191 = vunpack.c.l.b16 %v529
  %v2192 = vunpack.c.h.b16 %v529
  %v2193 = vunpack.c.l.b16 %v530
  %v2194 = vunpack.c.h.b16 %v530
  %v2195 = vunpack.c.l.b16 %v531
  %v2196 = vunpack.c.h.b16 %v531
  %v2197 = vunpack.c.l.b16 %v532
  %v2198 = vunpack.c.h.b16 %v532
  %v2199 = vunpack.c.l.b16 %v533
  %v2200 = vunpack.c.h.b16 %v533
  %v2201 = vunpack.c.l.b16 %v534
  %v2202 = vunpack.c.h.b16 %v534
  %v2203 = vunpack.c.l.b16 %v535
  %v2204 = vunpack.c.h.b16 %v535
  %v2205 = vunpack.c.l.b16 %v536
  %v2206 = vunpack.c.h.b16 %v536
  %v2207 = vunpack.c.l.b16 %v537
  %v2208 = vunpack.c.h.b16 %v537
  %v2209 = vunpack.c.l.b16 %v538
  %v2210 = vunpack.c.h.b16 %v538
  %v2211 = vunpack.c.l.b16 %v539
  %v2212 = vunpack.c.h.b16 %v539
  %v2213 = vunpack.c.l.b16 %v540
  %v2214 = vunpack.c.h.b16 %v540
  %v2215 = vunpack.c.l.b16 %v541
  %v2216 = vunpack.c.h.b16 %v541
  %v2217 = vunpack.c.l.b16 %v542
  %v2218 = vunpack.c.h.b16 %v542
  %v2219 = vunpack.c.l.b16 %v543
  %v2220 = vunpack.c.h.b16 %v543
  %v2221 = vunpack.c.l.b16 %v544
  %v2222 = vunpack.c.h.b16 %v544
  %v2223 = vunpack.c.l.b16 %v545
  %v2224 = vunpack.c.h.b16 %v545
  %v2225 = vunpack.c.l.b16 %v546
  %v2226 = vunpack.c.h.b16 %v546
  %v2227 = vunpack.c.l.b16 %v547
  %v2228 = vunpack.c.h.b16 %v547
  %v2229 = vunpack.c.l.b16 %v548
  %v2230 = vunpack.c.h.b16 %v548
  %v2231 = vunpack.c.l.b16 %v549
  %v2232 = vunpack.c.h.b16 %v549
  %v2233 = vunpack.c.l.b16 %v550
  %v2234 = vunpack.c.h.b16 %v550
  %v2235 = vunpack.c.l.b16 %v551
  %v2236 = vunpack.c.h.b16 %v551
  %v2237 = vunpack.c.l.b16 %v552
  %v2238 = vunpack.c.h.b16 %v552
  %v2239 = vunpack.c.l.b16 %v553
  %v2240 = vunpack.c.h.b16 %v553
  %v2241 = vunpack.c.l.b16 %v554
  %v2242 = vunpack.c.h.b16 %v554
  %v2243 = vunpack.c.l.b16 %v555
  %v2244 = vunpack.c.h.b16 %v555
  %v2245 = vunpack.c.l.b16 %v556
  %v2246 = vunpack.c.h.b16 %v556
  %v2247 = vunpack.c.l.b16 %v557
  %v2248 = vunpack.c.h.b16 %v557
  %v2249 = vunpack.c.l.b16 %v558
  %v2250 = vunpack.c.h.b16 %v558
  %v2251 = vunpack.c.l.b16 %v559
  %v2252 = vunpack.c.h.b16 %v559
  %v2253 = vunpack.c.l.b16 %v560
  %v2254 = vunpack.c.h.b16 %v560
  %v2255 = vunpack.c.l.b16 %v561
  %v2256 = vunpack.c.h.b16 %v561
  %v2257 = vunpack.c.l.b16 %v562
  %v2258 = vunpack.c.h.b16 %v562
  %v2259 = vunpack.c.l.b16 %v563
  %v2260 = vunpack.c.h.b16 %v563
  %v2261 = vunpack.c.l.b16 %v564
  %v2262 = vunpack.c.h.b16 %v564
  %v2263 = vunpack.c.l.b16 %v565
  %v2264 = vunpack.c.h.b16 %v565
  %v2265 = vunpack.c.l.b16 %v566
  %v2266 = vunpack.c.h.b16 %v566
  %v2267 = vunpack.c.l.b16 %v567
  %v2268 = vunpack.c.h.b16 %v567
  %v2269 = vunpack.c.l.b16 %v568
  %v2270 = vunpack.c.h.b16 %v568
  %v2271 = vunpack.c.l.b16 %v569
  %v2272 = vunpack.c.h.b16 %v569
  %v2273 = vunpack.c.l.b16 %v570
  %v2274 = vunpack.c.h.b16 %v570
  %v2275 = vunpack.c.l.b16 %v571
  %v2276 = vunpack.c.h.b16 %v571
  %v2277 = vunpack.c.l.b16 %v572
  %v2278 = vunpack.c.h.b16 %v572
  %v2279 = vunpack.c.l.b16 %v573
  %v2280 = vunpack.c.h.b16 %v573
  %v2281 = vunpack.c.l.b16 %v574
  %v2282 = vunpack.c.h.b16 %v574
  %v2283 = vunpack.c.l.b16 %v575
  %v2284 = vunpack.c.h.b16 %v575
  %v2285 = vunpack.c.l.b16 %v576
  %v2286 = vunpack.c.h.b16 %v576
  %v2287 = vunpack.c.l.b16 %v577
  %v2288 = vunpack.c.h.b16 %v577
  %v2289 = vunpack.c.l.b16 %v578
  %v2290 = vunpack.c.h.b16 %v578
  %v2291 = vunpack.c.l.b16 %v579
  %v2292 = vunpack.c.h.b16 %v579
  %v2293 = vunpack.c.l.b16 %v580
  %v2294 = vunpack.c.h.b16 %v580
  %v2295 = vunpack.c.l.b16 %v581
  %v2296 = vunpack.c.h.b16 %v581
  %v2297 = vunpack.c.l.b16 %v582
  %v2298 = vunpack.c.h.b16 %v582
  %v2299 = vunpack.c.l.b16 %v583
  %v2300 = vunpack.c.h.b16 %v583
  %v2301 = vunpack.c.l.b16 %v584
  %v2302 = vunpack.c.h.b16 %v584
  %v2303 = vunpack.c.l.b16 %v585
  %v2304 = vunpack.c.h.b16 %v585
  %v2305 = vunpack.c.l.b16 %v586
  %v2306 = vunpack.c.h.b16 %v586
  %v2307 = vunpack.c.l.b16 %v587
  %v2308 = vunpack.c.h.b16 %v587
  %v2309 = vunpack.c.l.b16 %v588
  %v2310 = vunpack.c.h.b16 %v588
  %v2311 = vunpack.c.l.b16 %v589
  %v2312 = vunpack.c.h.b16 %v589
  %v2313 = vunpack.c.l.b16 %v590
  %v2314 = vunpack.c.h.b16 %v590
  %v2315 = vunpack.c.l.b16 %v591
  %v2316 = vunpack.c.h.b16 %v591
  %v2317 = vunpack.c.l.b16 %v592
  %v2318 = vunpack.c.h.b16 %v592
  %v2319 = vunpack.c.l.b16 %v593
  %v2320 = vunpack.c.h.b16 %v593
  %v2321 = vunpack.c.l.b16 %v594
  %v2322 = vunpack.c.h.b16 %v594
  %v2323 = vunpack.c.l.b16 %v595
  %v2324 = vunpack.c.h.b16 %v595
  %v2325 = vunpack.c.l.b16 %v596
  %v2326 = vunpack.c.h.b16 %v596
  %v2327 = vunpack.c.l.b16 %v597
  %v2328 = vunpack.c.h.b16 %v597
  %v2329 = vunpack.c.l.b16 %v598
  %v2330 = vunpack.c.h.b16 %v598
  %v2331 = vunpack.c.l.b16 %v599
  %v2332 = vunpack.c.h.b16 %v599
  %v2333 = vunpack.c.l.b16 %v600
  %v2334 = vunpack.c.h.b16 %v600
  %v2335 = vunpack.c.l.b16 %v601
  %v2336 = vunpack.c.h.b16 %v601
  %v2337 = vunpack.c.l.b16 %v602
  %v2338 = vunpack.c.h.b16 %v602
  %v2339 = vunpack.c.l.b16 %v603
  %v2340 = vunpack.c.h.b16 %v603
  %v2341 = vunpack.c.l.b16 %v604
  %v2342 = vunpack.c.h.b16 %v604
  %v2343 = vunpack.c.l.b16 %v605
  %v2344 = vunpack.c.h.b16 %v605
  %v2345 = vunpack.c.l.b16 %v606
  %v2346 = vunpack.c.h.b16 %v606
  %v2347 = vunpack.c.l.b16 %v607
  %v2348 = vunpack.c.h.b16 %v607
  %v2349 = vunpack.c.l.b16 %v608
  %v2350 = vunpack.c.h.b16 %v608
  %v2351 = vunpack.c.l.b16 %v609
  %v2352 = vunpack.c.h.b16 %v609
  %v2353 = vunpack.c.l.b16 %v610
  %v2354 = vunpack.c.h.b16 %v610
  %v2355 = vunpack.c.l.b16 %v611
  %v2356 = vunpack.c.h.b16 %v611
  %v2357 = vunpack.c.l.b16 %v612
  %v2358 = vunpack.c.h.b16 %v612
  %v2359 = vunpack.c.l.b16 %v613
  %v2360 = vunpack.c.h.b16 %v613
  %v2361 = vunpack.c.l.b16 %v614
  %v2362 = vunpack.c.h.b16 %v614
  %v2363 = vunpack.c.l.b16 %v615
  %v2364 = vunpack.c.h.b16 %v615
  %v2365 = vunpack.c.l.b16 %v616
  %v2366 = vunpack.c.h.b16 %v616
  %v2367 = vunpack.c.l.b16 %v617
  %v2368 = vunpack.c.h.b16 %v617
  %v2369 = vunpack.c.l.b16 %v618
  %v2370 = vunpack.c.h.b16 %v618
  %v2371 = vunpack.c.l.b16 %v619
  %v2372 = vunpack.c.h.b16 %v619
  %v2373 = vunpack.c.l.b16 %v620
  %v2374 = vunpack.c.h.b16 %v620
  %v2375 = vunpack.c.l.b16 %v621
  %v2376 = vunpack.c.h.b16 %v621
  %v2377 = vunpack.c.l.b16 %v622
  %v2378 = vunpack.c.h.b16 %v622
  %v2379 = vunpack.c.l.b16 %v623
  %v2380 = vunpack.c.h.b16 %v623
  %v2381 = vunpack.c.l.b16 %v624
  %v2382 = vunpack.c.h.b16 %v624
  %v2383 = vunpack.c.l.b16 %v625
  %v2384 = vunpack.c.h.b16 %v625
  %v2385 = vunpack.c.l.b16 %v626
  %v2386 = vunpack.c.h.b16 %v626
  %v2387 = vunpack.c.l.b16 %v627
  %v2388 = vunpack.c.h.b16 %v627
  %v2389 = vunpack.c.l.b16 %v628
  %v2390 = vunpack.c.h.b16 %v628
  %v2391 = vunpack.c.l.b16 %v629
  %v2392 = vunpack.c.h.b16 %v629
  %v2393 = vunpack.c.l.b16 %v630
  %v2394 = vunpack.c.h.b16 %v630
  %v2395 = vunpack.c.l.b16 %v631
  %v2396 = vunpack.c.h.b16 %v631
  %v2397 = vunpack.c.l.b16 %v632
  %v2398 = vunpack.c.h.b16 %v632
  %v2399 = vunpack.c.l.b16 %v633
  %v2400 = vunpack.c.h.b16 %v633
  %v2401 = vunpack.c.l.b16 %v634
  %v2402 = vunpack.c.h.b16 %v634
  %v2403 = vunpack.c.l.b16 %v635
  %v2404 = vunpack.c.h.b16 %v635
  %v2405 = vunpack.c.l.b16 %v636
  %v2406 = vunpack.c.h.b16 %v636
  %v2407 = vunpack.c.l.b16 %v637
  %v2408 = vunpack.c.h.b16 %v637
  %v2409 = vunpack.c.l.b16 %v638
  %v2410 = vunpack.c.h.b16 %v638
  %v2411 = vunpack.c.l.b16 %v639
  %v2412 = vunpack.c.h.b16 %v639
  %v2413 = vunpack.c.l.b16 %v640
  %v2414 = vunpack.c.h.b16 %v640
  %v2415 = vunpack.c.l.b16 %v641
  %v2416 = vunpack.c.h.b16 %v641
  %v2417 = vunpack.c.l.b16 %v642
  %v2418 = vunpack.c.h.b16 %v642
  %v2419 = vunpack.c.l.b16 %v643
  %v2420 = vunpack.c.h.b16 %v643
  %v2421 = vunpack.c.l.b16 %v644
  %v2422 = vunpack.c.h.b16 %v644
  %v2423 = vunpack.c.l.b16 %v645
  %v2424 = vunpack.c.h.b16 %v645
  %v2425 = vunpack.c.l.b16 %v646
  %v2426 = vunpack.c.h.b16 %v646
  %v2427 = vunpack.c.l.b16 %v647
  %v2428 = vunpack.c.h.b16 %v647
  %v2429 = vunpack.c.l.b16 %v648
  %v2430 = vunpack.c.h.b16 %v648
  %v2431 = vunpack.c.l.b16 %v649
  %v2432 = vunpack.c.h.b16 %v649
  %v2433 = vunpack.c.l.b16 %v650
  %v2434 = vunpack.c.h.b16 %v650
  %v2435 = vunpack.c.l.b16 %v651
  %v2436 = vunpack.c.h.b16 %v651
  %v2437 = vunpack.c.l.b16 %v652
  %v2438 = vunpack.c.h.b16 %v652
  %v2439 = vpack.c.b16 %v1267, %v1263
  %v2440 = vpack.c.b16 %v1268, %v1264
  %v2441 = vpack.c.b16 %v1269, %v1265
  %v2442 = vpack.c.b16 %v1270, %v1266
  %v2443 = vpack.c.b16 %v1275, %v1271
  %v2444 = vpack.c.b16 %v1276, %v1272
  %v2445 = vpack.c.b16 %v1277, %v1273
  %v2446 = vpack.c.b16 %v1278, %v1274
  %v2447 = vpack.c.b16 %v1283, %v1279
  %v2448 = vpack.c.b16 %v1284, %v1280
  %v2449 = vpack.c.b16 %v1285, %v1281
  %v2450 = vpack.c.b16 %v1286, %v1282
  %v2451 = vpack.c.b16 %v1291, %v1287
  %v2452 = vpack.c.b16 %v1292, %v1288
  %v2453 = vpack.c.b16 %v1293, %v1289
  %v2454 = vpack.c.b16 %v1294, %v1290
  %v2455 = vpack.c.b16 %v1299, %v1295
  %v2456 = vpack.c.b16 %v1300, %v1296
  %v2457 = vpack.c.b16 %v1301, %v1297
  %v2458 = vpack.c.b16 %v1302, %v1298
  %v2459 = vpack.c.b16 %v1307, %v1303
  %v2460 = vpack.c.b16 %v1308, %v1304
  %v2461 = vpack.c.b16 %v1309, %v1305
  %v2462 = vpack.c.b16 %v1310, %v1306
  %v2463 = vpack.c.b16 %v1315, %v1311
  %v2464 = vpack.c.b16 %v1316, %v1312
  %v2465 = vpack.c.b16 %v1317, %v1313
  %v2466 = vpack.c.b16 %v1318, %v1314
  %v2467 = vpack.c.b16 %v1323, %v1319
  %v2468 = vpack.c.b16 %v1324, %v1320
  %v2469 = vpack.c.b16 %v1325, %v1321
  %v2470 = vpack.c.b16 %v1326, %v1322
  %v2471 = vpack.c.b16 %v1331, %v1327
  %v2472 = vpack.c.b16 %v1332, %v1328
  %v2473 = vpack.c.b16 %v1333, %v1329
  %v2474 = vpack.c.b16 %v1334, %v1330
  %v2475 = vpack.c.b16 %v1339, %v1335
  %v2476 = vpack.c.b16 %v1340, %v1336
  %v2477 = vpack.c.b16 %v1341, %v1337
  %v2478 = vpack.c.b16 %v1342, %v1338
  %v2479 = vpack.c.b16 %v1347, %v1343
  %v2480 = vpack.c.b16 %v1348, %v1344
  %v2481 = vpack.c.b16 %v1349, %v1345
  %v2482 = vpack.c.b16 %v1350, %v1346
  %v2483 = vpack.c.b16 %v1355, %v1351
  %v2484 = vpack.c.b16 %v1356, %v1352
  %v2485 = vpack.c.b16 %v1357, %v1353
  %v2486 = vpack.c.b16 %v1358, %v1354
  %v2487 = vpack.c.b16 %v1363, %v1359
  %v2488 = vpack.c.b16 %v1364, %v1360
  %v2489 = vpack.c.b16 %v1365, %v1361
  %v2490 = vpack.c.b16 %v1366, %v1362
  %v2491 = vpack.c.b16 %v1371, %v1367
  %v2492 = vpack.c.b16 %v1372, %v1368
  %v2493 = vpack.c.b16 %v1373, %v1369
  %v2494 = vpack.c.b16 %v1374, %v1370
  %v2495 = vpack.c.b16 %v1379, %v1375
  %v2496 = vpack.c.b16 %v1380, %v1376
  %v2497 = vpack.c.b16 %v1381, %v1377
  %v2498 = vpack.c.b16 %v1382, %v1378
  %v2499 = vpack.c.b16 %v1387, %v1383
  %v2500 = vpack.c.b16 %v1388, %v1384
  %v2501 = vpack.c.b16 %v1389, %v1385
  %v2502 = vpack.c.b16 %v1390, %v1386
  %v2503 = vpack.c.b16 %v1395, %v1391
  %v2504 = vpack.c.b16 %v1396, %v1392
  %v2505 = vpack.c.b16 %v1397, %v1393
  %v2506 = vpack.c.b16 %v1398, %v1394
  %v2507 = vpack.c.b16 %v1403, %v1399
  %v2508 = vpack.c.b16 %v1404, %v1400
  %v2509 = vpack.c.b16 %v1405, %v1401
  %v2510 = vpack.c.b16 %v1406, %v1402
  %v2511 = vpack.c.b16 %v1411, %v1407
  %v2512 = vpack.c.b16 %v1412, %v1408
  %v2513 = vpack.c.b16 %v1413, %v1409
  %v2514 = vpack.c.b16 %v1414, %v1410
  %v2515 = vpack.c.b16 %v1419, %v1415
  %v2516 = vpack.c.b16 %v1420, %v1416
  %v2517 = vpack.c.b16 %v1421, %v1417
  %v2518 = vpack.c.b16 %v1422, %v1418
  %v2519 = vpack.c.b16 %v1427, %v1423
  %v2520 = vpack.c.b16 %v1428, %v1424
  %v2521 = vpack.c.b16 %v1429, %v1425
  %v2522 = vpack.c.b16 %v1430, %v1426
  %v2523 = vpack.c.b16 %v1435, %v1431
  %v2524 = vpack.c.b16 %v1436, %v1432
  %v2525 = vpack.c.b16 %v1437, %v1433
  %v2526 = vpack.c.b16 %v1438, %v1434
  %v2527 = vpack.c.b16 %v1443, %v1439
  %v2528 = vpack.c.b16 %v1444, %v1440
  %v2529 = vpack.c.b16 %v1445, %v1441
  %v2530 = vpack.c.b16 %v1446, %v1442
  %v2531 = vpack.c.b16 %v1451, %v1447
  %v2532 = vpack.c.b16 %v1452, %v1448
  %v2533 = vpack.c.b16 %v1453, %v1449
  %v2534 = vpack.c.b16 %v1454, %v1450
  %v2535 = vpack.c.b16 %v1459, %v1455
  %v2536 = vpack.c.b16 %v1460, %v1456
  %v2537 = vpack.c.b16 %v1461, %v1457
  %v2538 = vpack.c.b16 %v1462, %v1458
  %v2539 = vpack.c.b16 %v1467, %v1463
  %v2540 = vpack.c.b16 %v1468, %v1464
  %v2541 = vpack.c.b16 %v1469, %v1465
  %v2542 = vpack.c.b16 %v1470, %v1466
  %v2543 = vpack.c.b16 %v1475, %v1471
  %v2544 = vpack.c.b16 %v1476, %v1472
  %v2545 = vpack.c.b16 %v1477, %v1473
  %v2546 = vpack.c.b16 %v1478, %v1474
  %v2547 = vpack.c.b16 %v1483, %v1479
  %v2548 = vpack.c.b16 %v1484, %v1480
  %v2549 = vpack.c.b16 %v1485, %v1481
  %v2550 = vpack.c.b16 %v1486, %v1482
  %v2551 = vpack.c.b16 %v1491, %v1487
  %v2552 = vpack.c.b16 %v1492, %v1488
  %v2553 = vpack.c.b16 %v1493, %v1489
  %v2554 = vpack.c.b16 %v1494, %v1490
  %v2555 = vpack.c.b16 %v1499, %v1495
  %v2556 = vpack.c.b16 %v1500, %v1496
  %v2557 = vpack.c.b16 %v1501, %v1497
  %v2558 = vpack.c.b16 %v1502, %v1498
  %v2559 = vpack.c.b16 %v1507, %v1503
  %v2560 = vpack.c.b16 %v1508, %v1504
  %v2561 = vpack.c.b16 %v1509, %v1505
  %v2562 = vpack.c.b16 %v1510, %v1506
  %v2563 = vpack.c.b16 %v1515, %v1511
  %v2564 = vpack.c.b16 %v1516, %v1512
  %v2565 = vpack.c.b16 %v1517, %v1513
  %v2566 = vpack.c.b16 %v1518, %v1514
  %v2567 = vpack.c.b16 %v1523, %v1519
  %v2568 = vpack.c.b16 %v1524, %v1520
  %v2569 = vpack.c.b16 %v1525, %v1521
  %v2570 = vpack.c.b16 %v1526, %v1522
  %v2571 = vpack.c.b16 %v1531, %v1527
  %v2572 = vpack.c.b16 %v1532, %v1528
  %v2573 = vpack.c.b16 %v1533, %v1529
  %v2574 = vpack.c.b16 %v1534, %v1530
  %v2575 = vpack.c.b16 %v1539, %v1535
  %v2576 = vpack.c.b16 %v1540, %v1536
  %v2577 = vpack.c.b16 %v1541, %v1537
  %v2578 = vpack.c.b16 %v1542, %v1538
  %v2579 = vpack.c.b16 %v1547, %v1543
  %v2580 = vpack.c.b16 %v1548, %v1544
  %v2581 = vpack.c.b16 %v1549, %v1545
  %v2582 = vpack.c.b16 %v1550, %v1546
  %v2583 = vpack.c.b16 %v1555, %v1551
  %v2584 = vpack.c.b16 %v1556, %v1552
  %v2585 = vpack.c.b16 %v1557, %v1553
  %v2586 = vpack.c.b16 %v1558, %v1554
  %v2587 = vpack.c.b16 %v1563, %v1559
  %v2588 = vpack.c.b16 %v1564, %v1560
  %v2589 = vpack.c.b16 %v1565, %v1561
  %v2590 = vpack.c.b16 %v1566, %v1562
  %v2591 = vpack.c.b16 %v1571, %v1567
  %v2592 = vpack.c.b16 %v1572, %v1568
  %v2593 = vpack.c.b16 %v1573, %v1569
  %v2594 = vpack.c.b16 %v1574, %v1570
  %v2595 = vpack.c.b16 %v1579, %v1575
  %v2596 = vpack.c.b16 %v1580, %v1576
  %v2597 = vpack.c.b16 %v1581, %v1577
  %v2598 = vpack.c.b16 %v1582, %v1578
  %v2599 = vpack.c.b16 %v1587, %v1583
  %v2600 = vpack.c.b16 %v1588, %v1584
  %v2601 = vpack.c.b16 %v1589, %v1585
  %v2602 = vpack.c.b16 %v1590, %v1586
  %v2603 = vpack.c.b16 %v1595, %v1591
  %v2604 = vpack.c.b16 %v1596, %v1592
  %v2605 = vpack.c.b16 %v1597, %v1593
  %v2606 = vpack.c.b16 %v1598, %v1594
  %v2607 = vpack.c.b16 %v1603, %v1599
  %v2608 = vpack.c.b16 %v1604, %v1600
  %v2609 = vpack.c.b16 %v1605, %v1601
  %v2610 = vpack.c.b16 %v1606, %v1602
  %v2611 = vpack.c.b16 %v1611, %v1607
  %v2612 = vpack.c.b16 %v1612, %v1608
  %v2613 = vpack.c.b16 %v1613, %v1609
  %v2614 = vpack.c.b16 %v1614, %v1610
  %v2615 = vpack.c.b16 %v1619, %v1615
  %v2616 = vpack.c.b16 %v1620, %v1616
  %v2617 = vpack.c.b16 %v1621, %v1617
  %v2618 = vpack.c.b16 %v1622, %v1618
  %v2619 = vpack.c.b16 %v1627, %v1623
  %v2620 = vpack.c.b16 %v1628, %v1624
  %v2621 = vpack.c.b16 %v1629, %v1625
  %v2622 = vpack.c.b16 %v1630, %v1626
  %v2623 = vpack.c.b16 %v1635, %v1631
  %v2624 = vpack.c.b16 %v1636, %v1632
  %v2625 = vpack.c.b16 %v1637, %v1633
  %v2626 = vpack.c.b16 %v1638, %v1634
  %v2627 = vpack.c.b16 %v1643, %v1639
  %v2628 = vpack.c.b16 %v1644, %v1640
  %v2629 = vpack.c.b16 %v1645, %v1641
  %v2630 = vpack.c.b16 %v1646, %v1642
  %v2631 = vpack.c.b16 %v1651, %v1647
  %v2632 = vpack.c.b16 %v1652, %v1648
  %v2633 = vpack.c.b16 %v1653, %v1649
  %v2634 = vpack.c.b16 %v1654, %v1650
  %v2635 = vpack.c.b16 %v1659, %v1655
  %v2636 = vpack.c.b16 %v1660, %v1656
  %v2637 = vpack.c.b16 %v1661, %v1657
  %v2638 = vpack.c.b16 %v1662, %v1658
  %v2639 = vpack.c.b16 %v1667, %v1663
  %v2640 = vpack.c.b16 %v1668, %v1664
  %v2641 = vpack.c.b16 %v1669, %v1665
  %v2642 = vpack.c.b16 %v1670, %v1666
  %v2643 = vpack.c.b16 %v1675, %v1671
  %v2644 = vpack.c.b16 %v1676, %v1672
  %v2645 = vpack.c.b16 %v1677, %v1673
  %v2646 = vpack.c.b16 %v1678, %v1674
  %v2647 = vpack.c.b16 %v1683, %v1679
  %v2648 = vpack.c.b16 %v1684, %v1680
  %v2649 = vpack.c.b16 %v1685, %v1681
  %v2650 = vpack.c.b16 %v1686, %v1682
  %v2651 = vpack.c.b16 %v1691, %v1687
  %v2652 = vpack.c.b16 %v1692, %v1688
  %v2653 = vpack.c.b16 %v1693, %v1689
  %v2654 = vpack.c.b16 %v1694, %v1690
  %v2655 = vpack.c.b16 %v1699, %v1695
  %v2656 = vpack.c.b16 %v1700, %v1696
  %v2657 = vpack.c.b16 %v1701, %v1697
  %v2658 = vpack.c.b16 %v1702, %v1698
  %v2659 = vpack.c.b16 %v1707, %v1703
  %v2660 = vpack.c.b16 %v1708, %v1704
  %v2661 = vpack.c.b16 %v1709, %v1705
  %v2662 = vpack.c.b16 %v1710, %v1706
  %v2663 = vpack.c.b16 %v1715, %v1711
  %v2664 = vpack.c.b16 %v1716, %v1712
  %v2665 = vpack.c.b16 %v1717, %v1713
  %v2666 = vpack.c.b16 %v1718, %v1714
  %v2667 = vpack.c.b16 %v1723, %v1719
  %v2668 = vpack.c.b16 %v1724, %v1720
  %v2669 = vpack.c.b16 %v1725, %v1721
  %v2670 = vpack.c.b16 %v1726, %v1722
  %v2671 = vpack.c.b16 %v1731, %v1727
  %v2672 = vpack.c.b16 %v1732, %v1728
  %v2673 = vpack.c.b16 %v1733, %v1729
  %v2674 = vpack.c.b16 %v1734, %v1730
  %v2675 = vpack.c.b16 %v1739, %v1735
  %v2676 = vpack.c.b16 %v1740, %v1736
  %v2677 = vpack.c.b16 %v1741, %v1737
  %v2678 = vpack.c.b16 %v1742, %v1738
  %v2679 = vpack.c.b16 %v1747, %v1743
  %v2680 = vpack.c.b16 %v1748, %v1744
  %v2681 = vpack.c.b16 %v1749, %v1745
  %v2682 = vpack.c.b16 %v1750, %v1746
  %v2683 = vpack.c.b16 %v1755, %v1751
  %v2684 = vpack.c.b16 %v1756, %v1752
  %v2685 = vpack.c.b16 %v1757, %v1753
  %v2686 = vpack.c.b16 %v1758, %v1754
  %v2687 = vpack.c.b16 %v1763, %v1759
  %v2688 = vpack.c.b16 %v1764, %v1760
  %v2689 = vpack.c.b16 %v1765, %v1761
  %v2690 = vpack.c.b16 %v1766, %v1762
  %v2691 = vpack.c.b16 %v1771, %v1767
  %v2692 = vpack.c.b16 %v1772, %v1768
  %v2693 = vpack.c.b16 %v1773, %v1769
  %v2694 = vpack.c.b16 %v1774, %v1770
  %v2695 = vpack.c.b16 %v1779, %v1775
  %v2696 = vpack.c.b16 %v1780, %v1776
  %v2697 = vpack.c.b16 %v1781, %v1777
  %v2698 = vpack.c.b16 %v1782, %v1778
  %v2699 = vpack.c.b16 %v1787, %v1783
  %v2700 = vpack.c.b16 %v1788, %v1784
  %v2701 = vpack.c.b16 %v1789, %v1785
  %v2702 = vpack.c.b16 %v1790, %v1786
  %v2703 = vpack.c.b16 %v1795, %v1791
  %v2704 = vpack.c.b16 %v1796, %v1792
  %v2705 = vpack.c.b16 %v1797, %v1793
  %v2706 = vpack.c.b16 %v1798, %v1794
  %v2707 = vpack.c.b16 %v1803, %v1799
  %v2708 = vpack.c.b16 %v1804, %v1800
  %v2709 = vpack.c.b16 %v1805, %v1801
  %v2710 = vpack.c.b16 %v1806, %v1802
  %v2711 = vpack.c.b16 %v1811, %v1807
  %v2712 = vpack.c.b16 %v1812, %v1808
  %v2713 = vpack.c.b16 %v1813, %v1809
  %v2714 = vpack.c.b16 %v1814, %v1810
  %v2715 = vpack.c.b16 %v1819, %v1815
  %v2716 = vpack.c.b16 %v1820, %v1816
  %v2717 = vpack.c.b16 %v1821, %v1817
  %v2718 = vpack.c.b16 %v1822, %v1818
  %v2719 = vpack.c.b16 %v1827, %v1823
  %v2720 = vpack.c.b16 %v1828, %v1824
  %v2721 = vpack.c.b16 %v1829, %v1825
  %v2722 = vpack.c.b16 %v1830, %v1826
  %v2723 = vpack.c.b16 %v1835, %v1831
  %v2724 = vpack.c.b16 %v1836, %v1832
  %v2725 = vpack.c.b16 %v1837, %v1833
  %v2726 = vpack.c.b16 %v1838, %v1834
  %v2727 = vpack.c.b16 %v1843, %v1839
  %v2728 = vpack.c.b16 %v1844, %v1840
  %v2729 = vpack.c.b16 %v1845, %v1841
  %v2730 = vpack.c.b16 %v1846, %v1842
  %v2731 = vpack.c.b16 %v1851, %v1847
  %v2732 = vpack.c.b16 %v1852, %v1848
  %v2733 = vpack.c.b16 %v1853, %v1849
  %v2734 = vpack.c.b16 %v1854, %v1850
  %v2735 = vpack.c.b16 %v1859, %v1855
  %v2736 = vpack.c.b16 %v1860, %v1856
  %v2737 = vpack.c.b16 %v1861, %v1857
  %v2738 = vpack.c.b16 %v1862, %v1858
  %v2739 = vpack.c.b16 %v1867, %v1863
  %v2740 = vpack.c.b16 %v1868, %v1864
  %v2741 = vpack.c.b16 %v1869, %v1865
  %v2742 = vpack.c.b16 %v1870, %v1866
  %v2743 = vpack.c.b16 %v1875, %v1871
  %v2744 = vpack.c.b16 %v1876, %v1872
  %v2745 = vpack.c.b16 %v1877, %v1873
  %v2746 = vpack.c.b16 %v1878, %v1874
  %v2747 = vpack.c.b16 %v1883, %v1879
  %v2748 = vpack.c.b16 %v1884, %v1880
  %v2749 = vpack.c.b16 %v1885, %v1881
  %v2750 = vpack.c.b16 %v1886, %v1882
  %v2751 = vpack.c.b16 %v1891, %v1887
  %v2752 = vpack.c.b16 %v1892, %v1888
  %v2753 = vpack.c.b16 %v1893, %v1889
  %v2754 = vpack.c.b16 %v1894, %v1890
  %v2755 = vpack.c.b16 %v1899, %v1895
  %v2756 = vpack.c.b16 %v1900, %v1896
  %v2757 = vpack.c.b16 %v1901, %v1897
  %v2758 = vpack.c.b16 %v1902, %v1898
  %v2759 = vpack.c.b16 %v1907, %v1903
  %v2760 = vpack.c.b16 %v1908, %v1904
  %v2761 = vpack.c.b16 %v1909, %v1905
  %v2762 = vpack.c.b16 %v1910, %v1906
  %v2763 = vpack.c.b16 %v1915, %v1911
  %v2764 = vpack.c.b16 %v1916, %v1912
  %v2765 = vpack.c.b16 %v1917, %v1913
  %v2766 = vpack.c.b16 %v1918, %v1914
  %v2767 = vpack.c.b16 %v1923, %v1919
  %v2768 = vpack.c.b16 %v1924, %v1920
  %v2769 = vpack.c.b16 %v1925, %v1921
  %v2770 = vpack.c.b16 %v1926, %v1922
  %v2771 = vpack.c.b16 %v1931, %v1927
  %v2772 = vpack.c.b16 %v1932, %v1928
  %v2773 = vpack.c.b16 %v1933, %v1929
  %v2774 = vpack.c.b16 %v1934, %v1930
  %v2775 = vpack.c.b16 %v1939, %v1935
  %v2776 = vpack.c.b16 %v1940, %v1936
  %v2777 = vpack.c.b16 %v1941, %v1937
  %v2778 = vpack.c.b16 %v1942, %v1938
  %v2779 = vpack.c.b16 %v1947, %v1943
  %v2780 = vpack.c.b16 %v1948, %v1944
  %v2781 = vpack.c.b16 %v1949, %v1945
  %v2782 = vpack.c.b16 %v1950, %v1946
  %v2783 = vpack.c.b16 %v1955, %v1951
  %v2784 = vpack.c.b16 %v1956, %v1952
  %v2785 = vpack.c.b16 %v1957, %v1953
  %v2786 = vpack.c.b16 %v1958, %v1954
  %v2787 = vpack.c.b16 %v1963, %v1959
  %v2788 = vpack.c.b16 %v1964, %v1960
  %v2789 = vpack.c.b16 %v1965, %v1961
  %v2790 = vpack.c.b16 %v1966, %v1962
  %v2791 = vpack.c.b16 %v1971, %v1967
  %v2792 = vpack.c.b16 %v1972, %v1968
  %v2793 = vpack.c.b16 %v1973, %v1969
  %v2794 = vpack.c.b16 %v1974, %v1970
  %v2795 = vpack.c.b16 %v1979, %v1975
  %v2796 = vpack.c.b16 %v1980, %v1976
  %v2797 = vpack.c.b16 %v1981, %v1977
  %v2798 = vpack.c.b16 %v1982, %v1978
  %v2799 = vpack.c.b16 %v1987, %v1983
  %v2800 = vpack.c.b16 %v1988, %v1984
  %v2801 = vpack.c.b16 %v1989, %v1985
  %v2802 = vpack.c.b16 %v1990, %v1986
  %v2803 = vpack.c.b16 %v1995, %v1991
  %v2804 = vpack.c.b16 %v1996, %v1992
  %v2805 = vpack.c.b16 %v1997, %v1993
  %v2806 = vpack.c.b16 %v1998, %v1994
  %v2807 = vpack.c.b16 %v2003, %v1999
  %v2808 = vpack.c.b16 %v2004, %v2000
  %v2809 = vpack.c.b16 %v2005, %v2001
  %v2810 = vpack.c.b16 %v2006, %v2002
  %v2811 = vpack.c.b16 %v2011, %v2007
  %v2812 = vpack.c.b16 %v2012, %v2008
  %v2813 = vpack.c.b16 %v2013, %v2009
  %v2814 = vpack.c.b16 %v2014, %v2010
  %v2815 = vpack.c.b16 %v2019, %v2015
  %v2816 = vpack.c.b16 %v2020, %v2016
  %v2817 = vpack.c.b16 %v2021, %v2017
  %v2818 = vpack.c.b16 %v2022, %v2018
  %v2819 = vpack.c.b16 %v2027, %v2023
  %v2820 = vpack.c.b16 %v2028, %v2024
  %v2821 = vpack.c.b16 %v2029, %v2025
  %v2822 = vpack.c.b16 %v2030, %v2026
  %v2823 = vpack.c.b16 %v2035, %v2031
  %v2824 = vpack.c.b16 %v2036, %v2032
  %v2825 = vpack.c.b16 %v2037, %v2033
  %v2826 = vpack.c.b16 %v2038, %v2034
  %v2827 = vpack.c.b16 %v2043, %v2039
  %v2828 = vpack.c.b16 %v2044, %v2040
  %v2829 = vpack.c.b16 %v2045, %v2041
  %v2830 = vpack.c.b16 %v2046, %v2042
  %v2831 = vpack.c.b16 %v2051, %v2047
  %v2832 = vpack.c.b16 %v2052, %v2048
  %v2833 = vpack.c.b16 %v2053, %v2049
  %v2834 = vpack.c.b16 %v2054, %v2050
  %v2835 = vpack.c.b16 %v2059, %v2055
  %v2836 = vpack.c.b16 %v2060, %v2056
  %v2837 = vpack.c.b16 %v2061, %v2057
  %v2838 = vpack.c.b16 %v2062, %v2058
  %v2839 = vpack.c.b16 %v2067, %v2063
  %v2840 = vpack.c.b16 %v2068, %v2064
  %v2841 = vpack.c.b16 %v2069, %v2065
  %v2842 = vpack.c.b16 %v2070, %v2066
  %v2843 = vpack.c.b16 %v2075, %v2071
  %v2844 = vpack.c.b16 %v2076, %v2072
  %v2845 = vpack.c.b16 %v2077, %v2073
  %v2846 = vpack.c.b16 %v2078, %v2074
  %v2847 = vpack.c.b16 %v2083, %v2079
  %v2848 = vpack.c.b16 %v2084, %v2080
  %v2849 = vpack.c.b16 %v2085, %v2081
  %v2850 = vpack.c.b16 %v2086, %v2082
  %v2851 = vpack.c.b16 %v2091, %v2087
  %v2852 = vpack.c.b16 %v2092, %v2088
  %v2853 = vpack.c.b16 %v2093, %v2089
  %v2854 = vpack.c.b16 %v2094, %v2090
  %v2855 = vpack.c.b16 %v2099, %v2095
  %v2856 = vpack.c.b16 %v2100, %v2096
  %v2857 = vpack.c.b16 %v2101, %v2097
  %v2858 = vpack.c.b16 %v2102, %v2098
  %v2859 = vpack.c.b16 %v2107, %v2103
  %v2860 = vpack.c.b16 %v2108, %v2104
  %v2861 = vpack.c.b16 %v2109, %v2105
  %v2862 = vpack.c.b16 %v2110, %v2106
  %v2863 = vpack.c.b16 %v2115, %v2111
  %v2864 = vpack.c.b16 %v2116, %v2112
  %v2865 = vpack.c.b16 %v2117, %v2113
  %v2866 = vpack.c.b16 %v2118, %v2114
  %v2867 = vpack.c.b16 %v2123, %v2119
  %v2868 = vpack.c.b16 %v2124, %v2120
  %v2869 = vpack.c.b16 %v2125, %v2121
  %v2870 = vpack.c.b16 %v2126, %v2122
  %v2871 = vpack.c.b16 %v2131, %v2127
  %v2872 = vpack.c.b16 %v2132, %v2128
  %v2873 = vpack.c.b16 %v2133, %v2129
  %v2874 = vpack.c.b16 %v2134, %v2130
  %v2875 = vpack.c.b16 %v2139, %v2135
  %v2876 = vpack.c.b16 %v2140, %v2136
  %v2877 = vpack.c.b16 %v2141, %v2137
  %v2878 = vpack.c.b16 %v2142, %v2138
  %v2879 = vpack.c.b16 %v2147, %v2143
  %v2880 = vpack.c.b16 %v2148, %v2144
  %v2881 = vpack.c.b16 %v2149, %v2145
  %v2882 = vpack.c.b16 %v2150, %v2146
  %v2883 = vpack.c.b16 %v2155, %v2151
  %v2884 = vpack.c.b16 %v2156, %v2152
  %v2885 = vpack.c.b16 %v2157, %v2153
  %v2886 = vpack.c.b16 %v2158, %v2154
  %v2887 = vpack.c.b16 %v2163, %v2159
  %v2888 = vpack.c.b16 %v2164, %v2160
  %v2889 = vpack.c.b16 %v2165, %v2161
  %v2890 = vpack.c.b16 %v2166, %v2162
  %v2891 = vpack.c.b16 %v2171, %v2167
  %v2892 = vpack.c.b16 %v2172, %v2168
  %v2893 = vpack.c.b16 %v2173, %v2169
  %v2894 = vpack.c.b16 %v2174, %v2170
  %v2895 = vpack.c.b16 %v2179, %v2175
  %v2896 = vpack.c.b16 %v2180, %v2176
  %v2897 = vpack.c.b16 %v2181, %v2177
  %v2898 = vpack.c.b16 %v2182, %v2178
  %v2899 = vpack.c.b16 %v2187, %v2183
  %v2900 = vpack.c.b16 %v2188, %v2184
  %v2901 = vpack.c.b16 %v2189, %v2185
  %v2902 = vpack.c.b16 %v2190, %v2186
  %v2903 = vpack.c.b16 %v2195, %v2191
  %v2904 = vpack.c.b16 %v2196, %v2192
  %v2905 = vpack.c.b16 %v2197, %v2193
  %v2906 = vpack.c.b16 %v2198, %v2194
  %v2907 = vpack.c.b16 %v2203, %v2199
  %v2908 = vpack.c.b16 %v2204, %v2200
  %v2909 = vpack.c.b16 %v2205, %v2201
  %v2910 = vpack.c.b16 %v2206, %v2202
  %v2911 = vpack.c.b16 %v2211, %v2207
  %v2912 = vpack.c.b16 %v2212, %v2208
  %v2913 = vpack.c.b16 %v2213, %v2209
  %v2914 = vpack.c.b16 %v2214, %v2210
  %v2915 = vpack.c.b16 %v2219, %v2215
  %v2916 = vpack.c.b16 %v2220, %v2216
  %v2917 = vpack.c.b16 %v2221, %v2217
  %v2918 = vpack.c.b16 %v2222, %v2218
  %v2919 = vpack.c.b16 %v2227, %v2223
  %v2920 = vpack.c.b16 %v2228, %v2224
  %v2921 = vpack.c.b16 %v2229, %v2225
  %v2922 = vpack.c.b16 %v2230, %v2226
  %v2923 = vpack.c.b16 %v2235, %v2231
  %v2924 = vpack.c.b16 %v2236, %v2232
  %v2925 = vpack.c.b16 %v2237, %v2233
  %v2926 = vpack.c.b16 %v2238, %v2234
  %v2927 = vpack.c.b16 %v2243, %v2239
  %v2928 = vpack.c.b16 %v2244, %v2240
  %v2929 = vpack.c.b16 %v2245, %v2241
  %v2930 = vpack.c.b16 %v2246, %v2242
  %v2931 = vpack.c.b16 %v2251, %v2247
  %v2932 = vpack.c.b16 %v2252, %v2248
  %v2933 = vpack.c.b16 %v2253, %v2249
  %v2934 = vpack.c.b16 %v2254, %v2250
  %v2935 = vpack.c.b16 %v2259, %v2255
  %v2936 = vpack.c.b16 %v2260, %v2256
  %v2937 = vpack.c.b16 %v2261, %v2257
  %v2938 = vpack.c.b16 %v2262, %v2258
  %v2939 = vpack.c.b16 %v2267, %v2263
  %v2940 = vpack.c.b16 %v2268, %v2264
  %v2941 = vpack.c.b16 %v2269, %v2265
  %v2942 = vpack.c.b16 %v2270, %v2266
  %v2943 = vpack.c.b16 %v2275, %v2271
  %v2944 = vpack.c.b16 %v2276, %v2272
  %v2945 = vpack.c.b16 %v2277, %v2273
  %v2946 = vpack.c.b16 %v2278, %v2274
  %v2947 = vpack.c.b16 %v2283, %v2279
  %v2948 = vpack.c.b16 %v2284, %v2280
  %v2949 = vpack.c.b16 %v2285, %v2281
  %v2950 = vpack.c.b16 %v2286, %v2282
  %v2951 = vpack.c.b16 %v2291, %v2287
  %v2952 = vpack.c.b16 %v2292, %v2288
  %v2953 = vpack.c.b16 %v2293, %v2289
  %v2954 = vpack.c.b16 %v2294, %v2290
  %v2955 = vpack.c.b16 %v2299, %v2295
  %v2956 = vpack.c.b16 %v2300, %v2296
  %v2957 = vpack.c.b16 %v2301, %v2297
  %v2958 = vpack.c.b16 %v2302, %v2298
  %v2959 = vpack.c.b16 %v2307, %v2303
  %v2960 = vpack.c.b16 %v2308, %v2304
  %v2961 = vpack.c.b16 %v2309, %v2305
  %v2962 = vpack.c.b16 %v2310, %v2306
  %v2963 = vpack.c.b16 %v2315, %v2311
  %v2964 = vpack.c.b16 %v2316, %v2312
  %v2965 = vpack.c.b16 %v2317, %v2313
  %v2966 = vpack.c.b16 %v2318, %v2314
  %v2967 = vpack.c.b16 %v2323, %v2319
  %v2968 = vpack.c.b16 %v2324, %v2320
  %v2969 = vpack.c.b16 %v2325, %v2321
  %v2970 = vpack.c.b16 %v2326, %v2322
  %v2971 = vpack.c.b16 %v2331, %v2327
  %v2972 = vpack.c.b16 %v2332, %v2328
  %v2973 = vpack.c.b16 %v2333, %v2329
  %v2974 = vpack.c.b16 %v2334, %v2330
  %v2975 = vpack.c.b16 %v2339, %v2335
  %v2976 = vpack.c.b16 %v2340, %v2336
  %v2977 = vpack.c.b16 %v2341, %v2337
  %v2978 = vpack.c.b16 %v2342, %v2338
  %v2979 = vpack.c.b16 %v2347, %v2343
  %v2980 = vpack.c.b16 %v2348, %v2344
  %v2981 = vpack.c.b16 %v2349, %v2345
  %v2982 = vpack.c.b16 %v2350, %v2346
  %v2983 = vpack.c.b16 %v2355, %v2351
  %v2984 = vpack.c.b16 %v2356, %v2352
  %v2985 = vpack.c.b16 %v2357, %v2353
  %v2986 = vpack.c.b16 %v2358, %v2354
  %v2987 = vpack.c.b16 %v2363, %v2359
  %v2988 = vpack.c.b16 %v2364, %v2360
  %v2989 = vpack.c.b16 %v2365, %v2361
  %v2990 = vpack.c.b16 %v2366, %v2362
  %v2991 = vpack.c.b16 %v2371, %v2367
  %v2992 = vpack.c.b16 %v2372, %v2368
  %v2993 = vpack.c.b16 %v2373, %v2369
  %v2994 = vpack.c.b16 %v2374, %v2370
  %v2995 = vpack.c.b16 %v2379, %v2375
  %v2996 = vpack.c.b16 %v2380, %v2376
  %v2997 = vpack.c.b16 %v2381, %v2377
  %v2998 = vpack.c.b16 %v2382, %v2378
  %v2999 = vpack.c.b16 %v2387, %v2383
  %v3000 = vpack.c.b16 %v2388, %v2384
  %v3001 = vpack.c.b16 %v2389, %v2385
  %v3002 = vpack.c.b16 %v2390, %v2386
  %v3003 = vpack.c.b16 %v2395, %v2391
  %v3004 = vpack.c.b16 %v2396, %v2392
  %v3005 = vpack.c.b16 %v2397, %v2393
  %v3006 = vpack.c.b16 %v2398, %v2394
  %v3007 = vpack.c.b16 %v2403, %v2399
  %v3008 = vpack.c.b16 %v2404, %v2400
  %v3009 = vpack.c.b16 %v2405, %v2401
  %v3010 = vpack.c.b16 %v2406, %v2402
  %v3011 = vpack.c.b16 %v2411, %v2407
  %v3012 = vpack.c.b16 %v2412, %v2408
  %v3013 = vpack.c.b16 %v2413, %v2409
  %v3014 = vpack.c.b16 %v2414, %v2410
  %v3015 = vpack.c.b16 %v2419, %v2415
  %v3016 = vpack.c.b16 %v2420, %v2416
  %v3017 = vpack.c.b16 %v2421, %v2417
  %v3018 = vpack.c.b16 %v2422, %v2418
  %v3019 = vpack.c.b16 %v2427, %v2423
  %v3020 = vpack.c.b16 %v2428, %v2424
  %v3021 = vpack.c.b16 %v2429, %v2425
  %v3022 = vpack.c.b16 %v2430, %v2426
  %v3023 = vpack.c.b16 %v2435, %v2431
  %v3024 = vpack.c.b16 %v2436, %v2432
  %v3025 = vpack.c.b16 %v2437, %v2433
  %v3026 = vpack.c.b16 %v2438, %v2434
  %vm3615 = vcmask 392192
  %v3617 = vsel %vm3615, %v64, 0
  %3619 = vmatprep.subr.bf16.mxu0 %v2468
  %3620 = vmatpush1.bf16.msra.mxu0 %v2467
  %3621 = vmatprep.subr.bf16.mxu0 %v2464
  %3622 = vmatpush1.bf16.msra.mxu0 %v2463
  %3623 = vmatprep.subr.bf16.mxu0 %v2460
  %3624 = vmatpush1.bf16.msra.mxu0 %v2459
  %3625 = vmatprep.subr.bf16.mxu0 %v2456
  %3626 = vmatpush1.bf16.msra.mxu0 %v2455
  %3627 = vmatprep.subr.bf16.mxu0 %v2452
  %3628 = vmatpush1.bf16.msra.mxu0 %v2451
  %3629 = vmatprep.subr.bf16.mxu0 %v2448
  %3630 = vmatpush1.bf16.msra.mxu0 %v2447
  %3631 = vmatprep.subr.bf16.mxu0 %v2444
  %3632 = vmatpush1.bf16.msra.mxu0 %v2443
  %3633 = vmatprep.subr.bf16.mxu0 %v2440
  %3634 = vmatpush1.bf16.msra.mxu0 %v2439
  %3635 = vmatprep.subr.bf16.mxu0 %v2500
  %3636 = vmatpush2.bf16.msra.mxu0 %v2499
  %3637 = vmatprep.subr.bf16.mxu0 %v2496
  %3638 = vmatpush2.bf16.msra.mxu0 %v2495
  %3639 = vmatprep.subr.bf16.mxu0 %v2492
  %3640 = vmatpush2.bf16.msra.mxu0 %v2491
  %3641 = vmatprep.subr.bf16.mxu0 %v2488
  %3642 = vmatpush2.bf16.msra.mxu0 %v2487
  %3643 = vmatprep.subr.bf16.mxu0 %v2484
  %3644 = vmatpush2.bf16.msra.mxu0 %v2483
  %3645 = vmatprep.subr.bf16.mxu0 %v2480
  %3646 = vmatpush2.bf16.msra.mxu0 %v2479
  %3647 = vmatprep.subr.bf16.mxu0 %v2476
  %3648 = vmatpush2.bf16.msra.mxu0 %v2475
  %3649 = vmatprep.subr.bf16.mxu0 %v2472
  %3650 = vmatpush2.bf16.msra.mxu0 %v2471
  %3651 = vmatprep.mubr.bf16.mxu0 %v47
  %3652 = vmatmul.mubr.bf16.gmra.mxu0 %v46
  %v3653 = vpop.f32.mrf.mxu0
  %v3654 = vadd.f32 %v658, %v3653
  %v3655 = vpop.f32.mrf.mxu0
  %v3656 = vadd.f32 %v662, %v3655
  %v3657 = vpop.f32.mrf.mxu0
  %v3658 = vpop.f32.mrf.mxu0
  %3659 = vdwg.mxu0
  %3660 = vmatprep.subr.bf16.mxu0 %v2532
  %3661 = vmatpush1.bf16.msra.mxu0 %v2531
  %3662 = vmatprep.subr.bf16.mxu0 %v2528
  %3663 = vmatpush1.bf16.msra.mxu0 %v2527
  %3664 = vmatprep.subr.bf16.mxu0 %v2524
  %3665 = vmatpush1.bf16.msra.mxu0 %v2523
  %3666 = vmatprep.subr.bf16.mxu0 %v2520
  %3667 = vmatpush1.bf16.msra.mxu0 %v2519
  %3668 = vmatprep.subr.bf16.mxu0 %v2516
  %3669 = vmatpush1.bf16.msra.mxu0 %v2515
  %3670 = vmatprep.subr.bf16.mxu0 %v2512
  %3671 = vmatpush1.bf16.msra.mxu0 %v2511
  %3672 = vmatprep.subr.bf16.mxu0 %v2508
  %3673 = vmatpush1.bf16.msra.mxu0 %v2507
  %3674 = vmatprep.subr.bf16.mxu0 %v2504
  %3675 = vmatpush1.bf16.msra.mxu0 %v2503
  %3676 = vmatprep.subr.bf16.mxu0 %v2564
  %3677 = vmatpush2.bf16.msra.mxu0 %v2563
  %3678 = vmatprep.subr.bf16.mxu0 %v2560
  %3679 = vmatpush2.bf16.msra.mxu0 %v2559
  %3680 = vmatprep.subr.bf16.mxu0 %v2556
  %3681 = vmatpush2.bf16.msra.mxu0 %v2555
  %3682 = vmatprep.subr.bf16.mxu0 %v2552
  %3683 = vmatpush2.bf16.msra.mxu0 %v2551
  %3684 = vmatprep.subr.bf16.mxu0 %v2548
  %3685 = vmatpush2.bf16.msra.mxu0 %v2547
  %3686 = vmatprep.subr.bf16.mxu0 %v2544
  %3687 = vmatpush2.bf16.msra.mxu0 %v2543
  %3688 = vmatprep.subr.bf16.mxu0 %v2540
  %3689 = vmatpush2.bf16.msra.mxu0 %v2539
  %3690 = vmatprep.subr.bf16.mxu0 %v2536
  %3691 = vmatpush2.bf16.msra.mxu0 %v2535
  %3692 = vmatprep.mubr.bf16.mxu0 %v49
  %3693 = vmatmul.mubr.bf16.gmra.mxu0 %v48
  %v3694 = vpop.f32.mrf.mxu0
  %v3695 = vadd.f32 %v3654, %v3694
  %v3696 = vpop.f32.mrf.mxu0
  %v3697 = vadd.f32 %v3656, %v3696
  %v3698 = vpop.f32.mrf.mxu0
  %v3699 = vpop.f32.mrf.mxu0
  %3700 = vdwg.mxu0
  %3701 = vmatprep.subr.bf16.mxu0 %v2596
  %3702 = vmatpush1.bf16.msra.mxu0 %v2595
  %3703 = vmatprep.subr.bf16.mxu0 %v2592
  %3704 = vmatpush1.bf16.msra.mxu0 %v2591
  %3705 = vmatprep.subr.bf16.mxu0 %v2588
  %3706 = vmatpush1.bf16.msra.mxu0 %v2587
  %3707 = vmatprep.subr.bf16.mxu0 %v2584
  %3708 = vmatpush1.bf16.msra.mxu0 %v2583
  %3709 = vmatprep.subr.bf16.mxu0 %v2580
  %3710 = vmatpush1.bf16.msra.mxu0 %v2579
  %3711 = vmatprep.subr.bf16.mxu0 %v2576
  %3712 = vmatpush1.bf16.msra.mxu0 %v2575
  %3713 = vmatprep.subr.bf16.mxu0 %v2572
  %3714 = vmatpush1.bf16.msra.mxu0 %v2571
  %3715 = vmatprep.subr.bf16.mxu0 %v2568
  %3716 = vmatpush1.bf16.msra.mxu0 %v2567
  %3717 = vmatprep.subr.bf16.mxu0 %v2628
  %3718 = vmatpush2.bf16.msra.mxu0 %v2627
  %3719 = vmatprep.subr.bf16.mxu0 %v2624
  %3720 = vmatpush2.bf16.msra.mxu0 %v2623
  %3721 = vmatprep.subr.bf16.mxu0 %v2620
  %3722 = vmatpush2.bf16.msra.mxu0 %v2619
  %3723 = vmatprep.subr.bf16.mxu0 %v2616
  %3724 = vmatpush2.bf16.msra.mxu0 %v2615
  %3725 = vmatprep.subr.bf16.mxu0 %v2612
  %3726 = vmatpush2.bf16.msra.mxu0 %v2611
  %3727 = vmatprep.subr.bf16.mxu0 %v2608
  %3728 = vmatpush2.bf16.msra.mxu0 %v2607
  %3729 = vmatprep.subr.bf16.mxu0 %v2604
  %3730 = vmatpush2.bf16.msra.mxu0 %v2603
  %3731 = vmatprep.subr.bf16.mxu0 %v2600
  %3732 = vmatpush2.bf16.msra.mxu0 %v2599
  %3733 = vmatprep.mubr.bf16.mxu0 %v51
  %3734 = vmatmul.mubr.bf16.gmra.mxu0 %v50
  %v3735 = vpop.f32.mrf.mxu0
  %v3736 = vadd.f32 %v3695, %v3735
  %v3737 = vpop.f32.mrf.mxu0
  %v3738 = vadd.f32 %v3697, %v3737
  %v3739 = vpop.f32.mrf.mxu0
  %v3740 = vpop.f32.mrf.mxu0
  %3741 = vdwg.mxu0
  %3742 = vmatprep.subr.bf16.mxu0 %v2660
  %3743 = vmatpush1.bf16.msra.mxu0 %v2659
  %3744 = vmatprep.subr.bf16.mxu0 %v2656
  %3745 = vmatpush1.bf16.msra.mxu0 %v2655
  %3746 = vmatprep.subr.bf16.mxu0 %v2652
  %3747 = vmatpush1.bf16.msra.mxu0 %v2651
  %3748 = vmatprep.subr.bf16.mxu0 %v2648
  %3749 = vmatpush1.bf16.msra.mxu0 %v2647
  %3750 = vmatprep.subr.bf16.mxu0 %v2644
  %3751 = vmatpush1.bf16.msra.mxu0 %v2643
  %3752 = vmatprep.subr.bf16.mxu0 %v2640
  %3753 = vmatpush1.bf16.msra.mxu0 %v2639
  %3754 = vmatprep.subr.bf16.mxu0 %v2636
  %3755 = vmatpush1.bf16.msra.mxu0 %v2635
  %3756 = vmatprep.subr.bf16.mxu0 %v2632
  %3757 = vmatpush1.bf16.msra.mxu0 %v2631
  %3758 = vmatprep.subr.bf16.mxu0 %v2692
  %3759 = vmatpush2.bf16.msra.mxu0 %v2691
  %3760 = vmatprep.subr.bf16.mxu0 %v2688
  %3761 = vmatpush2.bf16.msra.mxu0 %v2687
  %3762 = vmatprep.subr.bf16.mxu0 %v2684
  %3763 = vmatpush2.bf16.msra.mxu0 %v2683
  %3764 = vmatprep.subr.bf16.mxu0 %v2680
  %3765 = vmatpush2.bf16.msra.mxu0 %v2679
  %3766 = vmatprep.subr.bf16.mxu0 %v2676
  %3767 = vmatpush2.bf16.msra.mxu0 %v2675
  %3768 = vmatprep.subr.bf16.mxu0 %v2672
  %3769 = vmatpush2.bf16.msra.mxu0 %v2671
  %3770 = vmatprep.subr.bf16.mxu0 %v2668
  %3771 = vmatpush2.bf16.msra.mxu0 %v2667
  %3772 = vmatprep.subr.bf16.mxu0 %v2664
  %3773 = vmatpush2.bf16.msra.mxu0 %v2663
  %3774 = vmatprep.mubr.bf16.mxu0 %v53
  %3775 = vmatmul.mubr.bf16.gmra.mxu0 %v52
  %v3776 = vpop.f32.mrf.mxu0
  %v3777 = vadd.f32 %v3736, %v3776
  %v3778 = vpop.f32.mrf.mxu0
  %v3779 = vadd.f32 %v3738, %v3778
  %v3780 = vpop.f32.mrf.mxu0
  %v3781 = vpop.f32.mrf.mxu0
  %3782 = vdwg.mxu0
  %3783 = vmatprep.subr.bf16.mxu0 %v2724
  %3784 = vmatpush1.bf16.msra.mxu0 %v2723
  %3785 = vmatprep.subr.bf16.mxu0 %v2720
  %3786 = vmatpush1.bf16.msra.mxu0 %v2719
  %3787 = vmatprep.subr.bf16.mxu0 %v2716
  %3788 = vmatpush1.bf16.msra.mxu0 %v2715
  %3789 = vmatprep.subr.bf16.mxu0 %v2712
  %3790 = vmatpush1.bf16.msra.mxu0 %v2711
  %3791 = vmatprep.subr.bf16.mxu0 %v2708
  %3792 = vmatpush1.bf16.msra.mxu0 %v2707
  %3793 = vmatprep.subr.bf16.mxu0 %v2704
  %3794 = vmatpush1.bf16.msra.mxu0 %v2703
  %3795 = vmatprep.subr.bf16.mxu0 %v2700
  %3796 = vmatpush1.bf16.msra.mxu0 %v2699
  %3797 = vmatprep.subr.bf16.mxu0 %v2696
  %3798 = vmatpush1.bf16.msra.mxu0 %v2695
  %3799 = vmatprep.subr.bf16.mxu0 %v2756
  %3800 = vmatpush2.bf16.msra.mxu0 %v2755
  %3801 = vmatprep.subr.bf16.mxu0 %v2752
  %3802 = vmatpush2.bf16.msra.mxu0 %v2751
  %3803 = vmatprep.subr.bf16.mxu0 %v2748
  %3804 = vmatpush2.bf16.msra.mxu0 %v2747
  %3805 = vmatprep.subr.bf16.mxu0 %v2744
  %3806 = vmatpush2.bf16.msra.mxu0 %v2743
  %3807 = vmatprep.subr.bf16.mxu0 %v2740
  %3808 = vmatpush2.bf16.msra.mxu0 %v2739
  %3809 = vmatprep.subr.bf16.mxu0 %v2736
  %3810 = vmatpush2.bf16.msra.mxu0 %v2735
  %3811 = vmatprep.subr.bf16.mxu0 %v2732
  %3812 = vmatpush2.bf16.msra.mxu0 %v2731
  %3813 = vmatprep.subr.bf16.mxu0 %v2728
  %3814 = vmatpush2.bf16.msra.mxu0 %v2727
  %3815 = vmatprep.mubr.bf16.mxu0 %v55
  %3816 = vmatmul.mubr.bf16.gmra.mxu0 %v54
  %v3817 = vpop.f32.mrf.mxu0
  %v3818 = vadd.f32 %v3777, %v3817
  %v3819 = vpop.f32.mrf.mxu0
  %v3820 = vadd.f32 %v3779, %v3819
  %v3821 = vpop.f32.mrf.mxu0
  %v3822 = vpop.f32.mrf.mxu0
  %3823 = vdwg.mxu0
  %3824 = vmatprep.subr.bf16.mxu0 %v2788
  %3825 = vmatpush1.bf16.msra.mxu0 %v2787
  %3826 = vmatprep.subr.bf16.mxu0 %v2784
  %3827 = vmatpush1.bf16.msra.mxu0 %v2783
  %3828 = vmatprep.subr.bf16.mxu0 %v2780
  %3829 = vmatpush1.bf16.msra.mxu0 %v2779
  %3830 = vmatprep.subr.bf16.mxu0 %v2776
  %3831 = vmatpush1.bf16.msra.mxu0 %v2775
  %3832 = vmatprep.subr.bf16.mxu0 %v2772
  %3833 = vmatpush1.bf16.msra.mxu0 %v2771
  %3834 = vmatprep.subr.bf16.mxu0 %v2768
  %3835 = vmatpush1.bf16.msra.mxu0 %v2767
  %3836 = vmatprep.subr.bf16.mxu0 %v2764
  %3837 = vmatpush1.bf16.msra.mxu0 %v2763
  %3838 = vmatprep.subr.bf16.mxu0 %v2760
  %3839 = vmatpush1.bf16.msra.mxu0 %v2759
  %3840 = vmatprep.subr.bf16.mxu0 %v2820
  %3841 = vmatpush2.bf16.msra.mxu0 %v2819
  %3842 = vmatprep.subr.bf16.mxu0 %v2816
  %3843 = vmatpush2.bf16.msra.mxu0 %v2815
  %3844 = vmatprep.subr.bf16.mxu0 %v2812
  %3845 = vmatpush2.bf16.msra.mxu0 %v2811
  %3846 = vmatprep.subr.bf16.mxu0 %v2808
  %3847 = vmatpush2.bf16.msra.mxu0 %v2807
  %3848 = vmatprep.subr.bf16.mxu0 %v2804
  %3849 = vmatpush2.bf16.msra.mxu0 %v2803
  %3850 = vmatprep.subr.bf16.mxu0 %v2800
  %3851 = vmatpush2.bf16.msra.mxu0 %v2799
  %3852 = vmatprep.subr.bf16.mxu0 %v2796
  %3853 = vmatpush2.bf16.msra.mxu0 %v2795
  %3854 = vmatprep.subr.bf16.mxu0 %v2792
  %3855 = vmatpush2.bf16.msra.mxu0 %v2791
  %3856 = vmatprep.mubr.bf16.mxu0 %v57
  %3857 = vmatmul.mubr.bf16.gmra.mxu0 %v56
  %v3858 = vpop.f32.mrf.mxu0
  %v3859 = vadd.f32 %v3818, %v3858
  %v3860 = vpop.f32.mrf.mxu0
  %v3861 = vadd.f32 %v3820, %v3860
  %v3862 = vpop.f32.mrf.mxu0
  %v3863 = vpop.f32.mrf.mxu0
  %3864 = vdwg.mxu0
  %3865 = vmatprep.subr.bf16.mxu0 %v2852
  %3866 = vmatpush1.bf16.msra.mxu0 %v2851
  %3867 = vmatprep.subr.bf16.mxu0 %v2848
  %3868 = vmatpush1.bf16.msra.mxu0 %v2847
  %3869 = vmatprep.subr.bf16.mxu0 %v2844
  %3870 = vmatpush1.bf16.msra.mxu0 %v2843
  %3871 = vmatprep.subr.bf16.mxu0 %v2840
  %3872 = vmatpush1.bf16.msra.mxu0 %v2839
  %3873 = vmatprep.subr.bf16.mxu0 %v2836
  %3874 = vmatpush1.bf16.msra.mxu0 %v2835
  %3875 = vmatprep.subr.bf16.mxu0 %v2832
  %3876 = vmatpush1.bf16.msra.mxu0 %v2831
  %3877 = vmatprep.subr.bf16.mxu0 %v2828
  %3878 = vmatpush1.bf16.msra.mxu0 %v2827
  %3879 = vmatprep.subr.bf16.mxu0 %v2824
  %3880 = vmatpush1.bf16.msra.mxu0 %v2823
  %3881 = vmatprep.subr.bf16.mxu0 %v2884
  %3882 = vmatpush2.bf16.msra.mxu0 %v2883
  %3883 = vmatprep.subr.bf16.mxu0 %v2880
  %3884 = vmatpush2.bf16.msra.mxu0 %v2879
  %3885 = vmatprep.subr.bf16.mxu0 %v2876
  %3886 = vmatpush2.bf16.msra.mxu0 %v2875
  %3887 = vmatprep.subr.bf16.mxu0 %v2872
  %3888 = vmatpush2.bf16.msra.mxu0 %v2871
  %3889 = vmatprep.subr.bf16.mxu0 %v2868
  %3890 = vmatpush2.bf16.msra.mxu0 %v2867
  %3891 = vmatprep.subr.bf16.mxu0 %v2864
  %3892 = vmatpush2.bf16.msra.mxu0 %v2863
  %3893 = vmatprep.subr.bf16.mxu0 %v2860
  %3894 = vmatpush2.bf16.msra.mxu0 %v2859
  %3895 = vmatprep.subr.bf16.mxu0 %v2856
  %3896 = vmatpush2.bf16.msra.mxu0 %v2855
  %3897 = vmatprep.mubr.bf16.mxu0 %v59
  %3898 = vmatmul.mubr.bf16.gmra.mxu0 %v58
  %v3899 = vpop.f32.mrf.mxu0
  %v3900 = vadd.f32 %v3859, %v3899
  %v3901 = vpop.f32.mrf.mxu0
  %v3902 = vadd.f32 %v3861, %v3901
  %v3903 = vpop.f32.mrf.mxu0
  %v3904 = vpop.f32.mrf.mxu0
  %3905 = vdwg.mxu0
  %3906 = vmatprep.subr.bf16.mxu0 %v2916
  %3907 = vmatpush1.bf16.msra.mxu0 %v2915
  %3908 = vmatprep.subr.bf16.mxu0 %v2912
  %3909 = vmatpush1.bf16.msra.mxu0 %v2911
  %3910 = vmatprep.subr.bf16.mxu0 %v2908
  %3911 = vmatpush1.bf16.msra.mxu0 %v2907
  %3912 = vmatprep.subr.bf16.mxu0 %v2904
  %3913 = vmatpush1.bf16.msra.mxu0 %v2903
  %3914 = vmatprep.subr.bf16.mxu0 %v2900
  %3915 = vmatpush1.bf16.msra.mxu0 %v2899
  %3916 = vmatprep.subr.bf16.mxu0 %v2896
  %3917 = vmatpush1.bf16.msra.mxu0 %v2895
  %3918 = vmatprep.subr.bf16.mxu0 %v2892
  %3919 = vmatpush1.bf16.msra.mxu0 %v2891
  %3920 = vmatprep.subr.bf16.mxu0 %v2888
  %3921 = vmatpush1.bf16.msra.mxu0 %v2887
  %3922 = vmatprep.subr.bf16.mxu0 %v2948
  %3923 = vmatpush2.bf16.msra.mxu0 %v2947
  %3924 = vmatprep.subr.bf16.mxu0 %v2944
  %3925 = vmatpush2.bf16.msra.mxu0 %v2943
  %3926 = vmatprep.subr.bf16.mxu0 %v2940
  %3927 = vmatpush2.bf16.msra.mxu0 %v2939
  %3928 = vmatprep.subr.bf16.mxu0 %v2936
  %3929 = vmatpush2.bf16.msra.mxu0 %v2935
  %3930 = vmatprep.subr.bf16.mxu0 %v2932
  %3931 = vmatpush2.bf16.msra.mxu0 %v2931
  %3932 = vmatprep.subr.bf16.mxu0 %v2928
  %3933 = vmatpush2.bf16.msra.mxu0 %v2927
  %3934 = vmatprep.subr.bf16.mxu0 %v2924
  %3935 = vmatpush2.bf16.msra.mxu0 %v2923
  %3936 = vmatprep.subr.bf16.mxu0 %v2920
  %3937 = vmatpush2.bf16.msra.mxu0 %v2919
  %3938 = vmatprep.mubr.bf16.mxu0 %v61
  %3939 = vmatmul.mubr.bf16.gmra.mxu0 %v60
  %v3940 = vpop.f32.mrf.mxu0
  %v3941 = vadd.f32 %v3900, %v3940
  %v3942 = vpop.f32.mrf.mxu0
  %v3943 = vadd.f32 %v3902, %v3942
  %v3944 = vpop.f32.mrf.mxu0
  %v3945 = vpop.f32.mrf.mxu0
  %3946 = vdwg.mxu0
  %3947 = vmatprep.subr.bf16.mxu0 %v2980
  %3948 = vmatpush1.bf16.msra.mxu0 %v2979
  %3949 = vmatprep.subr.bf16.mxu0 %v2976
  %3950 = vmatpush1.bf16.msra.mxu0 %v2975
  %3951 = vmatprep.subr.bf16.mxu0 %v2972
  %3952 = vmatpush1.bf16.msra.mxu0 %v2971
  %3953 = vmatprep.subr.bf16.mxu0 %v2968
  %3954 = vmatpush1.bf16.msra.mxu0 %v2967
  %3955 = vmatprep.subr.bf16.mxu0 %v2964
  %3956 = vmatpush1.bf16.msra.mxu0 %v2963
  %3957 = vmatprep.subr.bf16.mxu0 %v2960
  %3958 = vmatpush1.bf16.msra.mxu0 %v2959
  %3959 = vmatprep.subr.bf16.mxu0 %v2956
  %3960 = vmatpush1.bf16.msra.mxu0 %v2955
  %3961 = vmatprep.subr.bf16.mxu0 %v2952
  %3962 = vmatpush1.bf16.msra.mxu0 %v2951
  %3963 = vmatprep.subr.bf16.mxu0 %v3012
  %3964 = vmatpush2.bf16.msra.mxu0 %v3011
  %3965 = vmatprep.subr.bf16.mxu0 %v3008
  %3966 = vmatpush2.bf16.msra.mxu0 %v3007
  %3967 = vmatprep.subr.bf16.mxu0 %v3004
  %3968 = vmatpush2.bf16.msra.mxu0 %v3003
  %3969 = vmatprep.subr.bf16.mxu0 %v3000
  %3970 = vmatpush2.bf16.msra.mxu0 %v2999
  %3971 = vmatprep.subr.bf16.mxu0 %v2996
  %3972 = vmatpush2.bf16.msra.mxu0 %v2995
  %3973 = vmatprep.subr.bf16.mxu0 %v2992
  %3974 = vmatpush2.bf16.msra.mxu0 %v2991
  %3975 = vmatprep.subr.bf16.mxu0 %v2988
  %3976 = vmatpush2.bf16.msra.mxu0 %v2987
  %3977 = vmatprep.subr.bf16.mxu0 %v2984
  %3978 = vmatpush2.bf16.msra.mxu0 %v2983
  %3979 = vmatprep.mubr.bf16.mxu0 %v63
  %3980 = vmatmul.mubr.bf16.gmra.mxu0 %v62
  %v3981 = vpop.f32.mrf.mxu0
  %v3982 = vadd.f32 %v3941, %v3981
  %v3983 = vpop.f32.mrf.mxu0
  %v3984 = vadd.f32 %v3943, %v3983
  %v3985 = vpop.f32.mrf.mxu0
  %v3986 = vpop.f32.mrf.mxu0
  %3987 = vdwg.mxu0
  %3988 = vmatprep.subr.bf16.mxu0 0
  %3989 = vmatpush1.bf16.msra.mxu0 0
  %3990 = vmatprep.subr.bf16.mxu0 0
  %3991 = vmatpush1.bf16.msra.mxu0 0
  %3992 = vmatprep.subr.bf16.mxu0 0
  %3993 = vmatpush1.bf16.msra.mxu0 0
  %3994 = vmatprep.subr.bf16.mxu0 0
  %3995 = vmatpush1.bf16.msra.mxu0 0
  %3996 = vmatprep.subr.bf16.mxu0 0
  %3997 = vmatpush1.bf16.msra.mxu0 0
  %3998 = vmatprep.subr.bf16.mxu0 %v3024
  %3999 = vmatpush1.bf16.msra.mxu0 %v3023
  %4000 = vmatprep.subr.bf16.mxu0 %v3020
  %4001 = vmatpush1.bf16.msra.mxu0 %v3019
  %4002 = vmatprep.subr.bf16.mxu0 %v3016
  %4003 = vmatpush1.bf16.msra.mxu0 %v3015
  %4004 = vmatprep.subr.bf16.mxu0 0
  %4005 = vmatpush2.bf16.msra.mxu0 0
  %4006 = vmatprep.subr.bf16.mxu0 0
  %4007 = vmatpush2.bf16.msra.mxu0 0
  %4008 = vmatprep.subr.bf16.mxu0 0
  %4009 = vmatpush2.bf16.msra.mxu0 0
  %4010 = vmatprep.subr.bf16.mxu0 0
  %4011 = vmatpush2.bf16.msra.mxu0 0
  %4012 = vmatprep.subr.bf16.mxu0 0
  %4013 = vmatpush2.bf16.msra.mxu0 0
  %4014 = vmatprep.subr.bf16.mxu0 0
  %4015 = vmatpush2.bf16.msra.mxu0 0
  %4016 = vmatprep.subr.bf16.mxu0 0
  %4017 = vmatpush2.bf16.msra.mxu0 0
  %4018 = vmatprep.subr.bf16.mxu0 0
  %4019 = vmatpush2.bf16.msra.mxu0 0
  %4020 = vmatprep.mubr.bf16.mxu0 0
  %4021 = vmatmul.mubr.bf16.gmra.mxu0 %v3617
  %v4022 = vpop.f32.mrf.mxu0
  %v4023 = vadd.f32 %v3982, %v4022
  %v4024 = vpop.f32.mrf.mxu0
  %v4025 = vadd.f32 %v3984, %v4024
  %v4026 = vpop.f32.mrf.mxu0
  %v4027 = vpop.f32.mrf.mxu0
  %4028 = vdwg.mxu0
  %4029 = vmatprep.subr.bf16.mxu0 %v2470
  %4030 = vmatpush1.bf16.msra.mxu0 %v2469
  %4031 = vmatprep.subr.bf16.mxu0 %v2466
  %4032 = vmatpush1.bf16.msra.mxu0 %v2465
  %4033 = vmatprep.subr.bf16.mxu0 %v2462
  %4034 = vmatpush1.bf16.msra.mxu0 %v2461
  %4035 = vmatprep.subr.bf16.mxu0 %v2458
  %4036 = vmatpush1.bf16.msra.mxu0 %v2457
  %4037 = vmatprep.subr.bf16.mxu0 %v2454
  %4038 = vmatpush1.bf16.msra.mxu0 %v2453
  %4039 = vmatprep.subr.bf16.mxu0 %v2450
  %4040 = vmatpush1.bf16.msra.mxu0 %v2449
  %4041 = vmatprep.subr.bf16.mxu0 %v2446
  %4042 = vmatpush1.bf16.msra.mxu0 %v2445
  %4043 = vmatprep.subr.bf16.mxu0 %v2442
  %4044 = vmatpush1.bf16.msra.mxu0 %v2441
  %4045 = vmatprep.subr.bf16.mxu0 %v2502
  %4046 = vmatpush2.bf16.msra.mxu0 %v2501
  %4047 = vmatprep.subr.bf16.mxu0 %v2498
  %4048 = vmatpush2.bf16.msra.mxu0 %v2497
  %4049 = vmatprep.subr.bf16.mxu0 %v2494
  %4050 = vmatpush2.bf16.msra.mxu0 %v2493
  %4051 = vmatprep.subr.bf16.mxu0 %v2490
  %4052 = vmatpush2.bf16.msra.mxu0 %v2489
  %4053 = vmatprep.subr.bf16.mxu0 %v2486
  %4054 = vmatpush2.bf16.msra.mxu0 %v2485
  %4055 = vmatprep.subr.bf16.mxu0 %v2482
  %4056 = vmatpush2.bf16.msra.mxu0 %v2481
  %4057 = vmatprep.subr.bf16.mxu0 %v2478
  %4058 = vmatpush2.bf16.msra.mxu0 %v2477
  %4059 = vmatprep.subr.bf16.mxu0 %v2474
  %4060 = vmatpush2.bf16.msra.mxu0 %v2473
  %4061 = vmatprep.mubr.bf16.mxu0 %v47
  %4062 = vmatmul.mubr.bf16.gmra.mxu0 %v46
  %v4063 = vpop.f32.mrf.mxu0
  %v4064 = vadd.f32 %v666, %v4063
  %v4065 = vpop.f32.mrf.mxu0
  %v4066 = vadd.f32 %v670, %v4065
  %v4067 = vpop.f32.mrf.mxu0
  %v4068 = vpop.f32.mrf.mxu0
  %4069 = vdwg.mxu0
  %4070 = vmatprep.subr.bf16.mxu0 %v2534
  %4071 = vmatpush1.bf16.msra.mxu0 %v2533
  %4072 = vmatprep.subr.bf16.mxu0 %v2530
  %4073 = vmatpush1.bf16.msra.mxu0 %v2529
  %4074 = vmatprep.subr.bf16.mxu0 %v2526
  %4075 = vmatpush1.bf16.msra.mxu0 %v2525
  %4076 = vmatprep.subr.bf16.mxu0 %v2522
  %4077 = vmatpush1.bf16.msra.mxu0 %v2521
  %4078 = vmatprep.subr.bf16.mxu0 %v2518
  %4079 = vmatpush1.bf16.msra.mxu0 %v2517
  %4080 = vmatprep.subr.bf16.mxu0 %v2514
  %4081 = vmatpush1.bf16.msra.mxu0 %v2513
  %4082 = vmatprep.subr.bf16.mxu0 %v2510
  %4083 = vmatpush1.bf16.msra.mxu0 %v2509
  %4084 = vmatprep.subr.bf16.mxu0 %v2506
  %4085 = vmatpush1.bf16.msra.mxu0 %v2505
  %4086 = vmatprep.subr.bf16.mxu0 %v2566
  %4087 = vmatpush2.bf16.msra.mxu0 %v2565
  %4088 = vmatprep.subr.bf16.mxu0 %v2562
  %4089 = vmatpush2.bf16.msra.mxu0 %v2561
  %4090 = vmatprep.subr.bf16.mxu0 %v2558
  %4091 = vmatpush2.bf16.msra.mxu0 %v2557
  %4092 = vmatprep.subr.bf16.mxu0 %v2554
  %4093 = vmatpush2.bf16.msra.mxu0 %v2553
  %4094 = vmatprep.subr.bf16.mxu0 %v2550
  %4095 = vmatpush2.bf16.msra.mxu0 %v2549
  %4096 = vmatprep.subr.bf16.mxu0 %v2546
  %4097 = vmatpush2.bf16.msra.mxu0 %v2545
  %4098 = vmatprep.subr.bf16.mxu0 %v2542
  %4099 = vmatpush2.bf16.msra.mxu0 %v2541
  %4100 = vmatprep.subr.bf16.mxu0 %v2538
  %4101 = vmatpush2.bf16.msra.mxu0 %v2537
  %4102 = vmatprep.mubr.bf16.mxu0 %v49
  %4103 = vmatmul.mubr.bf16.gmra.mxu0 %v48
  %v4104 = vpop.f32.mrf.mxu0
  %v4105 = vadd.f32 %v4064, %v4104
  %v4106 = vpop.f32.mrf.mxu0
  %v4107 = vadd.f32 %v4066, %v4106
  %v4108 = vpop.f32.mrf.mxu0
  %v4109 = vpop.f32.mrf.mxu0
  %4110 = vdwg.mxu0
  %4111 = vmatprep.subr.bf16.mxu0 %v2598
  %4112 = vmatpush1.bf16.msra.mxu0 %v2597
  %4113 = vmatprep.subr.bf16.mxu0 %v2594
  %4114 = vmatpush1.bf16.msra.mxu0 %v2593
  %4115 = vmatprep.subr.bf16.mxu0 %v2590
  %4116 = vmatpush1.bf16.msra.mxu0 %v2589
  %4117 = vmatprep.subr.bf16.mxu0 %v2586
  %4118 = vmatpush1.bf16.msra.mxu0 %v2585
  %4119 = vmatprep.subr.bf16.mxu0 %v2582
  %4120 = vmatpush1.bf16.msra.mxu0 %v2581
  %4121 = vmatprep.subr.bf16.mxu0 %v2578
  %4122 = vmatpush1.bf16.msra.mxu0 %v2577
  %4123 = vmatprep.subr.bf16.mxu0 %v2574
  %4124 = vmatpush1.bf16.msra.mxu0 %v2573
  %4125 = vmatprep.subr.bf16.mxu0 %v2570
  %4126 = vmatpush1.bf16.msra.mxu0 %v2569
  %4127 = vmatprep.subr.bf16.mxu0 %v2630
  %4128 = vmatpush2.bf16.msra.mxu0 %v2629
  %4129 = vmatprep.subr.bf16.mxu0 %v2626
  %4130 = vmatpush2.bf16.msra.mxu0 %v2625
  %4131 = vmatprep.subr.bf16.mxu0 %v2622
  %4132 = vmatpush2.bf16.msra.mxu0 %v2621
  %4133 = vmatprep.subr.bf16.mxu0 %v2618
  %4134 = vmatpush2.bf16.msra.mxu0 %v2617
  %4135 = vmatprep.subr.bf16.mxu0 %v2614
  %4136 = vmatpush2.bf16.msra.mxu0 %v2613
  %4137 = vmatprep.subr.bf16.mxu0 %v2610
  %4138 = vmatpush2.bf16.msra.mxu0 %v2609
  %4139 = vmatprep.subr.bf16.mxu0 %v2606
  %4140 = vmatpush2.bf16.msra.mxu0 %v2605
  %4141 = vmatprep.subr.bf16.mxu0 %v2602
  %4142 = vmatpush2.bf16.msra.mxu0 %v2601
  %4143 = vmatprep.mubr.bf16.mxu0 %v51
  %4144 = vmatmul.mubr.bf16.gmra.mxu0 %v50
  %v4145 = vpop.f32.mrf.mxu0
  %v4146 = vadd.f32 %v4105, %v4145
  %v4147 = vpop.f32.mrf.mxu0
  %v4148 = vadd.f32 %v4107, %v4147
  %v4149 = vpop.f32.mrf.mxu0
  %v4150 = vpop.f32.mrf.mxu0
  %4151 = vdwg.mxu0
  %4152 = vmatprep.subr.bf16.mxu0 %v2662
  %4153 = vmatpush1.bf16.msra.mxu0 %v2661
  %4154 = vmatprep.subr.bf16.mxu0 %v2658
  %4155 = vmatpush1.bf16.msra.mxu0 %v2657
  %4156 = vmatprep.subr.bf16.mxu0 %v2654
  %4157 = vmatpush1.bf16.msra.mxu0 %v2653
  %4158 = vmatprep.subr.bf16.mxu0 %v2650
  %4159 = vmatpush1.bf16.msra.mxu0 %v2649
  %4160 = vmatprep.subr.bf16.mxu0 %v2646
  %4161 = vmatpush1.bf16.msra.mxu0 %v2645
  %4162 = vmatprep.subr.bf16.mxu0 %v2642
  %4163 = vmatpush1.bf16.msra.mxu0 %v2641
  %4164 = vmatprep.subr.bf16.mxu0 %v2638
  %4165 = vmatpush1.bf16.msra.mxu0 %v2637
  %4166 = vmatprep.subr.bf16.mxu0 %v2634
  %4167 = vmatpush1.bf16.msra.mxu0 %v2633
  %4168 = vmatprep.subr.bf16.mxu0 %v2694
  %4169 = vmatpush2.bf16.msra.mxu0 %v2693
  %4170 = vmatprep.subr.bf16.mxu0 %v2690
  %4171 = vmatpush2.bf16.msra.mxu0 %v2689
  %4172 = vmatprep.subr.bf16.mxu0 %v2686
  %4173 = vmatpush2.bf16.msra.mxu0 %v2685
  %4174 = vmatprep.subr.bf16.mxu0 %v2682
  %4175 = vmatpush2.bf16.msra.mxu0 %v2681
  %4176 = vmatprep.subr.bf16.mxu0 %v2678
  %4177 = vmatpush2.bf16.msra.mxu0 %v2677
  %4178 = vmatprep.subr.bf16.mxu0 %v2674
  %4179 = vmatpush2.bf16.msra.mxu0 %v2673
  %4180 = vmatprep.subr.bf16.mxu0 %v2670
  %4181 = vmatpush2.bf16.msra.mxu0 %v2669
  %4182 = vmatprep.subr.bf16.mxu0 %v2666
  %4183 = vmatpush2.bf16.msra.mxu0 %v2665
  %4184 = vmatprep.mubr.bf16.mxu0 %v53
  %4185 = vmatmul.mubr.bf16.gmra.mxu0 %v52
  %v4186 = vpop.f32.mrf.mxu0
  %v4187 = vadd.f32 %v4146, %v4186
  %v4188 = vpop.f32.mrf.mxu0
  %v4189 = vadd.f32 %v4148, %v4188
  %v4190 = vpop.f32.mrf.mxu0
  %v4191 = vpop.f32.mrf.mxu0
  %4192 = vdwg.mxu0
  %4193 = vmatprep.subr.bf16.mxu0 %v2726
  %4194 = vmatpush1.bf16.msra.mxu0 %v2725
  %4195 = vmatprep.subr.bf16.mxu0 %v2722
  %4196 = vmatpush1.bf16.msra.mxu0 %v2721
  %4197 = vmatprep.subr.bf16.mxu0 %v2718
  %4198 = vmatpush1.bf16.msra.mxu0 %v2717
  %4199 = vmatprep.subr.bf16.mxu0 %v2714
  %4200 = vmatpush1.bf16.msra.mxu0 %v2713
  %4201 = vmatprep.subr.bf16.mxu0 %v2710
  %4202 = vmatpush1.bf16.msra.mxu0 %v2709
  %4203 = vmatprep.subr.bf16.mxu0 %v2706
  %4204 = vmatpush1.bf16.msra.mxu0 %v2705
  %4205 = vmatprep.subr.bf16.mxu0 %v2702
  %4206 = vmatpush1.bf16.msra.mxu0 %v2701
  %4207 = vmatprep.subr.bf16.mxu0 %v2698
  %4208 = vmatpush1.bf16.msra.mxu0 %v2697
  %4209 = vmatprep.subr.bf16.mxu0 %v2758
  %4210 = vmatpush2.bf16.msra.mxu0 %v2757
  %4211 = vmatprep.subr.bf16.mxu0 %v2754
  %4212 = vmatpush2.bf16.msra.mxu0 %v2753
  %4213 = vmatprep.subr.bf16.mxu0 %v2750
  %4214 = vmatpush2.bf16.msra.mxu0 %v2749
  %4215 = vmatprep.subr.bf16.mxu0 %v2746
  %4216 = vmatpush2.bf16.msra.mxu0 %v2745
  %4217 = vmatprep.subr.bf16.mxu0 %v2742
  %4218 = vmatpush2.bf16.msra.mxu0 %v2741
  %4219 = vmatprep.subr.bf16.mxu0 %v2738
  %4220 = vmatpush2.bf16.msra.mxu0 %v2737
  %4221 = vmatprep.subr.bf16.mxu0 %v2734
  %4222 = vmatpush2.bf16.msra.mxu0 %v2733
  %4223 = vmatprep.subr.bf16.mxu0 %v2730
  %4224 = vmatpush2.bf16.msra.mxu0 %v2729
  %4225 = vmatprep.mubr.bf16.mxu0 %v55
  %4226 = vmatmul.mubr.bf16.gmra.mxu0 %v54
  %v4227 = vpop.f32.mrf.mxu0
  %v4228 = vadd.f32 %v4187, %v4227
  %v4229 = vpop.f32.mrf.mxu0
  %v4230 = vadd.f32 %v4189, %v4229
  %v4231 = vpop.f32.mrf.mxu0
  %v4232 = vpop.f32.mrf.mxu0
  %4233 = vdwg.mxu0
  %4234 = vmatprep.subr.bf16.mxu0 %v2790
  %4235 = vmatpush1.bf16.msra.mxu0 %v2789
  %4236 = vmatprep.subr.bf16.mxu0 %v2786
  %4237 = vmatpush1.bf16.msra.mxu0 %v2785
  %4238 = vmatprep.subr.bf16.mxu0 %v2782
  %4239 = vmatpush1.bf16.msra.mxu0 %v2781
  %4240 = vmatprep.subr.bf16.mxu0 %v2778
  %4241 = vmatpush1.bf16.msra.mxu0 %v2777
  %4242 = vmatprep.subr.bf16.mxu0 %v2774
  %4243 = vmatpush1.bf16.msra.mxu0 %v2773
  %4244 = vmatprep.subr.bf16.mxu0 %v2770
  %4245 = vmatpush1.bf16.msra.mxu0 %v2769
  %4246 = vmatprep.subr.bf16.mxu0 %v2766
  %4247 = vmatpush1.bf16.msra.mxu0 %v2765
  %4248 = vmatprep.subr.bf16.mxu0 %v2762
  %4249 = vmatpush1.bf16.msra.mxu0 %v2761
  %4250 = vmatprep.subr.bf16.mxu0 %v2822
  %4251 = vmatpush2.bf16.msra.mxu0 %v2821
  %4252 = vmatprep.subr.bf16.mxu0 %v2818
  %4253 = vmatpush2.bf16.msra.mxu0 %v2817
  %4254 = vmatprep.subr.bf16.mxu0 %v2814
  %4255 = vmatpush2.bf16.msra.mxu0 %v2813
  %4256 = vmatprep.subr.bf16.mxu0 %v2810
  %4257 = vmatpush2.bf16.msra.mxu0 %v2809
  %4258 = vmatprep.subr.bf16.mxu0 %v2806
  %4259 = vmatpush2.bf16.msra.mxu0 %v2805
  %4260 = vmatprep.subr.bf16.mxu0 %v2802
  %4261 = vmatpush2.bf16.msra.mxu0 %v2801
  %4262 = vmatprep.subr.bf16.mxu0 %v2798
  %4263 = vmatpush2.bf16.msra.mxu0 %v2797
  %4264 = vmatprep.subr.bf16.mxu0 %v2794
  %4265 = vmatpush2.bf16.msra.mxu0 %v2793
  %4266 = vmatprep.mubr.bf16.mxu0 %v57
  %4267 = vmatmul.mubr.bf16.gmra.mxu0 %v56
  %v4268 = vpop.f32.mrf.mxu0
  %v4269 = vadd.f32 %v4228, %v4268
  %v4270 = vpop.f32.mrf.mxu0
  %v4271 = vadd.f32 %v4230, %v4270
  %v4272 = vpop.f32.mrf.mxu0
  %v4273 = vpop.f32.mrf.mxu0
  %4274 = vdwg.mxu0
  %4275 = vmatprep.subr.bf16.mxu0 %v2854
  %4276 = vmatpush1.bf16.msra.mxu0 %v2853
  %4277 = vmatprep.subr.bf16.mxu0 %v2850
  %4278 = vmatpush1.bf16.msra.mxu0 %v2849
  %4279 = vmatprep.subr.bf16.mxu0 %v2846
  %4280 = vmatpush1.bf16.msra.mxu0 %v2845
  %4281 = vmatprep.subr.bf16.mxu0 %v2842
  %4282 = vmatpush1.bf16.msra.mxu0 %v2841
  %4283 = vmatprep.subr.bf16.mxu0 %v2838
  %4284 = vmatpush1.bf16.msra.mxu0 %v2837
  %4285 = vmatprep.subr.bf16.mxu0 %v2834
  %4286 = vmatpush1.bf16.msra.mxu0 %v2833
  %4287 = vmatprep.subr.bf16.mxu0 %v2830
  %4288 = vmatpush1.bf16.msra.mxu0 %v2829
  %4289 = vmatprep.subr.bf16.mxu0 %v2826
  %4290 = vmatpush1.bf16.msra.mxu0 %v2825
  %4291 = vmatprep.subr.bf16.mxu0 %v2886
  %4292 = vmatpush2.bf16.msra.mxu0 %v2885
  %4293 = vmatprep.subr.bf16.mxu0 %v2882
  %4294 = vmatpush2.bf16.msra.mxu0 %v2881
  %4295 = vmatprep.subr.bf16.mxu0 %v2878
  %4296 = vmatpush2.bf16.msra.mxu0 %v2877
  %4297 = vmatprep.subr.bf16.mxu0 %v2874
  %4298 = vmatpush2.bf16.msra.mxu0 %v2873
  %4299 = vmatprep.subr.bf16.mxu0 %v2870
  %4300 = vmatpush2.bf16.msra.mxu0 %v2869
  %4301 = vmatprep.subr.bf16.mxu0 %v2866
  %4302 = vmatpush2.bf16.msra.mxu0 %v2865
  %4303 = vmatprep.subr.bf16.mxu0 %v2862
  %4304 = vmatpush2.bf16.msra.mxu0 %v2861
  %4305 = vmatprep.subr.bf16.mxu0 %v2858
  %4306 = vmatpush2.bf16.msra.mxu0 %v2857
  %4307 = vmatprep.mubr.bf16.mxu0 %v59
  %4308 = vmatmul.mubr.bf16.gmra.mxu0 %v58
  %v4309 = vpop.f32.mrf.mxu0
  %v4310 = vadd.f32 %v4269, %v4309
  %v4311 = vpop.f32.mrf.mxu0
  %v4312 = vadd.f32 %v4271, %v4311
  %v4313 = vpop.f32.mrf.mxu0
  %v4314 = vpop.f32.mrf.mxu0
  %4315 = vdwg.mxu0
  %4316 = vmatprep.subr.bf16.mxu0 %v2918
  %4317 = vmatpush1.bf16.msra.mxu0 %v2917
  %4318 = vmatprep.subr.bf16.mxu0 %v2914
  %4319 = vmatpush1.bf16.msra.mxu0 %v2913
  %4320 = vmatprep.subr.bf16.mxu0 %v2910
  %4321 = vmatpush1.bf16.msra.mxu0 %v2909
  %4322 = vmatprep.subr.bf16.mxu0 %v2906
  %4323 = vmatpush1.bf16.msra.mxu0 %v2905
  %4324 = vmatprep.subr.bf16.mxu0 %v2902
  %4325 = vmatpush1.bf16.msra.mxu0 %v2901
  %4326 = vmatprep.subr.bf16.mxu0 %v2898
  %4327 = vmatpush1.bf16.msra.mxu0 %v2897
  %4328 = vmatprep.subr.bf16.mxu0 %v2894
  %4329 = vmatpush1.bf16.msra.mxu0 %v2893
  %4330 = vmatprep.subr.bf16.mxu0 %v2890
  %4331 = vmatpush1.bf16.msra.mxu0 %v2889
  %4332 = vmatprep.subr.bf16.mxu0 %v2950
  %4333 = vmatpush2.bf16.msra.mxu0 %v2949
  %4334 = vmatprep.subr.bf16.mxu0 %v2946
  %4335 = vmatpush2.bf16.msra.mxu0 %v2945
  %4336 = vmatprep.subr.bf16.mxu0 %v2942
  %4337 = vmatpush2.bf16.msra.mxu0 %v2941
  %4338 = vmatprep.subr.bf16.mxu0 %v2938
  %4339 = vmatpush2.bf16.msra.mxu0 %v2937
  %4340 = vmatprep.subr.bf16.mxu0 %v2934
  %4341 = vmatpush2.bf16.msra.mxu0 %v2933
  %4342 = vmatprep.subr.bf16.mxu0 %v2930
  %4343 = vmatpush2.bf16.msra.mxu0 %v2929
  %4344 = vmatprep.subr.bf16.mxu0 %v2926
  %4345 = vmatpush2.bf16.msra.mxu0 %v2925
  %4346 = vmatprep.subr.bf16.mxu0 %v2922
  %4347 = vmatpush2.bf16.msra.mxu0 %v2921
  %4348 = vmatprep.mubr.bf16.mxu0 %v61
  %4349 = vmatmul.mubr.bf16.gmra.mxu0 %v60
  %v4350 = vpop.f32.mrf.mxu0
  %v4351 = vadd.f32 %v4310, %v4350
  %v4352 = vpop.f32.mrf.mxu0
  %v4353 = vadd.f32 %v4312, %v4352
  %v4354 = vpop.f32.mrf.mxu0
  %v4355 = vpop.f32.mrf.mxu0
  %4356 = vdwg.mxu0
  %4357 = vmatprep.subr.bf16.mxu0 %v2982
  %4358 = vmatpush1.bf16.msra.mxu0 %v2981
  %4359 = vmatprep.subr.bf16.mxu0 %v2978
  %4360 = vmatpush1.bf16.msra.mxu0 %v2977
  %4361 = vmatprep.subr.bf16.mxu0 %v2974
  %4362 = vmatpush1.bf16.msra.mxu0 %v2973
  %4363 = vmatprep.subr.bf16.mxu0 %v2970
  %4364 = vmatpush1.bf16.msra.mxu0 %v2969
  %4365 = vmatprep.subr.bf16.mxu0 %v2966
  %4366 = vmatpush1.bf16.msra.mxu0 %v2965
  %4367 = vmatprep.subr.bf16.mxu0 %v2962
  %4368 = vmatpush1.bf16.msra.mxu0 %v2961
  %4369 = vmatprep.subr.bf16.mxu0 %v2958
  %4370 = vmatpush1.bf16.msra.mxu0 %v2957
  %4371 = vmatprep.subr.bf16.mxu0 %v2954
  %4372 = vmatpush1.bf16.msra.mxu0 %v2953
  %4373 = vmatprep.subr.bf16.mxu0 %v3014
  %4374 = vmatpush2.bf16.msra.mxu0 %v3013
  %4375 = vmatprep.subr.bf16.mxu0 %v3010
  %4376 = vmatpush2.bf16.msra.mxu0 %v3009
  %4377 = vmatprep.subr.bf16.mxu0 %v3006
  %4378 = vmatpush2.bf16.msra.mxu0 %v3005
  %4379 = vmatprep.subr.bf16.mxu0 %v3002
  %4380 = vmatpush2.bf16.msra.mxu0 %v3001
  %4381 = vmatprep.subr.bf16.mxu0 %v2998
  %4382 = vmatpush2.bf16.msra.mxu0 %v2997
  %4383 = vmatprep.subr.bf16.mxu0 %v2994
  %4384 = vmatpush2.bf16.msra.mxu0 %v2993
  %4385 = vmatprep.subr.bf16.mxu0 %v2990
  %4386 = vmatpush2.bf16.msra.mxu0 %v2989
  %4387 = vmatprep.subr.bf16.mxu0 %v2986
  %4388 = vmatpush2.bf16.msra.mxu0 %v2985
  %4389 = vmatprep.mubr.bf16.mxu0 %v63
  %4390 = vmatmul.mubr.bf16.gmra.mxu0 %v62
  %v4391 = vpop.f32.mrf.mxu0
  %v4392 = vadd.f32 %v4351, %v4391
  %v4393 = vpop.f32.mrf.mxu0
  %v4394 = vadd.f32 %v4353, %v4393
  %v4395 = vpop.f32.mrf.mxu0
  %v4396 = vpop.f32.mrf.mxu0
  %4397 = vdwg.mxu0
  %4398 = vmatprep.subr.bf16.mxu0 0
  %4399 = vmatpush1.bf16.msra.mxu0 0
  %4400 = vmatprep.subr.bf16.mxu0 0
  %4401 = vmatpush1.bf16.msra.mxu0 0
  %4402 = vmatprep.subr.bf16.mxu0 0
  %4403 = vmatpush1.bf16.msra.mxu0 0
  %4404 = vmatprep.subr.bf16.mxu0 0
  %4405 = vmatpush1.bf16.msra.mxu0 0
  %4406 = vmatprep.subr.bf16.mxu0 0
  %4407 = vmatpush1.bf16.msra.mxu0 0
  %4408 = vmatprep.subr.bf16.mxu0 %v3026
  %4409 = vmatpush1.bf16.msra.mxu0 %v3025
  %4410 = vmatprep.subr.bf16.mxu0 %v3022
  %4411 = vmatpush1.bf16.msra.mxu0 %v3021
  %4412 = vmatprep.subr.bf16.mxu0 %v3018
  %4413 = vmatpush1.bf16.msra.mxu0 %v3017
  %4414 = vmatprep.subr.bf16.mxu0 0
  %4415 = vmatpush2.bf16.msra.mxu0 0
  %4416 = vmatprep.subr.bf16.mxu0 0
  %4417 = vmatpush2.bf16.msra.mxu0 0
  %4418 = vmatprep.subr.bf16.mxu0 0
  %4419 = vmatpush2.bf16.msra.mxu0 0
  %4420 = vmatprep.subr.bf16.mxu0 0
  %4421 = vmatpush2.bf16.msra.mxu0 0
  %4422 = vmatprep.subr.bf16.mxu0 0
  %4423 = vmatpush2.bf16.msra.mxu0 0
  %4424 = vmatprep.subr.bf16.mxu0 0
  %4425 = vmatpush2.bf16.msra.mxu0 0
  %4426 = vmatprep.subr.bf16.mxu0 0
  %4427 = vmatpush2.bf16.msra.mxu0 0
  %4428 = vmatprep.subr.bf16.mxu0 0
  %4429 = vmatpush2.bf16.msra.mxu0 0
  %4430 = vmatprep.mubr.bf16.mxu0 0
  %4431 = vmatmul.mubr.bf16.gmra.mxu0 %v3617
  %v4432 = vpop.f32.mrf.mxu0
  %v4433 = vadd.f32 %v4392, %v4432
  %v4434 = vpop.f32.mrf.mxu0
  %v4435 = vadd.f32 %v4394, %v4434
  %v4436 = vpop.f32.mrf.mxu0
  %v4437 = vpop.f32.mrf.mxu0
  %4438 = vdwg.mxu0
  %v4439 = vmax.f32 %v4023, 0.0
  %v4440 = vmax.f32 %v4025, 0.0
  %v4441 = vmax.f32 %v4433, 0.0
  %v4442 = vmax.f32 %v4435, 0.0
  %v4443 = vpack.c.bf16 %v4439, %v4439
  %v4444 = vpack.c.bf16 %v4440, %v4440
  %v4445 = vpack.c.bf16 %v4441, %v4441
  %v4446 = vpack.c.bf16 %v4442, %v4442
  %v4447 = vld [vmem:[%s3] sm:$0xff]
  %v4448 = vld [vmem:[%s3 + $0x8] sm:$0xff]
  %v4449 = vld [vmem:[%s3 + $0x10] sm:$0xff]
  %v4450 = vld [vmem:[%s3 + $0x18] sm:$0xff]
  %v4451 = vld [vmem:[%s3 + $0x20] sm:$0xff]
  %v4452 = vld [vmem:[%s3 + $0x28] sm:$0xff]
  %v4453 = vld [vmem:[%s3 + $0x30] sm:$0xff]
  %v4454 = vld [vmem:[%s3 + $0x38] sm:$0xff]
  %v4455 = vld [vmem:[%s3 + $0x40] sm:$0xff]
  %v4456 = vld [vmem:[%s3 + $0x48] sm:$0xff]
  %v4457 = vld [vmem:[%s3 + $0x50] sm:$0xff]
  %v4458 = vld [vmem:[%s3 + $0x58] sm:$0xff]
  %v4459 = vld [vmem:[%s3 + $0x60] sm:$0xff]
  %v4460 = vld [vmem:[%s3 + $0x68] sm:$0xff]
  %v4461 = vld [vmem:[%s3 + $0x70] sm:$0xff]
  %v4462 = vld [vmem:[%s3 + $0x78] sm:$0xff]
  %v4463 = vld [vmem:[%s3 + $0x80] sm:$0xff]
  %v4464 = vld [vmem:[%s3 + $0x88] sm:$0xff]
  %v4465 = vld [vmem:[%s3 + $0x90] sm:$0xff]
  %v4466 = vld [vmem:[%s3 + $0x98] sm:$0xff]
  %v4467 = vld [vmem:[%s3 + $0xa0] sm:$0xff]
  %v4468 = vld [vmem:[%s3 + $0xa8] sm:$0xff]
  %v4469 = vld [vmem:[%s3 + $0xb0] sm:$0xff]
  %v4470 = vld [vmem:[%s3 + $0xb8] sm:$0xff]
  %v4471 = vld [vmem:[%s3 + $0xc0] sm:$0xff]
  %v4472 = vld [vmem:[%s3 + $0xc8] sm:$0xff]
  %v4473 = vld [vmem:[%s3 + $0xd0] sm:$0xff]
  %v4474 = vld [vmem:[%s3 + $0xd8] sm:$0xff]
  %v4475 = vld [vmem:[%s3 + $0xe0] sm:$0xff]
  %v4476 = vld [vmem:[%s3 + $0xe8] sm:$0xff]
  %v4477 = vld [vmem:[%s3 + $0xf0] sm:$0xff]
  %v4478 = vld [vmem:[%s3 + $0xf8] sm:$0xff]
  %v4479 = vld [vmem:[%s3 + $0x100] sm:$0xff]
  %v4480 = vld [vmem:[%s3 + $0x108] sm:$0xff]
  %v4481 = vld [vmem:[%s3 + $0x110] sm:$0xff]
  %v4482 = vld [vmem:[%s3 + $0x118] sm:$0xff]
  %v4483 = vld [vmem:[%s3 + $0x120] sm:$0xff]
  %v4484 = vld [vmem:[%s3 + $0x128] sm:$0xff]
  %v4485 = vld [vmem:[%s3 + $0x130] sm:$0xff]
  %v4486 = vld [vmem:[%s3 + $0x138] sm:$0xff]
  %v4487 = vld [vmem:[%s3 + $0x140] sm:$0xff]
  %v4488 = vld [vmem:[%s3 + $0x148] sm:$0xff]
  %v4489 = vld [vmem:[%s3 + $0x150] sm:$0xff]
  %v4490 = vld [vmem:[%s3 + $0x158] sm:$0xff]
  %v4491 = vld [vmem:[%s3 + $0x160] sm:$0xff]
  %v4492 = vld [vmem:[%s3 + $0x168] sm:$0xff]
  %v4493 = vld [vmem:[%s3 + $0x170] sm:$0xff]
  %v4494 = vld [vmem:[%s3 + $0x178] sm:$0xff]
  %v4495 = vld [vmem:[%s3 + $0x180] sm:$0xff]
  %v4496 = vld [vmem:[%s3 + $0x188] sm:$0xff]
  %v4497 = vld [vmem:[%s3 + $0x190] sm:$0xff]
  %v4498 = vld [vmem:[%s3 + $0x198] sm:$0xff]
  %v4499 = vld [vmem:[%s3 + $0x1a0] sm:$0xff]
  %v4500 = vld [vmem:[%s3 + $0x1a8] sm:$0xff]
  %v4501 = vld [vmem:[%s3 + $0x1b0] sm:$0xff]
  %v4502 = vld [vmem:[%s3 + $0x1b8] sm:$0xff]
  %v4503 = vld [vmem:[%s3 + $0x1c0] sm:$0xff]
  %v4504 = vld [vmem:[%s3 + $0x1c8] sm:$0xff]
  %v4505 = vld [vmem:[%s3 + $0x1d0] sm:$0xff]
  %v4506 = vld [vmem:[%s3 + $0x1d8] sm:$0xff]
  %v4507 = vld [vmem:[%s3 + $0x1e0] sm:$0xff]
  %v4508 = vld [vmem:[%s3 + $0x1e8] sm:$0xff]
  %v4509 = vld [vmem:[%s3 + $0x1f0] sm:$0xff]
  %v4510 = vld [vmem:[%s3 + $0x1f8] sm:$0xff]
  %v4511 = vld [vmem:[%s3 + $0x200] sm:$0xff]
  %v4512 = vld [vmem:[%s3 + $0x208] sm:$0xff]
  %v4513 = vld [vmem:[%s3 + $0x210] sm:$0xff]
  %v4514 = vld [vmem:[%s3 + $0x218] sm:$0xff]
  %v4515 = vld [vmem:[%s3 + $0x220] sm:$0xff]
  %v4516 = vld [vmem:[%s3 + $0x228] sm:$0xff]
  %v4517 = vld [vmem:[%s3 + $0x230] sm:$0xff]
  %v4518 = vld [vmem:[%s3 + $0x238] sm:$0xff]
  %v4519 = vld [vmem:[%s3 + $0x240] sm:$0xff]
  %v4520 = vld [vmem:[%s3 + $0x248] sm:$0xff]
  %v4521 = vld [vmem:[%s3 + $0x250] sm:$0xff]
  %v4522 = vld [vmem:[%s3 + $0x258] sm:$0xff]
  %v4523 = vld [vmem:[%s3 + $0x260] sm:$0xff]
  %v4524 = vld [vmem:[%s3 + $0x268] sm:$0xff]
  %v4525 = vld [vmem:[%s3 + $0x270] sm:$0xff]
  %v4526 = vld [vmem:[%s3 + $0x278] sm:$0xff]
  %v4527 = vld [vmem:[%s3 + $0x280] sm:$0xff]
  %v4528 = vld [vmem:[%s3 + $0x288] sm:$0xff]
  %v4529 = vld [vmem:[%s3 + $0x290] sm:$0xff]
  %v4530 = vld [vmem:[%s3 + $0x298] sm:$0xff]
  %v4531 = vld [vmem:[%s3 + $0x2a0] sm:$0xff]
  %v4532 = vld [vmem:[%s3 + $0x2a8] sm:$0xff]
  %v4533 = vld [vmem:[%s3 + $0x2b0] sm:$0xff]
  %v4534 = vld [vmem:[%s3 + $0x2b8] sm:$0xff]
  %v4535 = vld [vmem:[%s3 + $0x2c0] sm:$0xff]
  %v4536 = vld [vmem:[%s3 + $0x2c8] sm:$0xff]
  %v4537 = vld [vmem:[%s3 + $0x2d0] sm:$0xff]
  %v4538 = vld [vmem:[%s3 + $0x2d8] sm:$0xff]
  %v4539 = vld [vmem:[%s3 + $0x2e0] sm:$0xff]
  %v4540 = vld [vmem:[%s3 + $0x2e8] sm:$0xff]
  %v4541 = vld [vmem:[%s3 + $0x2f0] sm:$0xff]
  %v4542 = vld [vmem:[%s3 + $0x2f8] sm:$0xff]
  %v4543 = vld [vmem:[%s3 + $0x300] sm:$0xff]
  %v4544 = vld [vmem:[%s3 + $0x308] sm:$0xff]
  %v4545 = vld [vmem:[%s3 + $0x310] sm:$0xff]
  %v4546 = vld [vmem:[%s3 + $0x318] sm:$0xff]
  %v4547 = vld [vmem:[%s3 + $0x320] sm:$0xff]
  %v4548 = vld [vmem:[%s3 + $0x328] sm:$0xff]
  %v4549 = vld [vmem:[%s3 + $0x330] sm:$0xff]
  %v4550 = vld [vmem:[%s3 + $0x338] sm:$0xff]
  %v4551 = vld [vmem:[%s3 + $0x340] sm:$0xff]
  %v4552 = vld [vmem:[%s3 + $0x348] sm:$0xff]
  %v4553 = vld [vmem:[%s3 + $0x350] sm:$0xff]
  %v4554 = vld [vmem:[%s3 + $0x358] sm:$0xff]
  %v4555 = vld [vmem:[%s3 + $0x360] sm:$0xff]
  %v4556 = vld [vmem:[%s3 + $0x368] sm:$0xff]
  %v4557 = vld [vmem:[%s3 + $0x370] sm:$0xff]
  %v4558 = vld [vmem:[%s3 + $0x378] sm:$0xff]
  %v4559 = vld [vmem:[%s3 + $0x380] sm:$0xff]
  %v4560 = vld [vmem:[%s3 + $0x388] sm:$0xff]
  %v4561 = vld [vmem:[%s3 + $0x390] sm:$0xff]
  %v4562 = vld [vmem:[%s3 + $0x398] sm:$0xff]
  %v4563 = vld [vmem:[%s3 + $0x3a0] sm:$0xff]
  %v4564 = vld [vmem:[%s3 + $0x3a8] sm:$0xff]
  %v4565 = vld [vmem:[%s3 + $0x3b0] sm:$0xff]
  %v4566 = vld [vmem:[%s3 + $0x3b8] sm:$0xff]
  %v4567 = vld [vmem:[%s3 + $0x3c0] sm:$0xff]
  %v4568 = vld [vmem:[%s3 + $0x3c8] sm:$0xff]
  %v4569 = vld [vmem:[%s3 + $0x3d0] sm:$0xff]
  %v4570 = vld [vmem:[%s3 + $0x3d8] sm:$0xff]
  %v4571 = vld [vmem:[%s3 + $0x3e0] sm:$0xff]
  %v4572 = vld [vmem:[%s3 + $0x3e8] sm:$0xff]
  %v4573 = vld [vmem:[%s3 + $0x3f0] sm:$0xff]
  %v4574 = vld [vmem:[%s3 + $0x3f8] sm:$0xff]
  %v4575 = vld [vmem:[%s4] sm:$0xf]
  %v4577 = vlaneseq
  %v4578 = vshrl.u32 %v4577, 7
  %v4579 = vsub.s32 0, %v4578
  %v4580 = vrot.slane %v4575, %v4579
  %v4581 = vlaneseq
  %v4582 = vshrl.u32 %v4581, 7
  %v4583 = vsub.s32 1, %v4582
  %v4584 = vrot.slane %v4575, %v4583
  %v4585 = vlaneseq
  %v4586 = vshrl.u32 %v4585, 7
  %v4587 = vsub.s32 2, %v4586
  %v4588 = vrot.slane %v4575, %v4587
  %v4589 = vlaneseq
  %v4590 = vshrl.u32 %v4589, 7
  %v4591 = vsub.s32 3, %v4590
  %v4592 = vrot.slane %v4575, %v4591
  %v4725 = vunpack.c.l.b16 %v4447
  %v4726 = vunpack.c.h.b16 %v4447
  %v4727 = vunpack.c.l.b16 %v4448
  %v4728 = vunpack.c.h.b16 %v4448
  %v4729 = vunpack.c.l.b16 %v4449
  %v4730 = vunpack.c.h.b16 %v4449
  %v4731 = vunpack.c.l.b16 %v4450
  %v4732 = vunpack.c.h.b16 %v4450
  %v4733 = vunpack.c.l.b16 %v4451
  %v4734 = vunpack.c.h.b16 %v4451
  %v4735 = vunpack.c.l.b16 %v4452
  %v4736 = vunpack.c.h.b16 %v4452
  %v4737 = vunpack.c.l.b16 %v4453
  %v4738 = vunpack.c.h.b16 %v4453
  %v4739 = vunpack.c.l.b16 %v4454
  %v4740 = vunpack.c.h.b16 %v4454
  %v4741 = vunpack.c.l.b16 %v4455
  %v4742 = vunpack.c.h.b16 %v4455
  %v4743 = vunpack.c.l.b16 %v4456
  %v4744 = vunpack.c.h.b16 %v4456
  %v4745 = vunpack.c.l.b16 %v4457
  %v4746 = vunpack.c.h.b16 %v4457
  %v4747 = vunpack.c.l.b16 %v4458
  %v4748 = vunpack.c.h.b16 %v4458
  %v4749 = vunpack.c.l.b16 %v4459
  %v4750 = vunpack.c.h.b16 %v4459
  %v4751 = vunpack.c.l.b16 %v4460
  %v4752 = vunpack.c.h.b16 %v4460
  %v4753 = vunpack.c.l.b16 %v4461
  %v4754 = vunpack.c.h.b16 %v4461
  %v4755 = vunpack.c.l.b16 %v4462
  %v4756 = vunpack.c.h.b16 %v4462
  %v4757 = vunpack.c.l.b16 %v4463
  %v4758 = vunpack.c.h.b16 %v4463
  %v4759 = vunpack.c.l.b16 %v4464
  %v4760 = vunpack.c.h.b16 %v4464
  %v4761 = vunpack.c.l.b16 %v4465
  %v4762 = vunpack.c.h.b16 %v4465
  %v4763 = vunpack.c.l.b16 %v4466
  %v4764 = vunpack.c.h.b16 %v4466
  %v4765 = vunpack.c.l.b16 %v4467
  %v4766 = vunpack.c.h.b16 %v4467
  %v4767 = vunpack.c.l.b16 %v4468
  %v4768 = vunpack.c.h.b16 %v4468
  %v4769 = vunpack.c.l.b16 %v4469
  %v4770 = vunpack.c.h.b16 %v4469
  %v4771 = vunpack.c.l.b16 %v4470
  %v4772 = vunpack.c.h.b16 %v4470
  %v4773 = vunpack.c.l.b16 %v4471
  %v4774 = vunpack.c.h.b16 %v4471
  %v4775 = vunpack.c.l.b16 %v4472
  %v4776 = vunpack.c.h.b16 %v4472
  %v4777 = vunpack.c.l.b16 %v4473
  %v4778 = vunpack.c.h.b16 %v4473
  %v4779 = vunpack.c.l.b16 %v4474
  %v4780 = vunpack.c.h.b16 %v4474
  %v4781 = vunpack.c.l.b16 %v4475
  %v4782 = vunpack.c.h.b16 %v4475
  %v4783 = vunpack.c.l.b16 %v4476
  %v4784 = vunpack.c.h.b16 %v4476
  %v4785 = vunpack.c.l.b16 %v4477
  %v4786 = vunpack.c.h.b16 %v4477
  %v4787 = vunpack.c.l.b16 %v4478
  %v4788 = vunpack.c.h.b16 %v4478
  %v4789 = vunpack.c.l.b16 %v4479
  %v4790 = vunpack.c.h.b16 %v4479
  %v4791 = vunpack.c.l.b16 %v4480
  %v4792 = vunpack.c.h.b16 %v4480
  %v4793 = vunpack.c.l.b16 %v4481
  %v4794 = vunpack.c.h.b16 %v4481
  %v4795 = vunpack.c.l.b16 %v4482
  %v4796 = vunpack.c.h.b16 %v4482
  %v4797 = vunpack.c.l.b16 %v4483
  %v4798 = vunpack.c.h.b16 %v4483
  %v4799 = vunpack.c.l.b16 %v4484
  %v4800 = vunpack.c.h.b16 %v4484
  %v4801 = vunpack.c.l.b16 %v4485
  %v4802 = vunpack.c.h.b16 %v4485
  %v4803 = vunpack.c.l.b16 %v4486
  %v4804 = vunpack.c.h.b16 %v4486
  %v4805 = vunpack.c.l.b16 %v4487
  %v4806 = vunpack.c.h.b16 %v4487
  %v4807 = vunpack.c.l.b16 %v4488
  %v4808 = vunpack.c.h.b16 %v4488
  %v4809 = vunpack.c.l.b16 %v4489
  %v4810 = vunpack.c.h.b16 %v4489
  %v4811 = vunpack.c.l.b16 %v4490
  %v4812 = vunpack.c.h.b16 %v4490
  %v4813 = vunpack.c.l.b16 %v4491
  %v4814 = vunpack.c.h.b16 %v4491
  %v4815 = vunpack.c.l.b16 %v4492
  %v4816 = vunpack.c.h.b16 %v4492
  %v4817 = vunpack.c.l.b16 %v4493
  %v4818 = vunpack.c.h.b16 %v4493
  %v4819 = vunpack.c.l.b16 %v4494
  %v4820 = vunpack.c.h.b16 %v4494
  %v4821 = vunpack.c.l.b16 %v4495
  %v4822 = vunpack.c.h.b16 %v4495
  %v4823 = vunpack.c.l.b16 %v4496
  %v4824 = vunpack.c.h.b16 %v4496
  %v4825 = vunpack.c.l.b16 %v4497
  %v4826 = vunpack.c.h.b16 %v4497
  %v4827 = vunpack.c.l.b16 %v4498
  %v4828 = vunpack.c.h.b16 %v4498
  %v4829 = vunpack.c.l.b16 %v4499
  %v4830 = vunpack.c.h.b16 %v4499
  %v4831 = vunpack.c.l.b16 %v4500
  %v4832 = vunpack.c.h.b16 %v4500
  %v4833 = vunpack.c.l.b16 %v4501
  %v4834 = vunpack.c.h.b16 %v4501
  %v4835 = vunpack.c.l.b16 %v4502
  %v4836 = vunpack.c.h.b16 %v4502
  %v4837 = vunpack.c.l.b16 %v4503
  %v4838 = vunpack.c.h.b16 %v4503
  %v4839 = vunpack.c.l.b16 %v4504
  %v4840 = vunpack.c.h.b16 %v4504
  %v4841 = vunpack.c.l.b16 %v4505
  %v4842 = vunpack.c.h.b16 %v4505
  %v4843 = vunpack.c.l.b16 %v4506
  %v4844 = vunpack.c.h.b16 %v4506
  %v4845 = vunpack.c.l.b16 %v4507
  %v4846 = vunpack.c.h.b16 %v4507
  %v4847 = vunpack.c.l.b16 %v4508
  %v4848 = vunpack.c.h.b16 %v4508
  %v4849 = vunpack.c.l.b16 %v4509
  %v4850 = vunpack.c.h.b16 %v4509
  %v4851 = vunpack.c.l.b16 %v4510
  %v4852 = vunpack.c.h.b16 %v4510
  %v4853 = vunpack.c.l.b16 %v4511
  %v4854 = vunpack.c.h.b16 %v4511
  %v4855 = vunpack.c.l.b16 %v4512
  %v4856 = vunpack.c.h.b16 %v4512
  %v4857 = vunpack.c.l.b16 %v4513
  %v4858 = vunpack.c.h.b16 %v4513
  %v4859 = vunpack.c.l.b16 %v4514
  %v4860 = vunpack.c.h.b16 %v4514
  %v4861 = vunpack.c.l.b16 %v4515
  %v4862 = vunpack.c.h.b16 %v4515
  %v4863 = vunpack.c.l.b16 %v4516
  %v4864 = vunpack.c.h.b16 %v4516
  %v4865 = vunpack.c.l.b16 %v4517
  %v4866 = vunpack.c.h.b16 %v4517
  %v4867 = vunpack.c.l.b16 %v4518
  %v4868 = vunpack.c.h.b16 %v4518
  %v4869 = vunpack.c.l.b16 %v4519
  %v4870 = vunpack.c.h.b16 %v4519
  %v4871 = vunpack.c.l.b16 %v4520
  %v4872 = vunpack.c.h.b16 %v4520
  %v4873 = vunpack.c.l.b16 %v4521
  %v4874 = vunpack.c.h.b16 %v4521
  %v4875 = vunpack.c.l.b16 %v4522
  %v4876 = vunpack.c.h.b16 %v4522
  %v4877 = vunpack.c.l.b16 %v4523
  %v4878 = vunpack.c.h.b16 %v4523
  %v4879 = vunpack.c.l.b16 %v4524
  %v4880 = vunpack.c.h.b16 %v4524
  %v4881 = vunpack.c.l.b16 %v4525
  %v4882 = vunpack.c.h.b16 %v4525
  %v4883 = vunpack.c.l.b16 %v4526
  %v4884 = vunpack.c.h.b16 %v4526
  %v4885 = vunpack.c.l.b16 %v4527
  %v4886 = vunpack.c.h.b16 %v4527
  %v4887 = vunpack.c.l.b16 %v4528
  %v4888 = vunpack.c.h.b16 %v4528
  %v4889 = vunpack.c.l.b16 %v4529
  %v4890 = vunpack.c.h.b16 %v4529
  %v4891 = vunpack.c.l.b16 %v4530
  %v4892 = vunpack.c.h.b16 %v4530
  %v4893 = vunpack.c.l.b16 %v4531
  %v4894 = vunpack.c.h.b16 %v4531
  %v4895 = vunpack.c.l.b16 %v4532
  %v4896 = vunpack.c.h.b16 %v4532
  %v4897 = vunpack.c.l.b16 %v4533
  %v4898 = vunpack.c.h.b16 %v4533
  %v4899 = vunpack.c.l.b16 %v4534
  %v4900 = vunpack.c.h.b16 %v4534
  %v4901 = vunpack.c.l.b16 %v4535
  %v4902 = vunpack.c.h.b16 %v4535
  %v4903 = vunpack.c.l.b16 %v4536
  %v4904 = vunpack.c.h.b16 %v4536
  %v4905 = vunpack.c.l.b16 %v4537
  %v4906 = vunpack.c.h.b16 %v4537
  %v4907 = vunpack.c.l.b16 %v4538
  %v4908 = vunpack.c.h.b16 %v4538
  %v4909 = vunpack.c.l.b16 %v4539
  %v4910 = vunpack.c.h.b16 %v4539
  %v4911 = vunpack.c.l.b16 %v4540
  %v4912 = vunpack.c.h.b16 %v4540
  %v4913 = vunpack.c.l.b16 %v4541
  %v4914 = vunpack.c.h.b16 %v4541
  %v4915 = vunpack.c.l.b16 %v4542
  %v4916 = vunpack.c.h.b16 %v4542
  %v4917 = vunpack.c.l.b16 %v4543
  %v4918 = vunpack.c.h.b16 %v4543
  %v4919 = vunpack.c.l.b16 %v4544
  %v4920 = vunpack.c.h.b16 %v4544
  %v4921 = vunpack.c.l.b16 %v4545
  %v4922 = vunpack.c.h.b16 %v4545
  %v4923 = vunpack.c.l.b16 %v4546
  %v4924 = vunpack.c.h.b16 %v4546
  %v4925 = vunpack.c.l.b16 %v4547
  %v4926 = vunpack.c.h.b16 %v4547
  %v4927 = vunpack.c.l.b16 %v4548
  %v4928 = vunpack.c.h.b16 %v4548
  %v4929 = vunpack.c.l.b16 %v4549
  %v4930 = vunpack.c.h.b16 %v4549
  %v4931 = vunpack.c.l.b16 %v4550
  %v4932 = vunpack.c.h.b16 %v4550
  %v4933 = vunpack.c.l.b16 %v4551
  %v4934 = vunpack.c.h.b16 %v4551
  %v4935 = vunpack.c.l.b16 %v4552
  %v4936 = vunpack.c.h.b16 %v4552
  %v4937 = vunpack.c.l.b16 %v4553
  %v4938 = vunpack.c.h.b16 %v4553
  %v4939 = vunpack.c.l.b16 %v4554
  %v4940 = vunpack.c.h.b16 %v4554
  %v4941 = vunpack.c.l.b16 %v4555
  %v4942 = vunpack.c.h.b16 %v4555
  %v4943 = vunpack.c.l.b16 %v4556
  %v4944 = vunpack.c.h.b16 %v4556
  %v4945 = vunpack.c.l.b16 %v4557
  %v4946 = vunpack.c.h.b16 %v4557
  %v4947 = vunpack.c.l.b16 %v4558
  %v4948 = vunpack.c.h.b16 %v4558
  %v4949 = vunpack.c.l.b16 %v4559
  %v4950 = vunpack.c.h.b16 %v4559
  %v4951 = vunpack.c.l.b16 %v4560
  %v4952 = vunpack.c.h.b16 %v4560
  %v4953 = vunpack.c.l.b16 %v4561
  %v4954 = vunpack.c.h.b16 %v4561
  %v4955 = vunpack.c.l.b16 %v4562
  %v4956 = vunpack.c.h.b16 %v4562
  %v4957 = vunpack.c.l.b16 %v4563
  %v4958 = vunpack.c.h.b16 %v4563
  %v4959 = vunpack.c.l.b16 %v4564
  %v4960 = vunpack.c.h.b16 %v4564
  %v4961 = vunpack.c.l.b16 %v4565
  %v4962 = vunpack.c.h.b16 %v4565
  %v4963 = vunpack.c.l.b16 %v4566
  %v4964 = vunpack.c.h.b16 %v4566
  %v4965 = vunpack.c.l.b16 %v4567
  %v4966 = vunpack.c.h.b16 %v4567
  %v4967 = vunpack.c.l.b16 %v4568
  %v4968 = vunpack.c.h.b16 %v4568
  %v4969 = vunpack.c.l.b16 %v4569
  %v4970 = vunpack.c.h.b16 %v4569
  %v4971 = vunpack.c.l.b16 %v4570
  %v4972 = vunpack.c.h.b16 %v4570
  %v4973 = vunpack.c.l.b16 %v4571
  %v4974 = vunpack.c.h.b16 %v4571
  %v4975 = vunpack.c.l.b16 %v4572
  %v4976 = vunpack.c.h.b16 %v4572
  %v4977 = vunpack.c.l.b16 %v4573
  %v4978 = vunpack.c.h.b16 %v4573
  %v4979 = vunpack.c.l.b16 %v4574
  %v4980 = vunpack.c.h.b16 %v4574
  %v4981 = vpack.c.b16 %v4729, %v4725
  %v4982 = vpack.c.b16 %v4730, %v4726
  %v4983 = vpack.c.b16 %v4731, %v4727
  %v4984 = vpack.c.b16 %v4732, %v4728
  %v4985 = vpack.c.b16 %v4737, %v4733
  %v4986 = vpack.c.b16 %v4738, %v4734
  %v4987 = vpack.c.b16 %v4739, %v4735
  %v4988 = vpack.c.b16 %v4740, %v4736
  %v4989 = vpack.c.b16 %v4745, %v4741
  %v4990 = vpack.c.b16 %v4746, %v4742
  %v4991 = vpack.c.b16 %v4747, %v4743
  %v4992 = vpack.c.b16 %v4748, %v4744
  %v4993 = vpack.c.b16 %v4753, %v4749
  %v4994 = vpack.c.b16 %v4754, %v4750
  %v4995 = vpack.c.b16 %v4755, %v4751
  %v4996 = vpack.c.b16 %v4756, %v4752
  %v4997 = vpack.c.b16 %v4761, %v4757
  %v4998 = vpack.c.b16 %v4762, %v4758
  %v4999 = vpack.c.b16 %v4763, %v4759
  %v5000 = vpack.c.b16 %v4764, %v4760
  %v5001 = vpack.c.b16 %v4769, %v4765
  %v5002 = vpack.c.b16 %v4770, %v4766
  %v5003 = vpack.c.b16 %v4771, %v4767
  %v5004 = vpack.c.b16 %v4772, %v4768
  %v5005 = vpack.c.b16 %v4777, %v4773
  %v5006 = vpack.c.b16 %v4778, %v4774
  %v5007 = vpack.c.b16 %v4779, %v4775
  %v5008 = vpack.c.b16 %v4780, %v4776
  %v5009 = vpack.c.b16 %v4785, %v4781
  %v5010 = vpack.c.b16 %v4786, %v4782
  %v5011 = vpack.c.b16 %v4787, %v4783
  %v5012 = vpack.c.b16 %v4788, %v4784
  %v5013 = vpack.c.b16 %v4793, %v4789
  %v5014 = vpack.c.b16 %v4794, %v4790
  %v5015 = vpack.c.b16 %v4795, %v4791
  %v5016 = vpack.c.b16 %v4796, %v4792
  %v5017 = vpack.c.b16 %v4801, %v4797
  %v5018 = vpack.c.b16 %v4802, %v4798
  %v5019 = vpack.c.b16 %v4803, %v4799
  %v5020 = vpack.c.b16 %v4804, %v4800
  %v5021 = vpack.c.b16 %v4809, %v4805
  %v5022 = vpack.c.b16 %v4810, %v4806
  %v5023 = vpack.c.b16 %v4811, %v4807
  %v5024 = vpack.c.b16 %v4812, %v4808
  %v5025 = vpack.c.b16 %v4817, %v4813
  %v5026 = vpack.c.b16 %v4818, %v4814
  %v5027 = vpack.c.b16 %v4819, %v4815
  %v5028 = vpack.c.b16 %v4820, %v4816
  %v5029 = vpack.c.b16 %v4825, %v4821
  %v5030 = vpack.c.b16 %v4826, %v4822
  %v5031 = vpack.c.b16 %v4827, %v4823
  %v5032 = vpack.c.b16 %v4828, %v4824
  %v5033 = vpack.c.b16 %v4833, %v4829
  %v5034 = vpack.c.b16 %v4834, %v4830
  %v5035 = vpack.c.b16 %v4835, %v4831
  %v5036 = vpack.c.b16 %v4836, %v4832
  %v5037 = vpack.c.b16 %v4841, %v4837
  %v5038 = vpack.c.b16 %v4842, %v4838
  %v5039 = vpack.c.b16 %v4843, %v4839
  %v5040 = vpack.c.b16 %v4844, %v4840
  %v5041 = vpack.c.b16 %v4849, %v4845
  %v5042 = vpack.c.b16 %v4850, %v4846
  %v5043 = vpack.c.b16 %v4851, %v4847
  %v5044 = vpack.c.b16 %v4852, %v4848
  %v5045 = vpack.c.b16 %v4857, %v4853
  %v5046 = vpack.c.b16 %v4858, %v4854
  %v5047 = vpack.c.b16 %v4859, %v4855
  %v5048 = vpack.c.b16 %v4860, %v4856
  %v5049 = vpack.c.b16 %v4865, %v4861
  %v5050 = vpack.c.b16 %v4866, %v4862
  %v5051 = vpack.c.b16 %v4867, %v4863
  %v5052 = vpack.c.b16 %v4868, %v4864
  %v5053 = vpack.c.b16 %v4873, %v4869
  %v5054 = vpack.c.b16 %v4874, %v4870
  %v5055 = vpack.c.b16 %v4875, %v4871
  %v5056 = vpack.c.b16 %v4876, %v4872
  %v5057 = vpack.c.b16 %v4881, %v4877
  %v5058 = vpack.c.b16 %v4882, %v4878
  %v5059 = vpack.c.b16 %v4883, %v4879
  %v5060 = vpack.c.b16 %v4884, %v4880
  %v5061 = vpack.c.b16 %v4889, %v4885
  %v5062 = vpack.c.b16 %v4890, %v4886
  %v5063 = vpack.c.b16 %v4891, %v4887
  %v5064 = vpack.c.b16 %v4892, %v4888
  %v5065 = vpack.c.b16 %v4897, %v4893
  %v5066 = vpack.c.b16 %v4898, %v4894
  %v5067 = vpack.c.b16 %v4899, %v4895
  %v5068 = vpack.c.b16 %v4900, %v4896
  %v5069 = vpack.c.b16 %v4905, %v4901
  %v5070 = vpack.c.b16 %v4906, %v4902
  %v5071 = vpack.c.b16 %v4907, %v4903
  %v5072 = vpack.c.b16 %v4908, %v4904
  %v5073 = vpack.c.b16 %v4913, %v4909
  %v5074 = vpack.c.b16 %v4914, %v4910
  %v5075 = vpack.c.b16 %v4915, %v4911
  %v5076 = vpack.c.b16 %v4916, %v4912
  %v5077 = vpack.c.b16 %v4921, %v4917
  %v5078 = vpack.c.b16 %v4922, %v4918
  %v5079 = vpack.c.b16 %v4923, %v4919
  %v5080 = vpack.c.b16 %v4924, %v4920
  %v5081 = vpack.c.b16 %v4929, %v4925
  %v5082 = vpack.c.b16 %v4930, %v4926
  %v5083 = vpack.c.b16 %v4931, %v4927
  %v5084 = vpack.c.b16 %v4932, %v4928
  %v5085 = vpack.c.b16 %v4937, %v4933
  %v5086 = vpack.c.b16 %v4938, %v4934
  %v5087 = vpack.c.b16 %v4939, %v4935
  %v5088 = vpack.c.b16 %v4940, %v4936
  %v5089 = vpack.c.b16 %v4945, %v4941
  %v5090 = vpack.c.b16 %v4946, %v4942
  %v5091 = vpack.c.b16 %v4947, %v4943
  %v5092 = vpack.c.b16 %v4948, %v4944
  %v5093 = vpack.c.b16 %v4953, %v4949
  %v5094 = vpack.c.b16 %v4954, %v4950
  %v5095 = vpack.c.b16 %v4955, %v4951
  %v5096 = vpack.c.b16 %v4956, %v4952
  %v5097 = vpack.c.b16 %v4961, %v4957
  %v5098 = vpack.c.b16 %v4962, %v4958
  %v5099 = vpack.c.b16 %v4963, %v4959
  %v5100 = vpack.c.b16 %v4964, %v4960
  %v5101 = vpack.c.b16 %v4969, %v4965
  %v5102 = vpack.c.b16 %v4970, %v4966
  %v5103 = vpack.c.b16 %v4971, %v4967
  %v5104 = vpack.c.b16 %v4972, %v4968
  %v5105 = vpack.c.b16 %v4977, %v4973
  %v5106 = vpack.c.b16 %v4978, %v4974
  %v5107 = vpack.c.b16 %v4979, %v4975
  %v5108 = vpack.c.b16 %v4980, %v4976
  %5237 = vmatprep.subr.bf16.mxu0 %v5010
  %5238 = vmatpush1.bf16.msra.mxu0 %v5009
  %5239 = vmatprep.subr.bf16.mxu0 %v5006
  %5240 = vmatpush1.bf16.msra.mxu0 %v5005
  %5241 = vmatprep.subr.bf16.mxu0 %v5002
  %5242 = vmatpush1.bf16.msra.mxu0 %v5001
  %5243 = vmatprep.subr.bf16.mxu0 %v4998
  %5244 = vmatpush1.bf16.msra.mxu0 %v4997
  %5245 = vmatprep.subr.bf16.mxu0 %v4994
  %5246 = vmatpush1.bf16.msra.mxu0 %v4993
  %5247 = vmatprep.subr.bf16.mxu0 %v4990
  %5248 = vmatpush1.bf16.msra.mxu0 %v4989
  %5249 = vmatprep.subr.bf16.mxu0 %v4986
  %5250 = vmatpush1.bf16.msra.mxu0 %v4985
  %5251 = vmatprep.subr.bf16.mxu0 %v4982
  %5252 = vmatpush1.bf16.msra.mxu0 %v4981
  %5253 = vmatprep.subr.bf16.mxu0 %v5042
  %5254 = vmatpush2.bf16.msra.mxu0 %v5041
  %5255 = vmatprep.subr.bf16.mxu0 %v5038
  %5256 = vmatpush2.bf16.msra.mxu0 %v5037
  %5257 = vmatprep.subr.bf16.mxu0 %v5034
  %5258 = vmatpush2.bf16.msra.mxu0 %v5033
  %5259 = vmatprep.subr.bf16.mxu0 %v5030
  %5260 = vmatpush2.bf16.msra.mxu0 %v5029
  %5261 = vmatprep.subr.bf16.mxu0 %v5026
  %5262 = vmatpush2.bf16.msra.mxu0 %v5025
  %5263 = vmatprep.subr.bf16.mxu0 %v5022
  %5264 = vmatpush2.bf16.msra.mxu0 %v5021
  %5265 = vmatprep.subr.bf16.mxu0 %v5018
  %5266 = vmatpush2.bf16.msra.mxu0 %v5017
  %5267 = vmatprep.subr.bf16.mxu0 %v5014
  %5268 = vmatpush2.bf16.msra.mxu0 %v5013
  %5269 = vmatprep.mubr.bf16.mxu0 %v4444
  %5270 = vmatmul.mubr.bf16.gmra.mxu0 %v4443
  %v5271 = vpop.f32.mrf.mxu0
  %v5272 = vadd.f32 %v4580, %v5271
  %v5273 = vpop.f32.mrf.mxu0
  %v5274 = vadd.f32 %v4584, %v5273
  %v5275 = vpop.f32.mrf.mxu0
  %v5276 = vpop.f32.mrf.mxu0
  %5277 = vdwg.mxu0
  %5278 = vmatprep.subr.bf16.mxu0 %v5074
  %5279 = vmatpush1.bf16.msra.mxu0 %v5073
  %5280 = vmatprep.subr.bf16.mxu0 %v5070
  %5281 = vmatpush1.bf16.msra.mxu0 %v5069
  %5282 = vmatprep.subr.bf16.mxu0 %v5066
  %5283 = vmatpush1.bf16.msra.mxu0 %v5065
  %5284 = vmatprep.subr.bf16.mxu0 %v5062
  %5285 = vmatpush1.bf16.msra.mxu0 %v5061
  %5286 = vmatprep.subr.bf16.mxu0 %v5058
  %5287 = vmatpush1.bf16.msra.mxu0 %v5057
  %5288 = vmatprep.subr.bf16.mxu0 %v5054
  %5289 = vmatpush1.bf16.msra.mxu0 %v5053
  %5290 = vmatprep.subr.bf16.mxu0 %v5050
  %5291 = vmatpush1.bf16.msra.mxu0 %v5049
  %5292 = vmatprep.subr.bf16.mxu0 %v5046
  %5293 = vmatpush1.bf16.msra.mxu0 %v5045
  %5294 = vmatprep.subr.bf16.mxu0 %v5106
  %5295 = vmatpush2.bf16.msra.mxu0 %v5105
  %5296 = vmatprep.subr.bf16.mxu0 %v5102
  %5297 = vmatpush2.bf16.msra.mxu0 %v5101
  %5298 = vmatprep.subr.bf16.mxu0 %v5098
  %5299 = vmatpush2.bf16.msra.mxu0 %v5097
  %5300 = vmatprep.subr.bf16.mxu0 %v5094
  %5301 = vmatpush2.bf16.msra.mxu0 %v5093
  %5302 = vmatprep.subr.bf16.mxu0 %v5090
  %5303 = vmatpush2.bf16.msra.mxu0 %v5089
  %5304 = vmatprep.subr.bf16.mxu0 %v5086
  %5305 = vmatpush2.bf16.msra.mxu0 %v5085
  %5306 = vmatprep.subr.bf16.mxu0 %v5082
  %5307 = vmatpush2.bf16.msra.mxu0 %v5081
  %5308 = vmatprep.subr.bf16.mxu0 %v5078
  %5309 = vmatpush2.bf16.msra.mxu0 %v5077
  %5310 = vmatprep.mubr.bf16.mxu0 %v4446
  %5311 = vmatmul.mubr.bf16.gmra.mxu0 %v4445
  %v5312 = vpop.f32.mrf.mxu0
  %v5313 = vadd.f32 %v5272, %v5312
  %v5314 = vpop.f32.mrf.mxu0
  %v5315 = vadd.f32 %v5274, %v5314
  %v5316 = vpop.f32.mrf.mxu0
  %v5317 = vpop.f32.mrf.mxu0
  %5318 = vdwg.mxu0
  %5319 = vmatprep.subr.bf16.mxu0 %v5012
  %5320 = vmatpush1.bf16.msra.mxu0 %v5011
  %5321 = vmatprep.subr.bf16.mxu0 %v5008
  %5322 = vmatpush1.bf16.msra.mxu0 %v5007
  %5323 = vmatprep.subr.bf16.mxu0 %v5004
  %5324 = vmatpush1.bf16.msra.mxu0 %v5003
  %5325 = vmatprep.subr.bf16.mxu0 %v5000
  %5326 = vmatpush1.bf16.msra.mxu0 %v4999
  %5327 = vmatprep.subr.bf16.mxu0 %v4996
  %5328 = vmatpush1.bf16.msra.mxu0 %v4995
  %5329 = vmatprep.subr.bf16.mxu0 %v4992
  %5330 = vmatpush1.bf16.msra.mxu0 %v4991
  %5331 = vmatprep.subr.bf16.mxu0 %v4988
  %5332 = vmatpush1.bf16.msra.mxu0 %v4987
  %5333 = vmatprep.subr.bf16.mxu0 %v4984
  %5334 = vmatpush1.bf16.msra.mxu0 %v4983
  %5335 = vmatprep.subr.bf16.mxu0 %v5044
  %5336 = vmatpush2.bf16.msra.mxu0 %v5043
  %5337 = vmatprep.subr.bf16.mxu0 %v5040
  %5338 = vmatpush2.bf16.msra.mxu0 %v5039
  %5339 = vmatprep.subr.bf16.mxu0 %v5036
  %5340 = vmatpush2.bf16.msra.mxu0 %v5035
  %5341 = vmatprep.subr.bf16.mxu0 %v5032
  %5342 = vmatpush2.bf16.msra.mxu0 %v5031
  %5343 = vmatprep.subr.bf16.mxu0 %v5028
  %5344 = vmatpush2.bf16.msra.mxu0 %v5027
  %5345 = vmatprep.subr.bf16.mxu0 %v5024
  %5346 = vmatpush2.bf16.msra.mxu0 %v5023
  %5347 = vmatprep.subr.bf16.mxu0 %v5020
  %5348 = vmatpush2.bf16.msra.mxu0 %v5019
  %5349 = vmatprep.subr.bf16.mxu0 %v5016
  %5350 = vmatpush2.bf16.msra.mxu0 %v5015
  %5351 = vmatprep.mubr.bf16.mxu0 %v4444
  %5352 = vmatmul.mubr.bf16.gmra.mxu0 %v4443
  %v5353 = vpop.f32.mrf.mxu0
  %v5354 = vadd.f32 %v4588, %v5353
  %v5355 = vpop.f32.mrf.mxu0
  %v5356 = vadd.f32 %v4592, %v5355
  %v5357 = vpop.f32.mrf.mxu0
  %v5358 = vpop.f32.mrf.mxu0
  %5359 = vdwg.mxu0
  %5360 = vmatprep.subr.bf16.mxu0 %v5076
  %5361 = vmatpush1.bf16.msra.mxu0 %v5075
  %5362 = vmatprep.subr.bf16.mxu0 %v5072
  %5363 = vmatpush1.bf16.msra.mxu0 %v5071
  %5364 = vmatprep.subr.bf16.mxu0 %v5068
  %5365 = vmatpush1.bf16.msra.mxu0 %v5067
  %5366 = vmatprep.subr.bf16.mxu0 %v5064
  %5367 = vmatpush1.bf16.msra.mxu0 %v5063
  %5368 = vmatprep.subr.bf16.mxu0 %v5060
  %5369 = vmatpush1.bf16.msra.mxu0 %v5059
  %5370 = vmatprep.subr.bf16.mxu0 %v5056
  %5371 = vmatpush1.bf16.msra.mxu0 %v5055
  %5372 = vmatprep.subr.bf16.mxu0 %v5052
  %5373 = vmatpush1.bf16.msra.mxu0 %v5051
  %5374 = vmatprep.subr.bf16.mxu0 %v5048
  %5375 = vmatpush1.bf16.msra.mxu0 %v5047
  %5376 = vmatprep.subr.bf16.mxu0 %v5108
  %5377 = vmatpush2.bf16.msra.mxu0 %v5107
  %5378 = vmatprep.subr.bf16.mxu0 %v5104
  %5379 = vmatpush2.bf16.msra.mxu0 %v5103
  %5380 = vmatprep.subr.bf16.mxu0 %v5100
  %5381 = vmatpush2.bf16.msra.mxu0 %v5099
  %5382 = vmatprep.subr.bf16.mxu0 %v5096
  %5383 = vmatpush2.bf16.msra.mxu0 %v5095
  %5384 = vmatprep.subr.bf16.mxu0 %v5092
  %5385 = vmatpush2.bf16.msra.mxu0 %v5091
  %5386 = vmatprep.subr.bf16.mxu0 %v5088
  %5387 = vmatpush2.bf16.msra.mxu0 %v5087
  %5388 = vmatprep.subr.bf16.mxu0 %v5084
  %5389 = vmatpush2.bf16.msra.mxu0 %v5083
  %5390 = vmatprep.subr.bf16.mxu0 %v5080
  %5391 = vmatpush2.bf16.msra.mxu0 %v5079
  %5392 = vmatprep.mubr.bf16.mxu0 %v4446
  %5393 = vmatmul.mubr.bf16.gmra.mxu0 %v4445
  %v5394 = vpop.f32.mrf.mxu0
  %v5395 = vadd.f32 %v5354, %v5394
  %v5396 = vpop.f32.mrf.mxu0
  %v5397 = vadd.f32 %v5356, %v5396
  %v5398 = vpop.f32.mrf.mxu0
  %v5399 = vpop.f32.mrf.mxu0
  %5400 = vdwg.mxu0
  %v5401 = vmax.f32 %v5313, 0.0
  %v5402 = vmax.f32 %v5315, 0.0
  %v5403 = vmax.f32 %v5395, 0.0
  %v5404 = vmax.f32 %v5397, 0.0
  %v5405 = vpack.c.bf16 %v5401, %v5401
  %v5406 = vpack.c.bf16 %v5402, %v5402
  %v5407 = vpack.c.bf16 %v5403, %v5403
  %v5408 = vpack.c.bf16 %v5404, %v5404
  %v5409 = vld [vmem:[%s5] sm:$0xf]
  %v5410 = vld [vmem:[%s5 + $0x4] sm:$0xf]
  %v5411 = vld [vmem:[%s5 + $0x8] sm:$0xf]
  %v5412 = vld [vmem:[%s5 + $0xc] sm:$0xf]
  %v5413 = vld [vmem:[%s5 + $0x10] sm:$0xf]
  %v5414 = vld [vmem:[%s5 + $0x14] sm:$0xf]
  %v5415 = vld [vmem:[%s5 + $0x18] sm:$0xf]
  %v5416 = vld [vmem:[%s5 + $0x1c] sm:$0xf]
  %v5417 = vld [vmem:[%s5 + $0x20] sm:$0xf]
  %v5418 = vld [vmem:[%s5 + $0x24] sm:$0xf]
  %v5419 = vld [vmem:[%s5 + $0x28] sm:$0xf]
  %v5420 = vld [vmem:[%s5 + $0x2c] sm:$0xf]
  %v5421 = vld [vmem:[%s5 + $0x30] sm:$0xf]
  %v5422 = vld [vmem:[%s5 + $0x34] sm:$0xf]
  %v5423 = vld [vmem:[%s5 + $0x38] sm:$0xf]
  %v5424 = vld [vmem:[%s5 + $0x3c] sm:$0xf]
  %v5425 = vld [vmem:[%s5 + $0x40] sm:$0xf]
  %v5426 = vld [vmem:[%s5 + $0x44] sm:$0xf]
  %v5427 = vld [vmem:[%s5 + $0x48] sm:$0xf]
  %v5428 = vld [vmem:[%s5 + $0x4c] sm:$0xf]
  %v5429 = vld [vmem:[%s5 + $0x50] sm:$0xf]
  %v5430 = vld [vmem:[%s5 + $0x54] sm:$0xf]
  %v5431 = vld [vmem:[%s5 + $0x58] sm:$0xf]
  %v5432 = vld [vmem:[%s5 + $0x5c] sm:$0xf]
  %v5433 = vld [vmem:[%s5 + $0x60] sm:$0xf]
  %v5434 = vld [vmem:[%s5 + $0x64] sm:$0xf]
  %v5435 = vld [vmem:[%s5 + $0x68] sm:$0xf]
  %v5436 = vld [vmem:[%s5 + $0x6c] sm:$0xf]
  %v5437 = vld [vmem:[%s5 + $0x70] sm:$0xf]
  %v5438 = vld [vmem:[%s5 + $0x74] sm:$0xf]
  %v5439 = vld [vmem:[%s5 + $0x78] sm:$0xf]
  %v5440 = vld [vmem:[%s5 + $0x7c] sm:$0xf]
  %v5441 = vld [vmem:[%s5 + $0x80] sm:$0xf]
  %v5442 = vld [vmem:[%s5 + $0x84] sm:$0xf]
  %v5443 = vld [vmem:[%s5 + $0x88] sm:$0xf]
  %v5444 = vld [vmem:[%s5 + $0x8c] sm:$0xf]
  %v5445 = vld [vmem:[%s5 + $0x90] sm:$0xf]
  %v5446 = vld [vmem:[%s5 + $0x94] sm:$0xf]
  %v5447 = vld [vmem:[%s5 + $0x98] sm:$0xf]
  %v5448 = vld [vmem:[%s5 + $0x9c] sm:$0xf]
  %v5449 = vld [vmem:[%s5 + $0xa0] sm:$0xf]
  %v5450 = vld [vmem:[%s5 + $0xa4] sm:$0xf]
  %v5451 = vld [vmem:[%s5 + $0xa8] sm:$0xf]
  %v5452 = vld [vmem:[%s5 + $0xac] sm:$0xf]
  %v5453 = vld [vmem:[%s5 + $0xb0] sm:$0xf]
  %v5454 = vld [vmem:[%s5 + $0xb4] sm:$0xf]
  %v5455 = vld [vmem:[%s5 + $0xb8] sm:$0xf]
  %v5456 = vld [vmem:[%s5 + $0xbc] sm:$0xf]
  %v5457 = vld [vmem:[%s5 + $0xc0] sm:$0xf]
  %v5458 = vld [vmem:[%s5 + $0xc4] sm:$0xf]
  %v5459 = vld [vmem:[%s5 + $0xc8] sm:$0xf]
  %v5460 = vld [vmem:[%s5 + $0xcc] sm:$0xf]
  %v5461 = vld [vmem:[%s5 + $0xd0] sm:$0xf]
  %v5462 = vld [vmem:[%s5 + $0xd4] sm:$0xf]
  %v5463 = vld [vmem:[%s5 + $0xd8] sm:$0xf]
  %v5464 = vld [vmem:[%s5 + $0xdc] sm:$0xf]
  %v5465 = vld [vmem:[%s5 + $0xe0] sm:$0xf]
  %v5466 = vld [vmem:[%s5 + $0xe4] sm:$0xf]
  %v5467 = vld [vmem:[%s5 + $0xe8] sm:$0xf]
  %v5468 = vld [vmem:[%s5 + $0xec] sm:$0xf]
  %v5469 = vld [vmem:[%s5 + $0xf0] sm:$0xf]
  %v5470 = vld [vmem:[%s5 + $0xf4] sm:$0xf]
  %v5471 = vld [vmem:[%s5 + $0xf8] sm:$0xf]
  %v5472 = vld [vmem:[%s5 + $0xfc] sm:$0xf]
  %v5473 = vld [vmem:[%s6] sm:$0x1]
  %v5475 = vlaneseq
  %v5476 = vshrl.u32 %v5475, 7
  %v5477 = vsub.s32 0, %v5476
  %v5478 = vrot.slane %v5473, %v5477
  %v5544 = vunpack.c.l.b16 %v5409
  %v5545 = vunpack.c.l.b16 %v5410
  %v5546 = vunpack.c.l.b16 %v5411
  %v5547 = vunpack.c.l.b16 %v5412
  %v5548 = vunpack.c.l.b16 %v5413
  %v5549 = vunpack.c.l.b16 %v5414
  %v5550 = vunpack.c.l.b16 %v5415
  %v5551 = vunpack.c.l.b16 %v5416
  %v5552 = vunpack.c.l.b16 %v5417
  %v5553 = vunpack.c.l.b16 %v5418
  %v5554 = vunpack.c.l.b16 %v5419
  %v5555 = vunpack.c.l.b16 %v5420
  %v5556 = vunpack.c.l.b16 %v5421
  %v5557 = vunpack.c.l.b16 %v5422
  %v5558 = vunpack.c.l.b16 %v5423
  %v5559 = vunpack.c.l.b16 %v5424
  %v5560 = vunpack.c.l.b16 %v5425
  %v5561 = vunpack.c.l.b16 %v5426
  %v5562 = vunpack.c.l.b16 %v5427
  %v5563 = vunpack.c.l.b16 %v5428
  %v5564 = vunpack.c.l.b16 %v5429
  %v5565 = vunpack.c.l.b16 %v5430
  %v5566 = vunpack.c.l.b16 %v5431
  %v5567 = vunpack.c.l.b16 %v5432
  %v5568 = vunpack.c.l.b16 %v5433
  %v5569 = vunpack.c.l.b16 %v5434
  %v5570 = vunpack.c.l.b16 %v5435
  %v5571 = vunpack.c.l.b16 %v5436
  %v5572 = vunpack.c.l.b16 %v5437
  %v5573 = vunpack.c.l.b16 %v5438
  %v5574 = vunpack.c.l.b16 %v5439
  %v5575 = vunpack.c.l.b16 %v5440
  %v5576 = vunpack.c.l.b16 %v5441
  %v5577 = vunpack.c.l.b16 %v5442
  %v5578 = vunpack.c.l.b16 %v5443
  %v5579 = vunpack.c.l.b16 %v5444
  %v5580 = vunpack.c.l.b16 %v5445
  %v5581 = vunpack.c.l.b16 %v5446
  %v5582 = vunpack.c.l.b16 %v5447
  %v5583 = vunpack.c.l.b16 %v5448
  %v5584 = vunpack.c.l.b16 %v5449
  %v5585 = vunpack.c.l.b16 %v5450
  %v5586 = vunpack.c.l.b16 %v5451
  %v5587 = vunpack.c.l.b16 %v5452
  %v5588 = vunpack.c.l.b16 %v5453
  %v5589 = vunpack.c.l.b16 %v5454
  %v5590 = vunpack.c.l.b16 %v5455
  %v5591 = vunpack.c.l.b16 %v5456
  %v5592 = vunpack.c.l.b16 %v5457
  %v5593 = vunpack.c.l.b16 %v5458
  %v5594 = vunpack.c.l.b16 %v5459
  %v5595 = vunpack.c.l.b16 %v5460
  %v5596 = vunpack.c.l.b16 %v5461
  %v5597 = vunpack.c.l.b16 %v5462
  %v5598 = vunpack.c.l.b16 %v5463
  %v5599 = vunpack.c.l.b16 %v5464
  %v5600 = vunpack.c.l.b16 %v5465
  %v5601 = vunpack.c.l.b16 %v5466
  %v5602 = vunpack.c.l.b16 %v5467
  %v5603 = vunpack.c.l.b16 %v5468
  %v5604 = vunpack.c.l.b16 %v5469
  %v5605 = vunpack.c.l.b16 %v5470
  %v5606 = vunpack.c.l.b16 %v5471
  %v5607 = vunpack.c.l.b16 %v5472
  %v5608 = vpack.c.b16 %v5545, %v5544
  %v5609 = vpack.c.b16 %v5547, %v5546
  %v5610 = vpack.c.b16 %v5549, %v5548
  %v5611 = vpack.c.b16 %v5551, %v5550
  %v5612 = vpack.c.b16 %v5553, %v5552
  %v5613 = vpack.c.b16 %v5555, %v5554
  %v5614 = vpack.c.b16 %v5557, %v5556
  %v5615 = vpack.c.b16 %v5559, %v5558
  %v5616 = vpack.c.b16 %v5561, %v5560
  %v5617 = vpack.c.b16 %v5563, %v5562
  %v5618 = vpack.c.b16 %v5565, %v5564
  %v5619 = vpack.c.b16 %v5567, %v5566
  %v5620 = vpack.c.b16 %v5569, %v5568
  %v5621 = vpack.c.b16 %v5571, %v5570
  %v5622 = vpack.c.b16 %v5573, %v5572
  %v5623 = vpack.c.b16 %v5575, %v5574
  %v5624 = vpack.c.b16 %v5577, %v5576
  %v5625 = vpack.c.b16 %v5579, %v5578
  %v5626 = vpack.c.b16 %v5581, %v5580
  %v5627 = vpack.c.b16 %v5583, %v5582
  %v5628 = vpack.c.b16 %v5585, %v5584
  %v5629 = vpack.c.b16 %v5587, %v5586
  %v5630 = vpack.c.b16 %v5589, %v5588
  %v5631 = vpack.c.b16 %v5591, %v5590
  %v5632 = vpack.c.b16 %v5593, %v5592
  %v5633 = vpack.c.b16 %v5595, %v5594
  %v5634 = vpack.c.b16 %v5597, %v5596
  %v5635 = vpack.c.b16 %v5599, %v5598
  %v5636 = vpack.c.b16 %v5601, %v5600
  %v5637 = vpack.c.b16 %v5603, %v5602
  %v5638 = vpack.c.b16 %v5605, %v5604
  %v5639 = vpack.c.b16 %v5607, %v5606
  %5672 = vmatprep.subr.bf16.mxu0 0
  %5673 = vmatpush1.bf16.msra.mxu0 %v5615
  %5674 = vmatprep.subr.bf16.mxu0 0
  %5675 = vmatpush1.bf16.msra.mxu0 %v5614
  %5676 = vmatprep.subr.bf16.mxu0 0
  %5677 = vmatpush1.bf16.msra.mxu0 %v5613
  %5678 = vmatprep.subr.bf16.mxu0 0
  %5679 = vmatpush1.bf16.msra.mxu0 %v5612
  %5680 = vmatprep.subr.bf16.mxu0 0
  %5681 = vmatpush1.bf16.msra.mxu0 %v5611
  %5682 = vmatprep.subr.bf16.mxu0 0
  %5683 = vmatpush1.bf16.msra.mxu0 %v5610
  %5684 = vmatprep.subr.bf16.mxu0 0
  %5685 = vmatpush1.bf16.msra.mxu0 %v5609
  %5686 = vmatprep.subr.bf16.mxu0 0
  %5687 = vmatpush1.bf16.msra.mxu0 %v5608
  %5688 = vmatprep.subr.bf16.mxu0 0
  %5689 = vmatpush2.bf16.msra.mxu0 %v5623
  %5690 = vmatprep.subr.bf16.mxu0 0
  %5691 = vmatpush2.bf16.msra.mxu0 %v5622
  %5692 = vmatprep.subr.bf16.mxu0 0
  %5693 = vmatpush2.bf16.msra.mxu0 %v5621
  %5694 = vmatprep.subr.bf16.mxu0 0
  %5695 = vmatpush2.bf16.msra.mxu0 %v5620
  %5696 = vmatprep.subr.bf16.mxu0 0
  %5697 = vmatpush2.bf16.msra.mxu0 %v5619
  %5698 = vmatprep.subr.bf16.mxu0 0
  %5699 = vmatpush2.bf16.msra.mxu0 %v5618
  %5700 = vmatprep.subr.bf16.mxu0 0
  %5701 = vmatpush2.bf16.msra.mxu0 %v5617
  %5702 = vmatprep.subr.bf16.mxu0 0
  %5703 = vmatpush2.bf16.msra.mxu0 %v5616
  %5704 = vmatprep.mubr.bf16.mxu0 %v5406
  %5705 = vmatmul.mubr.bf16.gmra.mxu0 %v5405
  %v5706 = vpop.f32.mrf.mxu0
  %v5707 = vadd.f32 %v5478, %v5706
  %v5708 = vpop.f32.mrf.mxu0
  %v5709 = vpop.f32.mrf.mxu0
  %v5710 = vpop.f32.mrf.mxu0
  %5711 = vdwg.mxu0
  %5712 = vmatprep.subr.bf16.mxu0 0
  %5713 = vmatpush1.bf16.msra.mxu0 %v5631
  %5714 = vmatprep.subr.bf16.mxu0 0
  %5715 = vmatpush1.bf16.msra.mxu0 %v5630
  %5716 = vmatprep.subr.bf16.mxu0 0
  %5717 = vmatpush1.bf16.msra.mxu0 %v5629
  %5718 = vmatprep.subr.bf16.mxu0 0
  %5719 = vmatpush1.bf16.msra.mxu0 %v5628
  %5720 = vmatprep.subr.bf16.mxu0 0
  %5721 = vmatpush1.bf16.msra.mxu0 %v5627
  %5722 = vmatprep.subr.bf16.mxu0 0
  %5723 = vmatpush1.bf16.msra.mxu0 %v5626
  %5724 = vmatprep.subr.bf16.mxu0 0
  %5725 = vmatpush1.bf16.msra.mxu0 %v5625
  %5726 = vmatprep.subr.bf16.mxu0 0
  %5727 = vmatpush1.bf16.msra.mxu0 %v5624
  %5728 = vmatprep.subr.bf16.mxu0 0
  %5729 = vmatpush2.bf16.msra.mxu0 %v5639
  %5730 = vmatprep.subr.bf16.mxu0 0
  %5731 = vmatpush2.bf16.msra.mxu0 %v5638
  %5732 = vmatprep.subr.bf16.mxu0 0
  %5733 = vmatpush2.bf16.msra.mxu0 %v5637
  %5734 = vmatprep.subr.bf16.mxu0 0
  %5735 = vmatpush2.bf16.msra.mxu0 %v5636
  %5736 = vmatprep.subr.bf16.mxu0 0
  %5737 = vmatpush2.bf16.msra.mxu0 %v5635
  %5738 = vmatprep.subr.bf16.mxu0 0
  %5739 = vmatpush2.bf16.msra.mxu0 %v5634
  %5740 = vmatprep.subr.bf16.mxu0 0
  %5741 = vmatpush2.bf16.msra.mxu0 %v5633
  %5742 = vmatprep.subr.bf16.mxu0 0
  %5743 = vmatpush2.bf16.msra.mxu0 %v5632
  %5744 = vmatprep.mubr.bf16.mxu0 %v5408
  %5745 = vmatmul.mubr.bf16.gmra.mxu0 %v5407
  %v5746 = vpop.f32.mrf.mxu0
  %v5747 = vadd.f32 %v5707, %v5746
  %v5748 = vpop.f32.mrf.mxu0
  %v5749 = vpop.f32.mrf.mxu0
  %v5750 = vpop.f32.mrf.mxu0
  %5751 = vdwg.mxu0
  %5752 = vst [vmem:[%s7] sm:$0xff] %v5747
  // Predicated region
  $region30: #{mlp_forward.1} parent=0 // pred_check
    _
  $region31: #{mlp_forward.1} parent=0 // pred_check_branch
    %5754 = sbr.rel (0) target = $region33
  $region32: #{mlp_forward.1} parent=0 // pred_region
    _
  $region33: #{mlp_forward.1} parent=0 // pred_fallthru
    _
  // Predicated region
  $region34: #{mlp_forward.1} parent=0 // pred_check
    _
  $region35: #{mlp_forward.1} parent=0 // pred_check_branch
    %5756 = sbr.rel (0) target = $region37
  $region36: #{mlp_forward.1} parent=0 // pred_region
    _
  $region37: #{mlp_forward.1} parent=0 // pred_fallthru
    _

</llo_original>
